<compile_context>
chip_gen: v7x
topology: tpu7x:2x2x1
jax: 0.10.0
libtpu: 0.0.40
codegen_flags: <defaults>
</compile_context>

<pallas_src>
import jax
import jax.numpy as jnp
from jax import lax
from jax.experimental import pallas as pl
from jax.experimental.pallas import tpu as pltpu

_BIG = 3.0e38


def _vmem_caps():
    """(gt-tile working-set budget, vmem_limit_bytes) derived from chip VMEM."""
    try:
        cap = pltpu.get_tpu_info().vmem_capacity_bytes
    except Exception:
        cap = 64 * 1024 * 1024
    if cap >= 100 * 1024 * 1024:                 # v5e / v6e: 128 MiB per core
        return 20 * 1024 * 1024, 56 * 1024 * 1024
    return 10 * 1024 * 1024, 40 * 1024 * 1024    # v7x: 64 MiB per core


def _pick_gt_tile(m, n, budget_bytes):
    """Largest multiple-of-128 divisor of m whose per-tile working set (dist (tm,N)
    f32 + double-buffered row-labels + gt operand) fits in budget (>= 128)."""
    if m % 128 != 0:
        return m  # block last dims must be (mult of 8, mult of 128) or the full dims
    per_row = 4 * n + 2 * 128 * 4 + 2 * 8 * 4
    cap = max(128, (budget_bytes // per_row) // 128 * 128)
    tm = min(m, cap)
    while m % tm:
        tm -= 128
    return tm


# ---------------------------------------------------------------------------
# Fused chamfer + nearest-gt-label + focal(seg) kernel, tiled over gt points.
# ---------------------------------------------------------------------------
def _make_chamfer_focal_kernel(use_sqrt, gamma, n_cls):
    gamma = float(gamma)

    def kernel(pred_ref, gt_ref, labr_ref, alpha_ref,
               s1_ref, s2_ref, foc_ref, lab_ref,
               apr_scr, agt_scr, d1_acc, lab_acc, s2_acc):
        m_step = pl.program_id(1)
        n_m = pl.num_programs(1)
        n_pred = pred_ref.shape[1]
        tm = gt_ref.shape[1]

        @pl.when(m_step == 0)
        def _init():
            d1_acc[...] = jnp.full_like(d1_acc, _BIG)
            lab_acc[...] = jnp.zeros_like(lab_acc)
            s2_acc[...] = jnp.zeros_like(s2_acc)
            # Stage the augmented pred operand once per batch (rows on sublanes,
            # N on lanes): [x, y, z, |p|^2, 1, 0, 0, 0].
            pr_xyz = pred_ref[pl.ds(0, 3), :].astype(jnp.float32)       # (3, N)
            sq_pr = jnp.sum(pr_xyz * pr_xyz, axis=0, keepdims=True)     # (1, N)
            apr_scr[pl.ds(0, 3), :] = pr_xyz
            apr_scr[pl.ds(3, 1), :] = sq_pr
            apr_scr[pl.ds(4, 1), :] = jnp.ones_like(sq_pr)
            apr_scr[pl.ds(5, 3), :] = jnp.zeros((3, n_pred), jnp.float32)
            # Constant rows of the gt operand.
            agt_scr[pl.ds(3, 1), :] = jnp.ones((1, tm), jnp.float32)
            agt_scr[pl.ds(5, 3), :] = jnp.zeros((3, tm), jnp.float32)

        # Per-tile gt operand rows [-2x, -2y, -2z, 1, |g|^2, 0, 0, 0], tile on lanes.
        gt_xyz = gt_ref[pl.ds(0, 3), :].astype(jnp.float32)             # (3, tm)
        agt_scr[pl.ds(0, 3), :] = -2.0 * gt_xyz
        agt_scr[pl.ds(4, 1), :] = jnp.sum(gt_xyz * gt_xyz, axis=0, keepdims=True)

        # One MXU matmul (contracting on the sublane axis -> both operands stay
        # lane-dense) yields the full squared pairwise distance tile:
        # dist[m, n] = |g_m|^2 - 2 g_m . p_n + |p_n|^2.
        dist = lax.dot_general(
            agt_scr[...], apr_scr[...], (((0,), (0,)), ((), ())),
            preferred_element_type=jnp.float32)                          # (tm, N)

        # d1 / nearest-gt label per predicted point (running min over gt tiles).
        d1_chunk = jnp.min(dist, axis=0, keepdims=True)                  # (1, N)
        lab_rows = labr_ref[...].astype(jnp.float32)                     # (tm, 1)
        lab_chunk = jnp.min(jnp.where(dist <= d1_chunk, lab_rows, _BIG),
                            axis=0, keepdims=True)                       # (1, N)
        better = d1_chunk < d1_acc[...]
        lab_acc[...] = jnp.where(better, lab_chunk, lab_acc[...])
        d1_acc[...] = jnp.minimum(d1_acc[...], d1_chunk)

        # d2: nearest predicted point per gt point, finalized per tile and reduced
        # to a running scalar (sqrt goes to the otherwise-idle EUP slot).
        d2_chunk = jnp.maximum(jnp.min(dist, axis=1, keepdims=True), 0.0)  # (tm, 1)
        r2 = jnp.sqrt(d2_chunk) if use_sqrt else d2_chunk
        s2_acc[...] = s2_acc[...] + jnp.sum(r2, keepdims=True)             # (1, 1)

        @pl.when(m_step == n_m - 1)
        def _finalize():
            d1 = jnp.maximum(d1_acc[...], 0.0)
            r1 = jnp.sqrt(d1) if use_sqrt else d1
            s1_ref[...] = jnp.sum(r1, keepdims=True)                      # (1, 1)
            s2_ref[...] = s2_acc[...]                                      # (1, 1)
            tgt = lab_acc[...]                                             # (1, N)
            lab_ref[...] = tgt

            # Focal (segmentation) loss on the resident lane-dense logits (C, N);
            # targets are the just-computed nearest-gt labels, so no HBM round trip.
            logits = pred_ref[pl.ds(3, n_cls), :].astype(jnp.float32)     # (C, N)
            alpha = alpha_ref[...].astype(jnp.float32)                     # (C, 1)
            mx = jnp.max(logits, axis=0, keepdims=True)                    # (1, N)
            z = logits - mx
            lse = jnp.log(jnp.sum(jnp.exp(z), axis=0, keepdims=True))
            logp = z - lse                                                 # (C, N)
            cls = lax.broadcasted_iota(jnp.int32, logp.shape, 0)
            onehot = cls == tgt.astype(jnp.int32)                          # (C, N)
            logpt = jnp.sum(jnp.where(onehot, logp, 0.0), axis=0, keepdims=True)
            at = jnp.sum(jnp.where(onehot, alpha, 0.0), axis=0, keepdims=True)
            pt = jnp.exp(logpt)
            if gamma == 0.0:
                focal_w = 1.0
            else:
                focal_w = jnp.exp(gamma * jnp.log(jnp.maximum(1.0 - pt, 1e-30)))
            foc_ref[...] = jnp.sum(-(focal_w * at * logpt), keepdims=True)  # (1, 1)

    return kernel


def chamfer_focal_level(pred_t, gt_t, gt_lab_rows, alpha, gamma, use_sqrt=True):
    """pred_t (B, 3+C, N) lane-dense; gt_t (B, 4, M) lane-dense [x,y,z,label];
    gt_lab_rows (B, M, 1) row-oriented labels; alpha (C,).
    Returns (cd scalar, seg scalar, gt_label (B, N))."""
    B, R, N = pred_t.shape
    _, _, M = gt_t.shape
    C = R - 3
    tile_budget, vmem_limit = _vmem_caps()
    tm = _pick_gt_tile(M, N, tile_budget)
    alpha_in = jnp.asarray(alpha, jnp.float32).reshape(1, C, 1)

    kernel = _make_chamfer_focal_kernel(use_sqrt, float(gamma), C)
    s1, s2, foc, lab = pl.pallas_call(
        kernel,
        out_shape=(
            jax.ShapeDtypeStruct((B, 1, 1), jnp.float32),
            jax.ShapeDtypeStruct((B, 1, 1), jnp.float32),
            jax.ShapeDtypeStruct((B, 1, 1), jnp.float32),
            jax.ShapeDtypeStruct((B, 1, N), jnp.float32),
        ),
        grid=(B, M // tm),
        in_specs=[
            pl.BlockSpec((None, R, N), lambda b, m: (b, 0, 0)),
            pl.BlockSpec((None, 4, tm), lambda b, m: (b, 0, m)),
            pl.BlockSpec((None, tm, 1), lambda b, m: (b, m, 0)),
            pl.BlockSpec((None, C, 1), lambda b, m: (0, 0, 0)),   # alpha: constant block
        ],
        out_specs=(
            pl.BlockSpec((None, 1, 1), lambda b, m: (b, 0, 0)),
            pl.BlockSpec((None, 1, 1), lambda b, m: (b, 0, 0)),
            pl.BlockSpec((None, 1, 1), lambda b, m: (b, 0, 0)),
            pl.BlockSpec((None, 1, N), lambda b, m: (b, 0, 0)),
        ),
        scratch_shapes=[
            pltpu.VMEM((8, N), jnp.float32),    # staged augmented pred operand
            pltpu.VMEM((8, tm), jnp.float32),   # staged augmented gt operand
            pltpu.VMEM((1, N), jnp.float32),    # running min d1
            pltpu.VMEM((1, N), jnp.float32),    # label of the nearest gt point
            pltpu.VMEM((1, 1), jnp.float32),    # running sum sqrt(d2)
        ],
        compiler_params=pltpu.CompilerParams(
            # TODO(synk): on v7x with B == 1, add a core-parallel split of the gt
            # axis (per-chunk (1,N) partials + cheap elementwise-min combine).
            dimension_semantics=("parallel", "arbitrary"),
            vmem_limit_bytes=vmem_limit,
        ),
        cost_estimate=pl.CostEstimate(
            flops=int(B * M * N * 24 + B * N * C * 8),
            transcendentals=int(B * (M + N * (C + 2))),
            bytes_accessed=int(4 * B * (R * N + 5 * M + N + C + 3)),
        ),
    )(pred_t, gt_t, gt_lab_rows, alpha_in)

    d1_mean = jnp.sum(s1) / (B * N)
    d2_mean = jnp.sum(s2) / (B * M)
    cd = 0.5 * (d1_mean + d2_mean) if use_sqrt else (d1_mean + d2_mean)
    seg = jnp.sum(foc) / (B * N)
    return cd, seg, lab[:, 0, :]


# ---------------------------------------------------------------------------
# Furthest point sampling (+ channel gather), fully VMEM-resident & lane-dense.
# ---------------------------------------------------------------------------
def _fps_kernel(pts_ref, out_ref, mind_ref, selmat_ref):
    m = pts_ref.shape[1]
    n_points = out_ref.shape[1]
    pts = pts_ref[pl.ds(0, 3), :].astype(jnp.float32)      # (3, M) xyz, M on lanes
    lane = lax.broadcasted_iota(jnp.int32, (1, m), 1)

    mind_ref[...] = jnp.full_like(mind_ref, _BIG)
    selmat_ref[pl.ds(0, 1), :] = (lane == 0).astype(jnp.float32)  # CUDA FPS: start at 0

    def body(i, p_last):
        d = jnp.sum((pts - p_last) ** 2, axis=0, keepdims=True)        # (1, M)
        mind = jnp.minimum(mind_ref[...], d)
        mind_ref[...] = mind
        # TODO(synk): fuse the max + where/min argmax into one packed-key reduce to
        # shorten the serial cross-lane chain further.
        mx = jnp.max(mind, axis=1, keepdims=True)                      # (1, 1)
        nxt = jnp.min(jnp.where(mind >= mx, lane, m), axis=1, keepdims=True)  # (1,1)
        sel = lane == nxt                                              # (1, M) one-hot
        # Lane-dense row store; nothing later in the loop reads it, so it stays off
        # the serial critical path.
        selmat_ref[pl.ds(i, 1), :] = sel.astype(jnp.float32)
        p_new = jnp.sum(jnp.where(sel, pts, 0.0), axis=1, keepdims=True)  # (3, 1)
        return p_new

    lax.fori_loop(1, n_points, body, pts[:, 0:1])

    # Gather all channels of the selected points with a single MXU matmul:
    # (D, M) x (n_points, M)^T -> (D, n_points), lane-dense output.
    gathered = lax.dot_general(
        pts_ref[...].astype(jnp.float32), selmat_ref[...],
        (((1,), (1,)), ((), ())), preferred_element_type=jnp.float32)
    out_ref[...] = gathered.astype(out_ref.dtype)


def fps_subsample_t(pcd_t, n_points):
    """pcd_t (B, D>=3, M) lane-dense -> (B, D, n_points) lane-dense.
    Samples by xyz rows, gathers all channels."""
    B, D, M = pcd_t.shape
    _, vmem_limit = _vmem_caps()
    # TODO(synk): chunk the one-hot selection matrix (flush every K rows into the
    # output) when n_points * M * 4 bytes grows beyond a few MiB of VMEM.
    return pl.pallas_call(
        _fps_kernel,
        out_shape=jax.ShapeDtypeStruct((B, D, n_points), pcd_t.dtype),
        grid=(B,),
        in_specs=[pl.BlockSpec((None, D, M), lambda b: (b, 0, 0))],
        out_specs=pl.BlockSpec((None, D, n_points), lambda b: (b, 0, 0)),
        scratch_shapes=[
            pltpu.VMEM((1, M), jnp.float32),          # running min distance
            pltpu.VMEM((n_points, M), jnp.float32),   # one-hot selection rows
        ],
        compiler_params=pltpu.CompilerParams(
            dimension_semantics=("parallel",),
            vmem_limit_bytes=vmem_limit,
        ),
        cost_estimate=pl.CostEstimate(
            flops=int(B * n_points * M * (10 + 2 * D)),
            transcendentals=0,
            bytes_accessed=int(4 * B * D * (M + n_points)),
        ),
    )(pcd_t)


# ---------------------------------------------------------------------------
# Loss.forward equivalent
# ---------------------------------------------------------------------------
def loss_forward(pcds_pred, gt, epoch, seg_weight, sqrt=True):
    gamma = max(min(5.0 * (epoch / 200.0), max(0, 20)), min(0, 20))
    n = len(pcds_pred)

    # One lane-dense transpose of gt shared by FPS and every chamfer level; the
    # row-oriented label view needs no transpose at all.
    gt_t = jnp.transpose(gt, (0, 2, 1))                  # (B, 4, M): [x, y, z, label]
    gt_lab_rows = gt[:, :, 3:4]                          # (B, M, 1)

    # FPS selections are nested (greedy chain from point 0), so run FPS once for the
    # largest intermediate level and take prefixes for the smaller ones.
    inter_sizes = [pcds_pred[i].shape[1] for i in range(1, n - 1)]
    fps_cache_t = fps_subsample_t(gt_t, max(inter_sizes)) if inter_sizes else None

    cd_ls, seg_ls = [], []
    cd_i = seg_i = pred_label = gt_label = None
    for i, p_i in enumerate(pcds_pred):
        if i == 0 and n > 1:
            # i == 0 results never reach the loss and its "last_*" outputs are
            # overwritten by later levels -> skip the work entirely.
            continue
        if i == 0 or i == n - 1:
            gt_i_t, lab_i_rows = gt_t, gt_lab_rows
        else:
            gt_i_t = fps_cache_t[:, :, : p_i.shape[1]]
            lab_i_rows = jnp.transpose(gt_i_t[:, 3:4, :], (0, 2, 1))   # tiny (B, n_i, 1)
        pred_t = jnp.transpose(p_i, (0, 2, 1))           # (B, 3+C, N) lane-dense
        cd_i, seg_i, gt_label = chamfer_focal_level(
            pred_t, gt_i_t, lab_i_rows, seg_weight, gamma, use_sqrt=sqrt)
        pred_label = p_i[:, :, 3:]
        if i > 0:
            cd_ls.append(cd_i)
            seg_ls.append(seg_i)

    loss_cmp = sum(cd_ls) * 1000.0
    loss_seg = sum(seg_ls) * 100.0
    loss_all = loss_cmp + loss_seg
    return {
        "sum_loss": loss_all,
        "last_cd": cd_i,
        "last_seg": seg_i,
        "pred_seg": pred_label,
        "gt_seg": gt_label,
    }


# ---------------------------------------------------------------------------
# Main
# ---------------------------------------------------------------------------
if __name__ == "__main__":
    key = jax.random.PRNGKey(0)
    B, M, C = 2, 256, 4                        # batch, gt points, num seg classes
    k1, k2, k3, k4, k5 = jax.random.split(key, 5)

    gt_xyz = jax.random.uniform(k1, (B, M, 3), jnp.float32)
    gt_lab = jax.random.randint(k2, (B, M), 0, C).astype(jnp.float32)
    gt = jnp.concatenate([gt_xyz, gt_lab[..., None]], axis=-1)       # (B, M, 4)

    def make_pred(k, n):
        kx, kl = jax.random.split(k)
        xyz = jax.random.uniform(kx, (B, n, 3), jnp.float32)
        logits = jax.random.normal(kl, (B, n, C), jnp.float32)
        return jnp.concatenate([xyz, logits], axis=-1)               # (B, n, 3 + C)

    # [Pc, P1, P2]: the middle level exercises the fused FPS + gather kernel.
    pcds_pred = [make_pred(k3, 64), make_pred(k4, 128), make_pred(k5, 256)]

    seg_weight = jnp.array([1.0, 0.5, 2.0, 1.0], jnp.float32)

    fwd = jax.jit(loss_forward, static_argnames=("epoch", "sqrt"))
    out = fwd(pcds_pred, gt, epoch=10, seg_weight=seg_weight, sqrt=True)
    jax.block_until_ready(out["sum_loss"])
    print("KERNEL_OK")
</pallas_src>

<mosaic_0001>
module attributes {stable_mosaic.version = 11 : i64} {
  func.func @_fps_kernel(%arg0: i32, %arg1: memref<1x4x256xf32, #tpu.memory_space<vmem>>, %arg2: memref<1x4x128xf32, #tpu.memory_space<vmem>>, %arg3: memref<1x256xf32, #tpu.memory_space<vmem>>, %arg4: memref<128x256xf32, #tpu.memory_space<vmem>>) attributes {dimension_semantics = [#tpu.dimension_semantics<parallel>], iteration_bounds = array<i64: 2>, scalar_prefetch = 0 : i64, scratch_operands = 2 : i64, tpu.core_type = #tpu.core_type<tc>, window_params = [{transform_indices = @transform_0, window_bounds = array<i64: 1, 4, 256>}, {transform_indices = @transform_1, window_bounds = array<i64: 1, 4, 128>}]} {
    %c0 = arith.constant 0 : index
    %c0_0 = arith.constant 0 : index
    %c0_1 = arith.constant 0 : index
    %0 = vector.load %arg1[%c0, %c0_0, %c0_1] : memref<1x4x256xf32, #tpu.memory_space<vmem>>, vector<1x3x256xf32>
    %1 = vector.shape_cast %0 : vector<1x3x256xf32> to vector<3x256xf32>
    %2 = tpu.iota {dimensions = array<i32: 1>} : vector<1x256xi32>
    %cst = arith.constant 3.000000e+38 : f32
    %3 = vector.broadcast %cst : f32 to vector<1x256xf32>
    %c0_2 = arith.constant 0 : index
    %c0_3 = arith.constant 0 : index
    %4 = vector.load %arg3[%c0_2, %c0_3] : memref<1x256xf32, #tpu.memory_space<vmem>>, vector<1x256xf32>
    tpu.vector_store %arg3[%c0_2, %c0_3], %3 {strides = array<i32>} : memref<1x256xf32, #tpu.memory_space<vmem>>, vector<1x256xf32>,
    %c0_i32 = arith.constant 0 : i32
    %5 = vector.broadcast %c0_i32 : i32 to vector<1x256xi32>
    %6 = arith.cmpi eq, %2, %5 : vector<1x256xi32>
    %7 = arith.extui %6 : vector<1x256xi1> to vector<1x256xi32>
    %8 = arith.sitofp %7 : vector<1x256xi32> to vector<1x256xf32>
    %c0_4 = arith.constant 0 : index
    %c0_5 = arith.constant 0 : index
    %9 = vector.load %arg4[%c0_4, %c0_5] : memref<128x256xf32, #tpu.memory_space<vmem>>, vector<1x256xf32>
    tpu.vector_store %arg4[%c0_4, %c0_5], %8 {strides = array<i32>} : memref<128x256xf32, #tpu.memory_space<vmem>>, vector<1x256xf32>,
    %10 = vector.extract_strided_slice %1 {offsets = [0, 0], sizes = [3, 1], strides = [1, 1]} : vector<3x256xf32> to vector<3x1xf32>
    %c1_i32 = arith.constant 1 : i32
    %c127_i32 = arith.constant 127 : i32
    %11 = arith.addi %c1_i32, %c127_i32 : i32
    %c1_i32_6 = arith.constant 1 : i32
    %12 = scf.for %arg5 = %c1_i32 to %11 step %c1_i32_6 iter_args(%arg6 = %10) -> (vector<3x1xf32>)  : i32 {
      %20 = vector.broadcast %arg6 : vector<3x1xf32> to vector<3x256xf32>
      %21 = arith.subf %1, %20 : vector<3x256xf32>
      %22 = arith.mulf %21, %21 : vector<3x256xf32>
      %cst_17 = arith.constant dense<0.000000e+00> : vector<256xf32>
      %23 = vector.multi_reduction <add>, %22, %cst_17 [0] : vector<3x256xf32> to vector<256xf32>
      %24 = vector.shape_cast %23 : vector<256xf32> to vector<1x256xf32>
      %c0_18 = arith.constant 0 : index
      %c0_19 = arith.constant 0 : index
      %25 = vector.load %arg3[%c0_18, %c0_19] : memref<1x256xf32, #tpu.memory_space<vmem>>, vector<1x256xf32>
      %26 = arith.minimumf %25, %24 : vector<1x256xf32>
      %c0_20 = arith.constant 0 : index
      %c0_21 = arith.constant 0 : index
      %27 = vector.load %arg3[%c0_20, %c0_21] : memref<1x256xf32, #tpu.memory_space<vmem>>, vector<1x256xf32>
      tpu.vector_store %arg3[%c0_20, %c0_21], %26 {strides = array<i32>} : memref<1x256xf32, #tpu.memory_space<vmem>>, vector<1x256xf32>,
      %cst_22 = arith.constant dense<0xFF800000> : vector<1xf32>
      %28 = vector.multi_reduction <maximumf>, %26, %cst_22 [1] : vector<1x256xf32> to vector<1xf32>
      %29 = vector.shape_cast %28 : vector<1xf32> to vector<1x1xf32>
      %30 = vector.broadcast %29 : vector<1x1xf32> to vector<1x256xf32>
      %31 = arith.cmpf oge, %26, %30 : vector<1x256xf32>
      %c256_i32 = arith.constant 256 : i32
      %32 = vector.broadcast %c256_i32 : i32 to vector<1x256xi32>
      %33 = arith.select %31, %2, %32 : vector<1x256xi1>, vector<1x256xi32>
      %cst_23 = arith.constant dense<2147483647> : vector<1xi32>
      %34 = vector.multi_reduction <minsi>, %33, %cst_23 [1] : vector<1x256xi32> to vector<1xi32>
      %35 = vector.shape_cast %34 : vector<1xi32> to vector<1x1xi32>
      %36 = vector.broadcast %35 : vector<1x1xi32> to vector<1x256xi32>
      %37 = arith.cmpi eq, %2, %36 : vector<1x256xi32>
      %38 = arith.extui %37 : vector<1x256xi1> to vector<1x256xi32>
      %39 = arith.sitofp %38 : vector<1x256xi32> to vector<1x256xf32>
      %40 = arith.index_cast %arg5 : i32 to index
      %c0_24 = arith.constant 0 : index
      %41 = vector.load %arg4[%40, %c0_24] : memref<128x256xf32, #tpu.memory_space<vmem>>, vector<1x256xf32>
      tpu.vector_store %arg4[%40, %c0_24], %39 {strides = array<i32>} : memref<128x256xf32, #tpu.memory_space<vmem>>, vector<1x256xf32>,
      %cst_25 = arith.constant 0.000000e+00 : f32
      %42 = vector.shape_cast %37 : vector<1x256xi1> to vector<1x256xi1>
      %43 = vector.broadcast %42 : vector<1x256xi1> to vector<3x256xi1>
      %44 = vector.broadcast %cst_25 : f32 to vector<3x256xf32>
      %45 = arith.select %43, %1, %44 : vector<3x256xi1>, vector<3x256xf32>
      %cst_26 = arith.constant dense<0.000000e+00> : vector<3xf32>
      %46 = vector.multi_reduction <add>, %45, %cst_26 [1] : vector<3x256xf32> to vector<3xf32>
      %47 = vector.shape_cast %46 : vector<3xf32> to vector<3x1xf32>
      scf.yield %47 : vector<3x1xf32>
    }
    %c127_i32_7 = arith.constant 127 : i32
    %c0_8 = arith.constant 0 : index
    %c0_9 = arith.constant 0 : index
    %c0_10 = arith.constant 0 : index
    %13 = vector.load %arg1[%c0_8, %c0_9, %c0_10] : memref<1x4x256xf32, #tpu.memory_space<vmem>>, vector<1x4x256xf32>
    %14 = vector.shape_cast %13 : vector<1x4x256xf32> to vector<4x256xf32>
    %c0_11 = arith.constant 0 : index
    %c0_12 = arith.constant 0 : index
    %15 = vector.load %arg4[%c0_11, %c0_12] : memref<128x256xf32, #tpu.memory_space<vmem>>, vector<128x256xf32>
    %cst_13 = arith.constant dense<0.000000e+00> : vector<4x128xf32>
    %16 = tpu.matmul %14, %15, %cst_13 {dimension_numbers = #tpu.dot_dimension_numbers<[1], [1], [0], [0], [0, 0, 1, 0], [], []>} : vector<4x256xf32>, vector<128x256xf32>, vector<4x128xf32> -> vector<4x128xf32>
    %c0_14 = arith.constant 0 : index
    %c0_15 = arith.constant 0 : index
    %c0_16 = arith.constant 0 : index
    %17 = vector.load %arg2[%c0_14, %c0_15, %c0_16] : memref<1x4x128xf32, #tpu.memory_space<vmem>>, vector<1x4x128xf32>
    %18 = vector.shape_cast %17 : vector<1x4x128xf32> to vector<4x128xf32>
    %19 = vector.shape_cast %16 : vector<4x128xf32> to vector<1x4x128xf32>
    tpu.vector_store %arg2[%c0_14, %c0_15, %c0_16], %19 {strides = array<i32>} : memref<1x4x128xf32, #tpu.memory_space<vmem>>, vector<1x4x128xf32>,
    return
  }
  func.func @transform_0(%arg0: i32) -> (i32, i32, i32) {
    %c0_i32 = arith.constant 0 : i32
    %c0_i32_0 = arith.constant 0 : i32
    %c0_i32_1 = arith.constant 0 : i32
    return %arg0, %c0_i32, %c0_i32_0 : i32, i32, i32
  }
  func.func @transform_1(%arg0: i32) -> (i32, i32, i32) {
    %c0_i32 = arith.constant 0 : i32
    %c0_i32_0 = arith.constant 0 : i32
    %c0_i32_1 = arith.constant 0 : i32
    return %arg0, %c0_i32, %c0_i32_0 : i32, i32, i32
  }
}

module attributes {stable_mosaic.version = 11 : i64} {
  func.func @kernel(%arg0: i32, %arg1: i32, %arg2: memref<1x7x256xf32, #tpu.memory_space<vmem>>, %arg3: memref<1x4x256xf32, #tpu.memory_space<vmem>>, %arg4: memref<1x256x1xf32, #tpu.memory_space<vmem>>, %arg5: memref<1x4x1xf32, #tpu.memory_space<vmem>>, %arg6: memref<1x1x1xf32, #tpu.memory_space<vmem>>, %arg7: memref<1x1x1xf32, #tpu.memory_space<vmem>>, %arg8: memref<1x1x1xf32, #tpu.memory_space<vmem>>, %arg9: memref<1x1x256xf32, #tpu.memory_space<vmem>>, %arg10: memref<8x256xf32, #tpu.memory_space<vmem>>, %arg11: memref<8x256xf32, #tpu.memory_space<vmem>>, %arg12: memref<1x256xf32, #tpu.memory_space<vmem>>, %arg13: memref<1x256xf32, #tpu.memory_space<vmem>>, %arg14: memref<1x1xf32, #tpu.memory_space<vmem>>) attributes {dimension_semantics = [#tpu.dimension_semantics<parallel>, #tpu.dimension_semantics<arbitrary>], iteration_bounds = array<i64: 2, 1>, scalar_prefetch = 0 : i64, scratch_operands = 5 : i64, tpu.core_type = #tpu.core_type<tc>, window_params = [{transform_indices = @transform_0, window_bounds = array<i64: 1, 7, 256>}, {transform_indices = @transform_1, window_bounds = array<i64: 1, 4, 256>}, {transform_indices = @transform_2, window_bounds = array<i64: 1, 256, 1>}, {pipeline_mode = #tpu.pipeline_mode<synchronous>, transform_indices = @transform_3, window_bounds = array<i64: 1, 4, 1>}, {transform_indices = @transform_4, window_bounds = array<i64: 1, 1, 1>}, {transform_indices = @transform_5, window_bounds = array<i64: 1, 1, 1>}, {transform_indices = @transform_6, window_bounds = array<i64: 1, 1, 1>}, {transform_indices = @transform_7, window_bounds = array<i64: 1, 1, 256>}]} {
    %c0_i32 = arith.constant 0 : i32
    %0 = arith.cmpi eq, %arg1, %c0_i32 : i32
    %1 = arith.extui %0 : i1 to i32
    %c0_i32_0 = arith.constant 0 : i32
    %2 = arith.cmpi ne, %1, %c0_i32_0 : i32
    scf.if %2 {
      %cst_37 = arith.constant 3.000000e+38 : f32
      %51 = vector.broadcast %cst_37 : f32 to vector<1x256xf32>
      %c0_38 = arith.constant 0 : index
      %c0_39 = arith.constant 0 : index
      %52 = vector.load %arg12[%c0_38, %c0_39] : memref<1x256xf32, #tpu.memory_space<vmem>>, vector<1x256xf32>
      tpu.vector_store %arg12[%c0_38, %c0_39], %51 {strides = array<i32>} : memref<1x256xf32, #tpu.memory_space<vmem>>, vector<1x256xf32>,
      %cst_40 = arith.constant 0.000000e+00 : f32
      %53 = vector.broadcast %cst_40 : f32 to vector<1x256xf32>
      %c0_41 = arith.constant 0 : index
      %c0_42 = arith.constant 0 : index
      %54 = vector.load %arg13[%c0_41, %c0_42] : memref<1x256xf32, #tpu.memory_space<vmem>>, vector<1x256xf32>
      tpu.vector_store %arg13[%c0_41, %c0_42], %53 {strides = array<i32>} : memref<1x256xf32, #tpu.memory_space<vmem>>, vector<1x256xf32>,
      %cst_43 = arith.constant 0.000000e+00 : f32
      %55 = vector.broadcast %cst_43 : f32 to vector<1x1xf32>
      %c0_44 = arith.constant 0 : index
      %c0_45 = arith.constant 0 : index
      %56 = vector.load %arg14[%c0_44, %c0_45] : memref<1x1xf32, #tpu.memory_space<vmem>>, vector<1x1xf32>
      tpu.vector_store %arg14[%c0_44, %c0_45], %55 {strides = array<i32>} : memref<1x1xf32, #tpu.memory_space<vmem>>, vector<1x1xf32>,
      %c0_46 = arith.constant 0 : index
      %c0_47 = arith.constant 0 : index
      %c0_48 = arith.constant 0 : index
      %57 = vector.load %arg2[%c0_46, %c0_47, %c0_48] : memref<1x7x256xf32, #tpu.memory_space<vmem>>, vector<1x3x256xf32>
      %58 = vector.shape_cast %57 : vector<1x3x256xf32> to vector<3x256xf32>
      %59 = arith.mulf %58, %58 : vector<3x256xf32>
      %cst_49 = arith.constant dense<0.000000e+00> : vector<256xf32>
      %60 = vector.multi_reduction <add>, %59, %cst_49 [0] : vector<3x256xf32> to vector<256xf32>
      %61 = vector.shape_cast %60 : vector<256xf32> to vector<1x256xf32>
      %c0_50 = arith.constant 0 : index
      %c0_51 = arith.constant 0 : index
      %62 = vector.load %arg10[%c0_50, %c0_51] : memref<8x256xf32, #tpu.memory_space<vmem>>, vector<3x256xf32>
      tpu.vector_store %arg10[%c0_50, %c0_51], %58 {strides = array<i32>} : memref<8x256xf32, #tpu.memory_space<vmem>>, vector<3x256xf32>,
      %c3 = arith.constant 3 : index
      %c0_52 = arith.constant 0 : index
      %63 = vector.load %arg10[%c3, %c0_52] : memref<8x256xf32, #tpu.memory_space<vmem>>, vector<1x256xf32>
      tpu.vector_store %arg10[%c3, %c0_52], %61 {strides = array<i32>} : memref<8x256xf32, #tpu.memory_space<vmem>>, vector<1x256xf32>,
      %cst_53 = arith.constant 1.000000e+00 : f32
      %64 = vector.broadcast %cst_53 : f32 to vector<1x256xf32>
      %c4_54 = arith.constant 4 : index
      %c0_55 = arith.constant 0 : index
      %65 = vector.load %arg10[%c4_54, %c0_55] : memref<8x256xf32, #tpu.memory_space<vmem>>, vector<1x256xf32>
      tpu.vector_store %arg10[%c4_54, %c0_55], %64 {strides = array<i32>} : memref<8x256xf32, #tpu.memory_space<vmem>>, vector<1x256xf32>,
      %cst_56 = arith.constant 0.000000e+00 : f32
      %66 = vector.broadcast %cst_56 : f32 to vector<3x256xf32>
      %c5 = arith.constant 5 : index
      %c0_57 = arith.constant 0 : index
      %67 = vector.load %arg10[%c5, %c0_57] : memref<8x256xf32, #tpu.memory_space<vmem>>, vector<3x256xf32>
      tpu.vector_store %arg10[%c5, %c0_57], %66 {strides = array<i32>} : memref<8x256xf32, #tpu.memory_space<vmem>>, vector<3x256xf32>,
      %cst_58 = arith.constant 1.000000e+00 : f32
      %68 = vector.broadcast %cst_58 : f32 to vector<1x256xf32>
      %c3_59 = arith.constant 3 : index
      %c0_60 = arith.constant 0 : index
      %69 = vector.load %arg11[%c3_59, %c0_60] : memref<8x256xf32, #tpu.memory_space<vmem>>, vector<1x256xf32>
      tpu.vector_store %arg11[%c3_59, %c0_60], %68 {strides = array<i32>} : memref<8x256xf32, #tpu.memory_space<vmem>>, vector<1x256xf32>,
      %cst_61 = arith.constant 0.000000e+00 : f32
      %70 = vector.broadcast %cst_61 : f32 to vector<3x256xf32>
      %c5_62 = arith.constant 5 : index
      %c0_63 = arith.constant 0 : index
      %71 = vector.load %arg11[%c5_62, %c0_63] : memref<8x256xf32, #tpu.memory_space<vmem>>, vector<3x256xf32>
      tpu.vector_store %arg11[%c5_62, %c0_63], %70 {strides = array<i32>} : memref<8x256xf32, #tpu.memory_space<vmem>>, vector<3x256xf32>,
    } else {
    }
    %c0 = arith.constant 0 : index
    %c0_1 = arith.constant 0 : index
    %c0_2 = arith.constant 0 : index
    %3 = vector.load %arg3[%c0, %c0_1, %c0_2] : memref<1x4x256xf32, #tpu.memory_space<vmem>>, vector<1x3x256xf32>
    %4 = vector.shape_cast %3 : vector<1x3x256xf32> to vector<3x256xf32>
    %cst = arith.constant -2.000000e+00 : f32
    %5 = vector.broadcast %cst : f32 to vector<3x256xf32>
    %6 = arith.mulf %5, %4 : vector<3x256xf32>
    %c0_3 = arith.constant 0 : index
    %c0_4 = arith.constant 0 : index
    %7 = vector.load %arg11[%c0_3, %c0_4] : memref<8x256xf32, #tpu.memory_space<vmem>>, vector<3x256xf32>
    tpu.vector_store %arg11[%c0_3, %c0_4], %6 {strides = array<i32>} : memref<8x256xf32, #tpu.memory_space<vmem>>, vector<3x256xf32>,
    %8 = arith.mulf %4, %4 : vector<3x256xf32>
    %cst_5 = arith.constant dense<0.000000e+00> : vector<256xf32>
    %9 = vector.multi_reduction <add>, %8, %cst_5 [0] : vector<3x256xf32> to vector<256xf32>
    %10 = vector.shape_cast %9 : vector<256xf32> to vector<1x256xf32>
    %c4 = arith.constant 4 : index
    %c0_6 = arith.constant 0 : index
    %11 = vector.load %arg11[%c4, %c0_6] : memref<8x256xf32, #tpu.memory_space<vmem>>, vector<1x256xf32>
    tpu.vector_store %arg11[%c4, %c0_6], %10 {strides = array<i32>} : memref<8x256xf32, #tpu.memory_space<vmem>>, vector<1x256xf32>,
    %c0_7 = arith.constant 0 : index
    %c0_8 = arith.constant 0 : index
    %12 = vector.load %arg11[%c0_7, %c0_8] : memref<8x256xf32, #tpu.memory_space<vmem>>, vector<8x256xf32>
    %c0_9 = arith.constant 0 : index
    %c0_10 = arith.constant 0 : index
    %13 = vector.load %arg10[%c0_9, %c0_10] : memref<8x256xf32, #tpu.memory_space<vmem>>, vector<8x256xf32>
    %cst_11 = arith.constant dense<0.000000e+00> : vector<256x256xf32>
    %14 = tpu.matmul %12, %13, %cst_11 {dimension_numbers = #tpu.dot_dimension_numbers<[0], [0], [1], [1], [0, 1, 1, 1], [], []>} : vector<8x256xf32>, vector<8x256xf32>, vector<256x256xf32> -> vector<256x256xf32>
    %cst_12 = arith.constant dense<0x7F800000> : vector<256xf32>
    %15 = vector.multi_reduction <minimumf>, %14, %cst_12 [0] : vector<256x256xf32> to vector<256xf32>
    %16 = vector.shape_cast %15 : vector<256xf32> to vector<1x256xf32>
    %c0_13 = arith.constant 0 : index
    %c0_14 = arith.constant 0 : index
    %c0_15 = arith.constant 0 : index
    %17 = vector.load %arg4[%c0_13, %c0_14, %c0_15] : memref<1x256x1xf32, #tpu.memory_space<vmem>>, vector<1x256x1xf32>
    %18 = vector.shape_cast %17 : vector<1x256x1xf32> to vector<256x1xf32>
    %19 = vector.broadcast %16 : vector<1x256xf32> to vector<256x256xf32>
    %20 = arith.cmpf ole, %14, %19 : vector<256x256xf32>
    %cst_16 = arith.constant 3.000000e+38 : f32
    %21 = vector.shape_cast %18 : vector<256x1xf32> to vector<256x1xf32>
    %22 = vector.broadcast %21 : vector<256x1xf32> to vector<256x256xf32>
    %23 = vector.broadcast %cst_16 : f32 to vector<256x256xf32>
    %24 = arith.select %20, %22, %23 : vector<256x256xi1>, vector<256x256xf32>
    %cst_17 = arith.constant dense<0x7F800000> : vector<256xf32>
    %25 = vector.multi_reduction <minimumf>, %24, %cst_17 [0] : vector<256x256xf32> to vector<256xf32>
    %26 = vector.shape_cast %25 : vector<256xf32> to vector<1x256xf32>
    %c0_18 = arith.constant 0 : index
    %c0_19 = arith.constant 0 : index
    %27 = vector.load %arg12[%c0_18, %c0_19] : memref<1x256xf32, #tpu.memory_space<vmem>>, vector<1x256xf32>
    %28 = arith.cmpf olt, %16, %27 : vector<1x256xf32>
    %c0_20 = arith.constant 0 : index
    %c0_21 = arith.constant 0 : index
    %29 = vector.load %arg13[%c0_20, %c0_21] : memref<1x256xf32, #tpu.memory_space<vmem>>, vector<1x256xf32>
    %30 = arith.select %28, %26, %29 : vector<1x256xi1>, vector<1x256xf32>
    %c0_22 = arith.constant 0 : index
    %c0_23 = arith.constant 0 : index
    %31 = vector.load %arg13[%c0_22, %c0_23] : memref<1x256xf32, #tpu.memory_space<vmem>>, vector<1x256xf32>
    tpu.vector_store %arg13[%c0_22, %c0_23], %30 {strides = array<i32>} : memref<1x256xf32, #tpu.memory_space<vmem>>, vector<1x256xf32>,
    %c0_24 = arith.constant 0 : index
    %c0_25 = arith.constant 0 : index
    %32 = vector.load %arg12[%c0_24, %c0_25] : memref<1x256xf32, #tpu.memory_space<vmem>>, vector<1x256xf32>
    %33 = arith.minimumf %32, %16 : vector<1x256xf32>
    %c0_26 = arith.constant 0 : index
    %c0_27 = arith.constant 0 : index
    %34 = vector.load %arg12[%c0_26, %c0_27] : memref<1x256xf32, #tpu.memory_space<vmem>>, vector<1x256xf32>
    tpu.vector_store %arg12[%c0_26, %c0_27], %33 {strides = array<i32>} : memref<1x256xf32, #tpu.memory_space<vmem>>, vector<1x256xf32>,
    %cst_28 = arith.constant dense<0x7F800000> : vector<256xf32>
    %35 = vector.multi_reduction <minimumf>, %14, %cst_28 [1] : vector<256x256xf32> to vector<256xf32>
    %36 = vector.shape_cast %35 : vector<256xf32> to vector<256x1xf32>
    %cst_29 = arith.constant 0.000000e+00 : f32
    %37 = vector.broadcast %cst_29 : f32 to vector<256x1xf32>
    %38 = arith.maximumf %36, %37 : vector<256x1xf32>
    %39 = math.sqrt %38 : vector<256x1xf32>
    %c0_30 = arith.constant 0 : index
    %c0_31 = arith.constant 0 : index
    %40 = vector.load %arg14[%c0_30, %c0_31] : memref<1x1xf32, #tpu.memory_space<vmem>>, vector<1x1xf32>
    %41 = vector.shape_cast %39 : vector<256x1xf32> to vector<1x256x1xf32>
    %cst_32 = arith.constant dense<0.000000e+00> : vector<1xf32>
    %42 = vector.multi_reduction <add>, %41, %cst_32 [1, 2] : vector<1x256x1xf32> to vector<1xf32>
    %43 = vector.shape_cast %42 : vector<1xf32> to vector<1x1x1xf32>
    %44 = vector.extract %43[0, 0, 0] : f32 from vector<1x1x1xf32>
    %45 = vector.broadcast %44 : f32 to vector<1x1xf32>
    %46 = arith.addf %40, %45 : vector<1x1xf32>
    %c0_33 = arith.constant 0 : index
    %c0_34 = arith.constant 0 : index
    %47 = vector.load %arg14[%c0_33, %c0_34] : memref<1x1xf32, #tpu.memory_space<vmem>>, vector<1x1xf32>
    tpu.vector_store %arg14[%c0_33, %c0_34], %46 {strides = array<i32>} : memref<1x1xf32, #tpu.memory_space<vmem>>, vector<1x1xf32>,
    %c0_i32_35 = arith.constant 0 : i32
    %48 = arith.cmpi eq, %arg1, %c0_i32_35 : i32
    %49 = arith.extui %48 : i1 to i32
    %c0_i32_36 = arith.constant 0 : i32
    %50 = arith.cmpi ne, %49, %c0_i32_36 : i32
    scf.if %50 {
      %c0_37 = arith.constant 0 : index
      %c0_38 = arith.constant 0 : index
      %51 = vector.load %arg12[%c0_37, %c0_38] : memref<1x256xf32, #tpu.memory_space<vmem>>, vector<1x256xf32>
      %cst_39 = arith.constant 0.000000e+00 : f32
      %52 = vector.broadcast %cst_39 : f32 to vector<1x256xf32>
      %53 = arith.maximumf %51, %52 : vector<1x256xf32>
      %54 = math.sqrt %53 : vector<1x256xf32>
      %55 = vector.shape_cast %54 : vector<1x256xf32> to vector<1x1x256xf32>
      %cst_40 = arith.constant dense<0.000000e+00> : vector<1xf32>
      %56 = vector.multi_reduction <add>, %55, %cst_40 [1, 2] : vector<1x1x256xf32> to vector<1xf32>
      %57 = vector.shape_cast %56 : vector<1xf32> to vector<1x1x1xf32>
      %58 = vector.extract %57[0, 0, 0] : f32 from vector<1x1x1xf32>
      %59 = vector.broadcast %58 : f32 to vector<1x1xf32>
      %c0_41 = arith.constant 0 : index
      %c0_42 = arith.constant 0 : index
      %c0_43 = arith.constant 0 : index
      %60 = vector.load %arg6[%c0_41, %c0_42, %c0_43] : memref<1x1x1xf32, #tpu.memory_space<vmem>>, vector<1x1x1xf32>
      %61 = vector.shape_cast %60 : vector<1x1x1xf32> to vector<1x1xf32>
      %62 = vector.shape_cast %59 : vector<1x1xf32> to vector<1x1x1xf32>
      tpu.vector_store %arg6[%c0_41, %c0_42, %c0_43], %62 {strides = array<i32>} : memref<1x1x1xf32, #tpu.memory_space<vmem>>, vector<1x1x1xf32>,
      %c0_44 = arith.constant 0 : index
      %c0_45 = arith.constant 0 : index
      %63 = vector.load %arg14[%c0_44, %c0_45] : memref<1x1xf32, #tpu.memory_space<vmem>>, vector<1x1xf32>
      %c0_46 = arith.constant 0 : index
      %c0_47 = arith.constant 0 : index
      %c0_48 = arith.constant 0 : index
      %64 = vector.load %arg7[%c0_46, %c0_47, %c0_48] : memref<1x1x1xf32, #tpu.memory_space<vmem>>, vector<1x1x1xf32>
      %65 = vector.shape_cast %64 : vector<1x1x1xf32> to vector<1x1xf32>
      %66 = vector.shape_cast %63 : vector<1x1xf32> to vector<1x1x1xf32>
      tpu.vector_store %arg7[%c0_46, %c0_47, %c0_48], %66 {strides = array<i32>} : memref<1x1x1xf32, #tpu.memory_space<vmem>>, vector<1x1x1xf32>,
      %c0_49 = arith.constant 0 : index
      %c0_50 = arith.constant 0 : index
      %67 = vector.load %arg13[%c0_49, %c0_50] : memref<1x256xf32, #tpu.memory_space<vmem>>, vector<1x256xf32>
      %c0_51 = arith.constant 0 : index
      %c0_52 = arith.constant 0 : index
      %c0_53 = arith.constant 0 : index
      %68 = vector.load %arg9[%c0_51, %c0_52, %c0_53] : memref<1x1x256xf32, #tpu.memory_space<vmem>>, vector<1x1x256xf32>
      %69 = vector.shape_cast %68 : vector<1x1x256xf32> to vector<1x256xf32>
      %70 = vector.shape_cast %67 : vector<1x256xf32> to vector<1x1x256xf32>
      tpu.vector_store %arg9[%c0_51, %c0_52, %c0_53], %70 {strides = array<i32>} : memref<1x1x256xf32, #tpu.memory_space<vmem>>, vector<1x1x256xf32>,
      %c0_54 = arith.constant 0 : index
      %c3 = arith.constant 3 : index
      %c0_55 = arith.constant 0 : index
      %71 = vector.load %arg2[%c0_54, %c3, %c0_55] : memref<1x7x256xf32, #tpu.memory_space<vmem>>, vector<1x4x256xf32>
      %72 = vector.shape_cast %71 : vector<1x4x256xf32> to vector<4x256xf32>
      %c0_56 = arith.constant 0 : index
      %c0_57 = arith.constant 0 : index
      %c0_58 = arith.constant 0 : index
      %73 = vector.load %arg5[%c0_56, %c0_57, %c0_58] : memref<1x4x1xf32, #tpu.memory_space<vmem>>, vector<1x4x1xf32>
      %74 = vector.shape_cast %73 : vector<1x4x1xf32> to vector<4x1xf32>
      %cst_59 = arith.constant dense<0xFF800000> : vector<256xf32>
      %75 = vector.multi_reduction <maximumf>, %72, %cst_59 [0] : vector<4x256xf32> to vector<256xf32>
      %76 = vector.shape_cast %75 : vector<256xf32> to vector<1x256xf32>
      %77 = vector.broadcast %76 : vector<1x256xf32> to vector<4x256xf32>
      %78 = arith.subf %72, %77 : vector<4x256xf32>
      %79 = math.exp %78 : vector<4x256xf32>
      %cst_60 = arith.constant dense<0.000000e+00> : vector<256xf32>
      %80 = vector.multi_reduction <add>, %79, %cst_60 [0] : vector<4x256xf32> to vector<256xf32>
      %81 = vector.shape_cast %80 : vector<256xf32> to vector<1x256xf32>
      %82 = math.log %81 : vector<1x256xf32>
      %83 = vector.broadcast %82 : vector<1x256xf32> to vector<4x256xf32>
      %84 = arith.subf %78, %83 : vector<4x256xf32>
      %85 = tpu.iota {dimensions = array<i32: 0>} : vector<4x256xi32>
      %86 = arith.fptosi %67 : vector<1x256xf32> to vector<1x256xi32>
      %87 = vector.broadcast %86 : vector<1x256xi32> to vector<4x256xi32>
      %88 = arith.cmpi eq, %85, %87 : vector<4x256xi32>
      %cst_61 = arith.constant 0.000000e+00 : f32
      %89 = vector.broadcast %cst_61 : f32 to vector<4x256xf32>
      %90 = arith.select %88, %84, %89 : vector<4x256xi1>, vector<4x256xf32>
      %cst_62 = arith.constant dense<0.000000e+00> : vector<256xf32>
      %91 = vector.multi_reduction <add>, %90, %cst_62 [0] : vector<4x256xf32> to vector<256xf32>
      %92 = vector.shape_cast %91 : vector<256xf32> to vector<1x256xf32>
      %cst_63 = arith.constant 0.000000e+00 : f32
      %93 = vector.shape_cast %74 : vector<4x1xf32> to vector<4x1xf32>
      %94 = vector.broadcast %93 : vector<4x1xf32> to vector<4x256xf32>
      %95 = vector.broadcast %cst_63 : f32 to vector<4x256xf32>
      %96 = arith.select %88, %94, %95 : vector<4x256xi1>, vector<4x256xf32>
      %cst_64 = arith.constant dense<0.000000e+00> : vector<256xf32>
      %97 = vector.multi_reduction <add>, %96, %cst_64 [0] : vector<4x256xf32> to vector<256xf32>
      %98 = vector.shape_cast %97 : vector<256xf32> to vector<1x256xf32>
      %99 = math.exp %92 : vector<1x256xf32>
      %cst_65 = arith.constant 1.000000e+00 : f32
      %100 = vector.broadcast %cst_65 : f32 to vector<1x256xf32>
      %101 = arith.subf %100, %99 : vector<1x256xf32>
      %cst_66 = arith.constant 1.000000e-30 : f32
      %102 = vector.broadcast %cst_66 : f32 to vector<1x256xf32>
      %103 = arith.maximumf %101, %102 : vector<1x256xf32>
      %104 = math.log %103 : vector<1x256xf32>
      %cst_67 = arith.constant 2.500000e-01 : f32
      %105 = vector.broadcast %cst_67 : f32 to vector<1x256xf32>
      %106 = arith.mulf %105, %104 : vector<1x256xf32>
      %107 = math.exp %106 : vector<1x256xf32>
      %108 = arith.mulf %107, %98 : vector<1x256xf32>
      %109 = arith.mulf %108, %92 : vector<1x256xf32>
      %cst_68 = arith.constant 0.000000e+00 : f32
      %110 = vector.broadcast %cst_68 : f32 to vector<1x256xf32>
      %111 = arith.subf %110, %109 : vector<1x256xf32>
      %112 = vector.shape_cast %111 : vector<1x256xf32> to vector<1x1x256xf32>
      %cst_69 = arith.constant dense<0.000000e+00> : vector<1xf32>
      %113 = vector.multi_reduction <add>, %112, %cst_69 [1, 2] : vector<1x1x256xf32> to vector<1xf32>
      %114 = vector.shape_cast %113 : vector<1xf32> to vector<1x1x1xf32>
      %115 = vector.extract %114[0, 0, 0] : f32 from vector<1x1x1xf32>
      %116 = vector.broadcast %115 : f32 to vector<1x1xf32>
      %c0_70 = arith.constant 0 : index
      %c0_71 = arith.constant 0 : index
      %c0_72 = arith.constant 0 : index
      %117 = vector.load %arg8[%c0_70, %c0_71, %c0_72] : memref<1x1x1xf32, #tpu.memory_space<vmem>>, vector<1x1x1xf32>
      %118 = vector.shape_cast %117 : vector<1x1x1xf32> to vector<1x1xf32>
      %119 = vector.shape_cast %116 : vector<1x1xf32> to vector<1x1x1xf32>
      tpu.vector_store %arg8[%c0_70, %c0_71, %c0_72], %119 {strides = array<i32>} : memref<1x1x1xf32, #tpu.memory_space<vmem>>, vector<1x1x1xf32>,
    } else {
    }
    return
  }
  func.func @transform_0(%arg0: i32, %arg1: i32) -> (i32, i32, i32) {
    %c0_i32 = arith.constant 0 : i32
    %c0_i32_0 = arith.constant 0 : i32
    %c0_i32_1 = arith.constant 0 : i32
    return %arg0, %c0_i32, %c0_i32_0 : i32, i32, i32
  }
  func.func @transform_1(%arg0: i32, %arg1: i32) -> (i32, i32, i32) {
    %c0_i32 = arith.constant 0 : i32
    %c0_i32_0 = arith.constant 0 : i32
    return %arg0, %c0_i32, %arg1 : i32, i32, i32
  }
  func.func @transform_2(%arg0: i32, %arg1: i32) -> (i32, i32, i32) {
    %c0_i32 = arith.constant 0 : i32
    %c0_i32_0 = arith.constant 0 : i32
    return %arg0, %arg1, %c0_i32 : i32, i32, i32
  }
  func.func @transform_3(%arg0: i32, %arg1: i32) -> (i32, i32, i32) {
    %c0_i32 = arith.constant 0 : i32
    %c0_i32_0 = arith.constant 0 : i32
    %c0_i32_1 = arith.constant 0 : i32
    %c0_i32_2 = arith.constant 0 : i32
    return %c0_i32, %c0_i32_0, %c0_i32_1 : i32, i32, i32
  }
  func.func @transform_4(%arg0: i32, %arg1: i32) -> (i32, i32, i32) {
    %c0_i32 = arith.constant 0 : i32
    %c0_i32_0 = arith.constant 0 : i32
    %c0_i32_1 = arith.constant 0 : i32
    return %arg0, %c0_i32, %c0_i32_0 : i32, i32, i32
  }
  func.func @transform_5(%arg0: i32, %arg1: i32) -> (i32, i32, i32) {
    %c0_i32 = arith.constant 0 : i32
    %c0_i32_0 = arith.constant 0 : i32
    %c0_i32_1 = arith.constant 0 : i32
    return %arg0, %c0_i32, %c0_i32_0 : i32, i32, i32
  }
  func.func @transform_6(%arg0: i32, %arg1: i32) -> (i32, i32, i32) {
    %c0_i32 = arith.constant 0 : i32
    %c0_i32_0 = arith.constant 0 : i32
    %c0_i32_1 = arith.constant 0 : i32
    return %arg0, %c0_i32, %c0_i32_0 : i32, i32, i32
  }
  func.func @transform_7(%arg0: i32, %arg1: i32) -> (i32, i32, i32) {
    %c0_i32 = arith.constant 0 : i32
    %c0_i32_0 = arith.constant 0 : i32
    %c0_i32_1 = arith.constant 0 : i32
    return %arg0, %c0_i32, %c0_i32_0 : i32, i32, i32
  }
}

module attributes {stable_mosaic.version = 11 : i64} {
  func.func @kernel(%arg0: i32, %arg1: i32, %arg2: memref<1x7x128xf32, #tpu.memory_space<vmem>>, %arg3: memref<1x4x128xf32, #tpu.memory_space<vmem>>, %arg4: memref<1x128x1xf32, #tpu.memory_space<vmem>>, %arg5: memref<1x4x1xf32, #tpu.memory_space<vmem>>, %arg6: memref<1x1x1xf32, #tpu.memory_space<vmem>>, %arg7: memref<1x1x1xf32, #tpu.memory_space<vmem>>, %arg8: memref<1x1x1xf32, #tpu.memory_space<vmem>>, %arg9: memref<1x1x128xf32, #tpu.memory_space<vmem>>, %arg10: memref<8x128xf32, #tpu.memory_space<vmem>>, %arg11: memref<8x128xf32, #tpu.memory_space<vmem>>, %arg12: memref<1x128xf32, #tpu.memory_space<vmem>>, %arg13: memref<1x128xf32, #tpu.memory_space<vmem>>, %arg14: memref<1x1xf32, #tpu.memory_space<vmem>>) attributes {dimension_semantics = [#tpu.dimension_semantics<parallel>, #tpu.dimension_semantics<arbitrary>], iteration_bounds = array<i64: 2, 1>, scalar_prefetch = 0 : i64, scratch_operands = 5 : i64, tpu.core_type = #tpu.core_type<tc>, window_params = [{transform_indices = @transform_0, window_bounds = array<i64: 1, 7, 128>}, {transform_indices = @transform_1, window_bounds = array<i64: 1, 4, 128>}, {transform_indices = @transform_2, window_bounds = array<i64: 1, 128, 1>}, {pipeline_mode = #tpu.pipeline_mode<synchronous>, transform_indices = @transform_3, window_bounds = array<i64: 1, 4, 1>}, {transform_indices = @transform_4, window_bounds = array<i64: 1, 1, 1>}, {transform_indices = @transform_5, window_bounds = array<i64: 1, 1, 1>}, {transform_indices = @transform_6, window_bounds = array<i64: 1, 1, 1>}, {transform_indices = @transform_7, window_bounds = array<i64: 1, 1, 128>}]} {
    %c0_i32 = arith.constant 0 : i32
    %0 = arith.cmpi eq, %arg1, %c0_i32 : i32
    %1 = arith.extui %0 : i1 to i32
    %c0_i32_0 = arith.constant 0 : i32
    %2 = arith.cmpi ne, %1, %c0_i32_0 : i32
    scf.if %2 {
      %cst_37 = arith.constant 3.000000e+38 : f32
      %51 = vector.broadcast %cst_37 : f32 to vector<1x128xf32>
      %c0_38 = arith.constant 0 : index
      %c0_39 = arith.constant 0 : index
      %52 = vector.load %arg12[%c0_38, %c0_39] : memref<1x128xf32, #tpu.memory_space<vmem>>, vector<1x128xf32>
      tpu.vector_store %arg12[%c0_38, %c0_39], %51 {strides = array<i32>} : memref<1x128xf32, #tpu.memory_space<vmem>>, vector<1x128xf32>,
      %cst_40 = arith.constant 0.000000e+00 : f32
      %53 = vector.broadcast %cst_40 : f32 to vector<1x128xf32>
      %c0_41 = arith.constant 0 : index
      %c0_42 = arith.constant 0 : index
      %54 = vector.load %arg13[%c0_41, %c0_42] : memref<1x128xf32, #tpu.memory_space<vmem>>, vector<1x128xf32>
      tpu.vector_store %arg13[%c0_41, %c0_42], %53 {strides = array<i32>} : memref<1x128xf32, #tpu.memory_space<vmem>>, vector<1x128xf32>,
      %cst_43 = arith.constant 0.000000e+00 : f32
      %55 = vector.broadcast %cst_43 : f32 to vector<1x1xf32>
      %c0_44 = arith.constant 0 : index
      %c0_45 = arith.constant 0 : index
      %56 = vector.load %arg14[%c0_44, %c0_45] : memref<1x1xf32, #tpu.memory_space<vmem>>, vector<1x1xf32>
      tpu.vector_store %arg14[%c0_44, %c0_45], %55 {strides = array<i32>} : memref<1x1xf32, #tpu.memory_space<vmem>>, vector<1x1xf32>,
      %c0_46 = arith.constant 0 : index
      %c0_47 = arith.constant 0 : index
      %c0_48 = arith.constant 0 : index
      %57 = vector.load %arg2[%c0_46, %c0_47, %c0_48] : memref<1x7x128xf32, #tpu.memory_space<vmem>>, vector<1x3x128xf32>
      %58 = vector.shape_cast %57 : vector<1x3x128xf32> to vector<3x128xf32>
      %59 = arith.mulf %58, %58 : vector<3x128xf32>
      %cst_49 = arith.constant dense<0.000000e+00> : vector<128xf32>
      %60 = vector.multi_reduction <add>, %59, %cst_49 [0] : vector<3x128xf32> to vector<128xf32>
      %61 = vector.shape_cast %60 : vector<128xf32> to vector<1x128xf32>
      %c0_50 = arith.constant 0 : index
      %c0_51 = arith.constant 0 : index
      %62 = vector.load %arg10[%c0_50, %c0_51] : memref<8x128xf32, #tpu.memory_space<vmem>>, vector<3x128xf32>
      tpu.vector_store %arg10[%c0_50, %c0_51], %58 {strides = array<i32>} : memref<8x128xf32, #tpu.memory_space<vmem>>, vector<3x128xf32>,
      %c3 = arith.constant 3 : index
      %c0_52 = arith.constant 0 : index
      %63 = vector.load %arg10[%c3, %c0_52] : memref<8x128xf32, #tpu.memory_space<vmem>>, vector<1x128xf32>
      tpu.vector_store %arg10[%c3, %c0_52], %61 {strides = array<i32>} : memref<8x128xf32, #tpu.memory_space<vmem>>, vector<1x128xf32>,
      %cst_53 = arith.constant 1.000000e+00 : f32
      %64 = vector.broadcast %cst_53 : f32 to vector<1x128xf32>
      %c4_54 = arith.constant 4 : index
      %c0_55 = arith.constant 0 : index
      %65 = vector.load %arg10[%c4_54, %c0_55] : memref<8x128xf32, #tpu.memory_space<vmem>>, vector<1x128xf32>
      tpu.vector_store %arg10[%c4_54, %c0_55], %64 {strides = array<i32>} : memref<8x128xf32, #tpu.memory_space<vmem>>, vector<1x128xf32>,
      %cst_56 = arith.constant 0.000000e+00 : f32
      %66 = vector.broadcast %cst_56 : f32 to vector<3x128xf32>
      %c5 = arith.constant 5 : index
      %c0_57 = arith.constant 0 : index
      %67 = vector.load %arg10[%c5, %c0_57] : memref<8x128xf32, #tpu.memory_space<vmem>>, vector<3x128xf32>
      tpu.vector_store %arg10[%c5, %c0_57], %66 {strides = array<i32>} : memref<8x128xf32, #tpu.memory_space<vmem>>, vector<3x128xf32>,
      %cst_58 = arith.constant 1.000000e+00 : f32
      %68 = vector.broadcast %cst_58 : f32 to vector<1x128xf32>
      %c3_59 = arith.constant 3 : index
      %c0_60 = arith.constant 0 : index
      %69 = vector.load %arg11[%c3_59, %c0_60] : memref<8x128xf32, #tpu.memory_space<vmem>>, vector<1x128xf32>
      tpu.vector_store %arg11[%c3_59, %c0_60], %68 {strides = array<i32>} : memref<8x128xf32, #tpu.memory_space<vmem>>, vector<1x128xf32>,
      %cst_61 = arith.constant 0.000000e+00 : f32
      %70 = vector.broadcast %cst_61 : f32 to vector<3x128xf32>
      %c5_62 = arith.constant 5 : index
      %c0_63 = arith.constant 0 : index
      %71 = vector.load %arg11[%c5_62, %c0_63] : memref<8x128xf32, #tpu.memory_space<vmem>>, vector<3x128xf32>
      tpu.vector_store %arg11[%c5_62, %c0_63], %70 {strides = array<i32>} : memref<8x128xf32, #tpu.memory_space<vmem>>, vector<3x128xf32>,
    } else {
    }
    %c0 = arith.constant 0 : index
    %c0_1 = arith.constant 0 : index
    %c0_2 = arith.constant 0 : index
    %3 = vector.load %arg3[%c0, %c0_1, %c0_2] : memref<1x4x128xf32, #tpu.memory_space<vmem>>, vector<1x3x128xf32>
    %4 = vector.shape_cast %3 : vector<1x3x128xf32> to vector<3x128xf32>
    %cst = arith.constant -2.000000e+00 : f32
    %5 = vector.broadcast %cst : f32 to vector<3x128xf32>
    %6 = arith.mulf %5, %4 : vector<3x128xf32>
    %c0_3 = arith.constant 0 : index
    %c0_4 = arith.constant 0 : index
    %7 = vector.load %arg11[%c0_3, %c0_4] : memref<8x128xf32, #tpu.memory_space<vmem>>, vector<3x128xf32>
    tpu.vector_store %arg11[%c0_3, %c0_4], %6 {strides = array<i32>} : memref<8x128xf32, #tpu.memory_space<vmem>>, vector<3x128xf32>,
    %8 = arith.mulf %4, %4 : vector<3x128xf32>
    %cst_5 = arith.constant dense<0.000000e+00> : vector<128xf32>
    %9 = vector.multi_reduction <add>, %8, %cst_5 [0] : vector<3x128xf32> to vector<128xf32>
    %10 = vector.shape_cast %9 : vector<128xf32> to vector<1x128xf32>
    %c4 = arith.constant 4 : index
    %c0_6 = arith.constant 0 : index
    %11 = vector.load %arg11[%c4, %c0_6] : memref<8x128xf32, #tpu.memory_space<vmem>>, vector<1x128xf32>
    tpu.vector_store %arg11[%c4, %c0_6], %10 {strides = array<i32>} : memref<8x128xf32, #tpu.memory_space<vmem>>, vector<1x128xf32>,
    %c0_7 = arith.constant 0 : index
    %c0_8 = arith.constant 0 : index
    %12 = vector.load %arg11[%c0_7, %c0_8] : memref<8x128xf32, #tpu.memory_space<vmem>>, vector<8x128xf32>
    %c0_9 = arith.constant 0 : index
    %c0_10 = arith.constant 0 : index
    %13 = vector.load %arg10[%c0_9, %c0_10] : memref<8x128xf32, #tpu.memory_space<vmem>>, vector<8x128xf32>
    %cst_11 = arith.constant dense<0.000000e+00> : vector<128x128xf32>
    %14 = tpu.matmul %12, %13, %cst_11 {dimension_numbers = #tpu.dot_dimension_numbers<[0], [0], [1], [1], [0, 1, 1, 1], [], []>} : vector<8x128xf32>, vector<8x128xf32>, vector<128x128xf32> -> vector<128x128xf32>
    %cst_12 = arith.constant dense<0x7F800000> : vector<128xf32>
    %15 = vector.multi_reduction <minimumf>, %14, %cst_12 [0] : vector<128x128xf32> to vector<128xf32>
    %16 = vector.shape_cast %15 : vector<128xf32> to vector<1x128xf32>
    %c0_13 = arith.constant 0 : index
    %c0_14 = arith.constant 0 : index
    %c0_15 = arith.constant 0 : index
    %17 = vector.load %arg4[%c0_13, %c0_14, %c0_15] : memref<1x128x1xf32, #tpu.memory_space<vmem>>, vector<1x128x1xf32>
    %18 = vector.shape_cast %17 : vector<1x128x1xf32> to vector<128x1xf32>
    %19 = vector.broadcast %16 : vector<1x128xf32> to vector<128x128xf32>
    %20 = arith.cmpf ole, %14, %19 : vector<128x128xf32>
    %cst_16 = arith.constant 3.000000e+38 : f32
    %21 = vector.shape_cast %18 : vector<128x1xf32> to vector<128x1xf32>
    %22 = vector.broadcast %21 : vector<128x1xf32> to vector<128x128xf32>
    %23 = vector.broadcast %cst_16 : f32 to vector<128x128xf32>
    %24 = arith.select %20, %22, %23 : vector<128x128xi1>, vector<128x128xf32>
    %cst_17 = arith.constant dense<0x7F800000> : vector<128xf32>
    %25 = vector.multi_reduction <minimumf>, %24, %cst_17 [0] : vector<128x128xf32> to vector<128xf32>
    %26 = vector.shape_cast %25 : vector<128xf32> to vector<1x128xf32>
    %c0_18 = arith.constant 0 : index
    %c0_19 = arith.constant 0 : index
    %27 = vector.load %arg12[%c0_18, %c0_19] : memref<1x128xf32, #tpu.memory_space<vmem>>, vector<1x128xf32>
    %28 = arith.cmpf olt, %16, %27 : vector<1x128xf32>
    %c0_20 = arith.constant 0 : index
    %c0_21 = arith.constant 0 : index
    %29 = vector.load %arg13[%c0_20, %c0_21] : memref<1x128xf32, #tpu.memory_space<vmem>>, vector<1x128xf32>
    %30 = arith.select %28, %26, %29 : vector<1x128xi1>, vector<1x128xf32>
    %c0_22 = arith.constant 0 : index
    %c0_23 = arith.constant 0 : index
    %31 = vector.load %arg13[%c0_22, %c0_23] : memref<1x128xf32, #tpu.memory_space<vmem>>, vector<1x128xf32>
    tpu.vector_store %arg13[%c0_22, %c0_23], %30 {strides = array<i32>} : memref<1x128xf32, #tpu.memory_space<vmem>>, vector<1x128xf32>,
    %c0_24 = arith.constant 0 : index
    %c0_25 = arith.constant 0 : index
    %32 = vector.load %arg12[%c0_24, %c0_25] : memref<1x128xf32, #tpu.memory_space<vmem>>, vector<1x128xf32>
    %33 = arith.minimumf %32, %16 : vector<1x128xf32>
    %c0_26 = arith.constant 0 : index
    %c0_27 = arith.constant 0 : index
    %34 = vector.load %arg12[%c0_26, %c0_27] : memref<1x128xf32, #tpu.memory_space<vmem>>, vector<1x128xf32>
    tpu.vector_store %arg12[%c0_26, %c0_27], %33 {strides = array<i32>} : memref<1x128xf32, #tpu.memory_space<vmem>>, vector<1x128xf32>,
    %cst_28 = arith.constant dense<0x7F800000> : vector<128xf32>
    %35 = vector.multi_reduction <minimumf>, %14, %cst_28 [1] : vector<128x128xf32> to vector<128xf32>
    %36 = vector.shape_cast %35 : vector<128xf32> to vector<128x1xf32>
    %cst_29 = arith.constant 0.000000e+00 : f32
    %37 = vector.broadcast %cst_29 : f32 to vector<128x1xf32>
    %38 = arith.maximumf %36, %37 : vector<128x1xf32>
    %39 = math.sqrt %38 : vector<128x1xf32>
    %c0_30 = arith.constant 0 : index
    %c0_31 = arith.constant 0 : index
    %40 = vector.load %arg14[%c0_30, %c0_31] : memref<1x1xf32, #tpu.memory_space<vmem>>, vector<1x1xf32>
    %41 = vector.shape_cast %39 : vector<128x1xf32> to vector<1x128x1xf32>
    %cst_32 = arith.constant dense<0.000000e+00> : vector<1xf32>
    %42 = vector.multi_reduction <add>, %41, %cst_32 [1, 2] : vector<1x128x1xf32> to vector<1xf32>
    %43 = vector.shape_cast %42 : vector<1xf32> to vector<1x1x1xf32>
    %44 = vector.extract %43[0, 0, 0] : f32 from vector<1x1x1xf32>
    %45 = vector.broadcast %44 : f32 to vector<1x1xf32>
    %46 = arith.addf %40, %45 : vector<1x1xf32>
    %c0_33 = arith.constant 0 : index
    %c0_34 = arith.constant 0 : index
    %47 = vector.load %arg14[%c0_33, %c0_34] : memref<1x1xf32, #tpu.memory_space<vmem>>, vector<1x1xf32>
    tpu.vector_store %arg14[%c0_33, %c0_34], %46 {strides = array<i32>} : memref<1x1xf32, #tpu.memory_space<vmem>>, vector<1x1xf32>,
    %c0_i32_35 = arith.constant 0 : i32
    %48 = arith.cmpi eq, %arg1, %c0_i32_35 : i32
    %49 = arith.extui %48 : i1 to i32
    %c0_i32_36 = arith.constant 0 : i32
    %50 = arith.cmpi ne, %49, %c0_i32_36 : i32
    scf.if %50 {
      %c0_37 = arith.constant 0 : index
      %c0_38 = arith.constant 0 : index
      %51 = vector.load %arg12[%c0_37, %c0_38] : memref<1x128xf32, #tpu.memory_space<vmem>>, vector<1x128xf32>
      %cst_39 = arith.constant 0.000000e+00 : f32
      %52 = vector.broadcast %cst_39 : f32 to vector<1x128xf32>
      %53 = arith.maximumf %51, %52 : vector<1x128xf32>
      %54 = math.sqrt %53 : vector<1x128xf32>
      %55 = vector.shape_cast %54 : vector<1x128xf32> to vector<1x1x128xf32>
      %cst_40 = arith.constant dense<0.000000e+00> : vector<1xf32>
      %56 = vector.multi_reduction <add>, %55, %cst_40 [1, 2] : vector<1x1x128xf32> to vector<1xf32>
      %57 = vector.shape_cast %56 : vector<1xf32> to vector<1x1x1xf32>
      %58 = vector.extract %57[0, 0, 0] : f32 from vector<1x1x1xf32>
      %59 = vector.broadcast %58 : f32 to vector<1x1xf32>
      %c0_41 = arith.constant 0 : index
      %c0_42 = arith.constant 0 : index
      %c0_43 = arith.constant 0 : index
      %60 = vector.load %arg6[%c0_41, %c0_42, %c0_43] : memref<1x1x1xf32, #tpu.memory_space<vmem>>, vector<1x1x1xf32>
      %61 = vector.shape_cast %60 : vector<1x1x1xf32> to vector<1x1xf32>
      %62 = vector.shape_cast %59 : vector<1x1xf32> to vector<1x1x1xf32>
      tpu.vector_store %arg6[%c0_41, %c0_42, %c0_43], %62 {strides = array<i32>} : memref<1x1x1xf32, #tpu.memory_space<vmem>>, vector<1x1x1xf32>,
      %c0_44 = arith.constant 0 : index
      %c0_45 = arith.constant 0 : index
      %63 = vector.load %arg14[%c0_44, %c0_45] : memref<1x1xf32, #tpu.memory_space<vmem>>, vector<1x1xf32>
      %c0_46 = arith.constant 0 : index
      %c0_47 = arith.constant 0 : index
      %c0_48 = arith.constant 0 : index
      %64 = vector.load %arg7[%c0_46, %c0_47, %c0_48] : memref<1x1x1xf32, #tpu.memory_space<vmem>>, vector<1x1x1xf32>
      %65 = vector.shape_cast %64 : vector<1x1x1xf32> to vector<1x1xf32>
      %66 = vector.shape_cast %63 : vector<1x1xf32> to vector<1x1x1xf32>
      tpu.vector_store %arg7[%c0_46, %c0_47, %c0_48], %66 {strides = array<i32>} : memref<1x1x1xf32, #tpu.memory_space<vmem>>, vector<1x1x1xf32>,
      %c0_49 = arith.constant 0 : index
      %c0_50 = arith.constant 0 : index
      %67 = vector.load %arg13[%c0_49, %c0_50] : memref<1x128xf32, #tpu.memory_space<vmem>>, vector<1x128xf32>
      %c0_51 = arith.constant 0 : index
      %c0_52 = arith.constant 0 : index
      %c0_53 = arith.constant 0 : index
      %68 = vector.load %arg9[%c0_51, %c0_52, %c0_53] : memref<1x1x128xf32, #tpu.memory_space<vmem>>, vector<1x1x128xf32>
      %69 = vector.shape_cast %68 : vector<1x1x128xf32> to vector<1x128xf32>
      %70 = vector.shape_cast %67 : vector<1x128xf32> to vector<1x1x128xf32>
      tpu.vector_store %arg9[%c0_51, %c0_52, %c0_53], %70 {strides = array<i32>} : memref<1x1x128xf32, #tpu.memory_space<vmem>>, vector<1x1x128xf32>,
      %c0_54 = arith.constant 0 : index
      %c3 = arith.constant 3 : index
      %c0_55 = arith.constant 0 : index
      %71 = vector.load %arg2[%c0_54, %c3, %c0_55] : memref<1x7x128xf32, #tpu.memory_space<vmem>>, vector<1x4x128xf32>
      %72 = vector.shape_cast %71 : vector<1x4x128xf32> to vector<4x128xf32>
      %c0_56 = arith.constant 0 : index
      %c0_57 = arith.constant 0 : index
      %c0_58 = arith.constant 0 : index
      %73 = vector.load %arg5[%c0_56, %c0_57, %c0_58] : memref<1x4x1xf32, #tpu.memory_space<vmem>>, vector<1x4x1xf32>
      %74 = vector.shape_cast %73 : vector<1x4x1xf32> to vector<4x1xf32>
      %cst_59 = arith.constant dense<0xFF800000> : vector<128xf32>
      %75 = vector.multi_reduction <maximumf>, %72, %cst_59 [0] : vector<4x128xf32> to vector<128xf32>
      %76 = vector.shape_cast %75 : vector<128xf32> to vector<1x128xf32>
      %77 = vector.broadcast %76 : vector<1x128xf32> to vector<4x128xf32>
      %78 = arith.subf %72, %77 : vector<4x128xf32>
      %79 = math.exp %78 : vector<4x128xf32>
      %cst_60 = arith.constant dense<0.000000e+00> : vector<128xf32>
      %80 = vector.multi_reduction <add>, %79, %cst_60 [0] : vector<4x128xf32> to vector<128xf32>
      %81 = vector.shape_cast %80 : vector<128xf32> to vector<1x128xf32>
      %82 = math.log %81 : vector<1x128xf32>
      %83 = vector.broadcast %82 : vector<1x128xf32> to vector<4x128xf32>
      %84 = arith.subf %78, %83 : vector<4x128xf32>
      %85 = tpu.iota {dimensions = array<i32: 0>} : vector<4x128xi32>
      %86 = arith.fptosi %67 : vector<1x128xf32> to vector<1x128xi32>
      %87 = vector.broadcast %86 : vector<1x128xi32> to vector<4x128xi32>
      %88 = arith.cmpi eq, %85, %87 : vector<4x128xi32>
      %cst_61 = arith.constant 0.000000e+00 : f32
      %89 = vector.broadcast %cst_61 : f32 to vector<4x128xf32>
      %90 = arith.select %88, %84, %89 : vector<4x128xi1>, vector<4x128xf32>
      %cst_62 = arith.constant dense<0.000000e+00> : vector<128xf32>
      %91 = vector.multi_reduction <add>, %90, %cst_62 [0] : vector<4x128xf32> to vector<128xf32>
      %92 = vector.shape_cast %91 : vector<128xf32> to vector<1x128xf32>
      %cst_63 = arith.constant 0.000000e+00 : f32
      %93 = vector.shape_cast %74 : vector<4x1xf32> to vector<4x1xf32>
      %94 = vector.broadcast %93 : vector<4x1xf32> to vector<4x128xf32>
      %95 = vector.broadcast %cst_63 : f32 to vector<4x128xf32>
      %96 = arith.select %88, %94, %95 : vector<4x128xi1>, vector<4x128xf32>
      %cst_64 = arith.constant dense<0.000000e+00> : vector<128xf32>
      %97 = vector.multi_reduction <add>, %96, %cst_64 [0] : vector<4x128xf32> to vector<128xf32>
      %98 = vector.shape_cast %97 : vector<128xf32> to vector<1x128xf32>
      %99 = math.exp %92 : vector<1x128xf32>
      %cst_65 = arith.constant 1.000000e+00 : f32
      %100 = vector.broadcast %cst_65 : f32 to vector<1x128xf32>
      %101 = arith.subf %100, %99 : vector<1x128xf32>
      %cst_66 = arith.constant 1.000000e-30 : f32
      %102 = vector.broadcast %cst_66 : f32 to vector<1x128xf32>
      %103 = arith.maximumf %101, %102 : vector<1x128xf32>
      %104 = math.log %103 : vector<1x128xf32>
      %cst_67 = arith.constant 2.500000e-01 : f32
      %105 = vector.broadcast %cst_67 : f32 to vector<1x128xf32>
      %106 = arith.mulf %105, %104 : vector<1x128xf32>
      %107 = math.exp %106 : vector<1x128xf32>
      %108 = arith.mulf %107, %98 : vector<1x128xf32>
      %109 = arith.mulf %108, %92 : vector<1x128xf32>
      %cst_68 = arith.constant 0.000000e+00 : f32
      %110 = vector.broadcast %cst_68 : f32 to vector<1x128xf32>
      %111 = arith.subf %110, %109 : vector<1x128xf32>
      %112 = vector.shape_cast %111 : vector<1x128xf32> to vector<1x1x128xf32>
      %cst_69 = arith.constant dense<0.000000e+00> : vector<1xf32>
      %113 = vector.multi_reduction <add>, %112, %cst_69 [1, 2] : vector<1x1x128xf32> to vector<1xf32>
      %114 = vector.shape_cast %113 : vector<1xf32> to vector<1x1x1xf32>
      %115 = vector.extract %114[0, 0, 0] : f32 from vector<1x1x1xf32>
      %116 = vector.broadcast %115 : f32 to vector<1x1xf32>
      %c0_70 = arith.constant 0 : index
      %c0_71 = arith.constant 0 : index
      %c0_72 = arith.constant 0 : index
      %117 = vector.load %arg8[%c0_70, %c0_71, %c0_72] : memref<1x1x1xf32, #tpu.memory_space<vmem>>, vector<1x1x1xf32>
      %118 = vector.shape_cast %117 : vector<1x1x1xf32> to vector<1x1xf32>
      %119 = vector.shape_cast %116 : vector<1x1xf32> to vector<1x1x1xf32>
      tpu.vector_store %arg8[%c0_70, %c0_71, %c0_72], %119 {strides = array<i32>} : memref<1x1x1xf32, #tpu.memory_space<vmem>>, vector<1x1x1xf32>,
    } else {
    }
    return
  }
  func.func @transform_0(%arg0: i32, %arg1: i32) -> (i32, i32, i32) {
    %c0_i32 = arith.constant 0 : i32
    %c0_i32_0 = arith.constant 0 : i32
    %c0_i32_1 = arith.constant 0 : i32
    return %arg0, %c0_i32, %c0_i32_0 : i32, i32, i32
  }
  func.func @transform_1(%arg0: i32, %arg1: i32) -> (i32, i32, i32) {
    %c0_i32 = arith.constant 0 : i32
    %c0_i32_0 = arith.constant 0 : i32
    return %arg0, %c0_i32, %arg1 : i32, i32, i32
  }
  func.func @transform_2(%arg0: i32, %arg1: i32) -> (i32, i32, i32) {
    %c0_i32 = arith.constant 0 : i32
    %c0_i32_0 = arith.constant 0 : i32
    return %arg0, %arg1, %c0_i32 : i32, i32, i32
  }
  func.func @transform_3(%arg0: i32, %arg1: i32) -> (i32, i32, i32) {
    %c0_i32 = arith.constant 0 : i32
    %c0_i32_0 = arith.constant 0 : i32
    %c0_i32_1 = arith.constant 0 : i32
    %c0_i32_2 = arith.constant 0 : i32
    return %c0_i32, %c0_i32_0, %c0_i32_1 : i32, i32, i32
  }
  func.func @transform_4(%arg0: i32, %arg1: i32) -> (i32, i32, i32) {
    %c0_i32 = arith.constant 0 : i32
    %c0_i32_0 = arith.constant 0 : i32
    %c0_i32_1 = arith.constant 0 : i32
    return %arg0, %c0_i32, %c0_i32_0 : i32, i32, i32
  }
  func.func @transform_5(%arg0: i32, %arg1: i32) -> (i32, i32, i32) {
    %c0_i32 = arith.constant 0 : i32
    %c0_i32_0 = arith.constant 0 : i32
    %c0_i32_1 = arith.constant 0 : i32
    return %arg0, %c0_i32, %c0_i32_0 : i32, i32, i32
  }
  func.func @transform_6(%arg0: i32, %arg1: i32) -> (i32, i32, i32) {
    %c0_i32 = arith.constant 0 : i32
    %c0_i32_0 = arith.constant 0 : i32
    %c0_i32_1 = arith.constant 0 : i32
    return %arg0, %c0_i32, %c0_i32_0 : i32, i32, i32
  }
  func.func @transform_7(%arg0: i32, %arg1: i32) -> (i32, i32, i32) {
    %c0_i32 = arith.constant 0 : i32
    %c0_i32_0 = arith.constant 0 : i32
    %c0_i32_1 = arith.constant 0 : i32
    return %arg0, %c0_i32, %c0_i32_0 : i32, i32, i32
  }
}

</mosaic_0001>

<llo_original>
// kernel: loss_forward.3
$region0: #{loss_forward.3}
  #allocation0 [shape = 'u32[]', space=smem, size = 0x4, offset = 0x4, fixed_abs, tag = 'smem constant byte address 0x4 - core index']
  #allocation1 [shape = 'u32[144,128]{1,0:T(1,128)}', space=vmem, size = 0x12000, scoped, tag = 'internal scratch']
  #allocation2 [shape = 'f32[1,256]{1,0:T(1,128)}', space=vmem, size = 0x400, scoped, tag = 'scratch operand']
  #allocation3 [shape = 'f32[128,256]{1,0:T(8,128)}', space=vmem, size = 0x20000, scoped, tag = 'scratch operand']
  %s0 = inlined_call_operand.vmem [shape: f32[2,4,256], index: 0, kind: input, shape index: {}]
  %s1 = inlined_call_operand.vmem [shape: f32[2,4,128], index: 1, kind: output, shape index: {}]
  %s2 = sld [smem:[#allocation0]]
  $region44: #{loss_forward.3} parent=0
    _
  %s4 = ssub.s32 1, %s2
  %s5 = scalar_select 0, %s4, %s2
  loop: start=0, step=1, limit=4
  $region2: #{loss_forward.3} parent=0 // loop_pre_header
    _
  $region3: #{loss_forward.3} parent=0 // loop_header
    %s7 = sphi 0, %s11
    %p8 = scmp.ge.s32.totalorder %s7, 4
    %s17 = sphi 0, %s19
    %s20 = sphi 0, %s17
    %s21 = sphi 0, %s20
    %s37 = sphi 0, %s21
    %s43 = sphi 0, %s45
    %s46 = sphi 0, %s43
    %s47 = sphi 0, %s46
    %s63 = sphi 0, %s47
  $region4: #{loss_forward.3} parent=0 // loop_header_branch
    %10 = sbr.rel (%p8) target = $region8
  $region5: #{loss_forward.3} parent=0 // loop_body
    %s12 = ssub.s32 %s7, 1
    %s13 = ssub.s32 %s7, 2
    %s14 = sadd.s32 %s7, 1
    %s15 = ssub.s32 %s7, %s14
    %p16 = scmp.eq.s32.totalorder %s15, 0
    %s18 = sadd.s32 %s17, 1
    %s19 = scalar_select %p16, %s17, %s18
    %p22 = pneg %p16
    %p23 = scmp.eq.s32.totalorder %s7, 1
    %p24 = por %p22, %p23
    %p25 = scmp.ne.s32.totalorder %s17, %s20
    %p26 = scmp.eq.s32.totalorder %s7, 0
    %p27 = por %p25, %p26
    %p28 = scmp.ne.s32.totalorder %s17, %s20
    %p29 = scmp.eq.s32.totalorder %s12, 1
    %p30 = por %p28, %p29
    %p31 = scmp.ne.s32.totalorder %s20, %s21
    %p32 = scmp.eq.s32.totalorder %s12, 0
    %p33 = por %p31, %p32
    %p34 = scmp.ne.s32.totalorder %s20, %s21
    %p35 = scmp.eq.s32.totalorder %s13, 1
    %p36 = por %p34, %p35
    %p38 = scmp.ne.s32.totalorder %s21, %s37
    %p39 = scmp.eq.s32.totalorder %s13, 0
    %p40 = por %p38, %p39
    %s41 = ssub.s32 %s7, %s14
    %p42 = scmp.eq.s32.totalorder %s41, 0
    %s44 = sadd.s32 %s43, 1
    %s45 = scalar_select %p42, %s43, %s44
    %p48 = pneg %p42
    %p49 = scmp.eq.s32.totalorder %s7, 1
    %p50 = por %p48, %p49
    %p51 = scmp.ne.s32.totalorder %s43, %s46
    %p52 = scmp.eq.s32.totalorder %s7, 0
    %p53 = por %p51, %p52
    %p54 = scmp.ne.s32.totalorder %s43, %s46
    %p55 = scmp.eq.s32.totalorder %s12, 1
    %p56 = por %p54, %p55
    %p57 = scmp.ne.s32.totalorder %s46, %s47
    %p58 = scmp.eq.s32.totalorder %s12, 0
    %p59 = por %p57, %p58
    %p60 = scmp.ne.s32.totalorder %s46, %s47
    %p61 = scmp.eq.s32.totalorder %s13, 1
    %p62 = por %p60, %p61
    %p64 = scmp.ne.s32.totalorder %s47, %s63
    %p65 = scmp.eq.s32.totalorder %s13, 0
    %p66 = por %p64, %p65
    %p67 = scmp.le.s32.totalorder 1, %s7
    %p68 = scmp.lt.s32.totalorder %s7, 3
    %p69 = pnand %p67, %p68
    %p70 = pneg %p69
    // Predicated region
    $region9: #{loss_forward.3} parent=5 // pred_check
      _
    $region10: #{loss_forward.3} parent=5 // pred_check_branch
      %72 = sbr.rel (%p69) target = $region12
    $region11: #{loss_forward.3} parent=5 // pred_region
      %s73 = ssub.s32 %s7, 1
    $region12: #{loss_forward.3} parent=5 // pred_fallthru
      _
    %p74 = scmp.lt.s32.totalorder %s7, 2
    // Predicated region
    $region13: #{loss_forward.3} parent=5 // pred_check
      %p75 = pneg %p74
    $region14: #{loss_forward.3} parent=5 // pred_check_branch
      %77 = sbr.rel (%p75) target = $region16
    $region15: #{loss_forward.3} parent=5 // pred_region
      // Predicated region
      $region17: #{loss_forward.3} parent=15 // pred_check
        %p78 = pneg %p27
      $region18: #{loss_forward.3} parent=15 // pred_check_branch
        %80 = sbr.rel (%p78) target = $region20
      $region19: #{loss_forward.3} parent=15 // pred_region
        %p81 = scmp.lt.s32.totalorder %s7, 1
        %s82 = scalar_select %p81, %s7, 1
        %s83 = smul.addr %s82, 2
        %s84 = smul.addr %s83, 4
        %s85 = scalar_lea.vmem %s0, %s84
      $region20: #{loss_forward.3} parent=15 // pred_fallthru
        _
    $region16: #{loss_forward.3} parent=5 // pred_fallthru
      _
    %p86 = scmp.le.s32.totalorder 1, %s7
    %p87 = scmp.lt.s32.totalorder %s7, 3
    %p88 = pnand %p86, %p87
    %p89 = pneg %p88
    // Predicated region
    $region21: #{loss_forward.3} parent=5 // pred_check
      _
    $region22: #{loss_forward.3} parent=5 // pred_check_branch
      %91 = sbr.rel (%p88) target = $region24
    $region23: #{loss_forward.3} parent=5 // pred_region
      %s92 = ssub.s32 %s7, 1
      %p93 = scmp.lt.s32.totalorder %s12, 1
      %s94 = scalar_select %p93, %s12, 1
      %s95 = smul.addr %s94, 2
      %s96 = smul.addr %s95, 4
      %s97 = scalar_lea.vmem %s0, %s96
      %p98 = pneg %p33
      %p99 = pneg %p30
      %p100 = pneg %p59
      %p101 = pneg %p56
      %p102 = scmp.lt.s32.totalorder %s12, 1
      %s103 = scalar_select %p102, %s12, 1
      %s104 = smul.addr %s103, 4
      %s105 = scalar_lea.vmem %s1, %s104
      %p106 = scmp.lt.s32.totalorder %s12, 1
      %s107 = scalar_select %p106, %s12, 1
      %s108 = smul.addr %s107, 2
      %s109 = smul.addr %s108, 4
      %s110 = scalar_lea.vmem %s0, %s109
      %p111 = scmp.lt.s32.totalorder %s12, 1
      %s112 = scalar_select %p111, %s12, 1
      %s113 = smul.addr %s112, 4
      %s114 = scalar_lea.vmem %s1, %s113
      %v115 = vld [vmem:[%s110] sm:$0x77]
      %v116 = vlaneseq
      %v117 = vand.u32 %v116, 127
      %v118 = vadd.s32 %v117, 128
      %v119 = vlaneseq
      %vm120 = vcmp.ge.s32.totalorder %v119, 0
      %vm121 = vcmp.lt.s32.totalorder %v119, 256
      %vm122 = vmand %vm120, %vm121
      %123 = vst.msk [vmem:[#allocation2] sm:$0x3] %vm122, 3e+38
      %vm124 = vcmp.eq.s32.totalorder %v117, 0
      %vm125 = vcmp.eq.s32.totalorder %v118, 0
      %v126 = vsel %vm124, 1, 0
      %v127 = vsel %vm125, 1, 0
      %v128 = vcvt.s32.f32 %v126
      %v129 = vcvt.s32.f32 %v127
      %v132 = vcombine.low %v128, %v129
      %v134 = vunpack.c.l.s4 1966171168
      %v135 = vunpack.c.0.s8 %v134
      %v136 = vlaneseq
      %v137 = vshrl.u32 %v136, 7
      %v138 = vsub.s32 %v135, %v137
      %v139 = vrot.slane %v132, %v138
      %v141 = vunpack.c.l.s4 1966171168
      %v142 = vunpack.c.0.s8 %v141
      %v143 = vlaneseq
      %v144 = vshrl.u32 %v143, 7
      %v145 = vsub.s32 %v142, %v144
      %v146 = vrot.slane %v139, %v145
      %148 = vst.msk [vmem:[#allocation3] ss:$8 sm:$0x3] %vm122, %v146
      %149 = vst.msk [vmem:[#allocation3] ss:$8 sm:$0x0] %vm122, %v146
      loop: start=1, step=1, limit=128
      $region25: #{loss_forward.3} parent=23 // loop_pre_header
        _
      $region26: #{loss_forward.3} parent=23 // loop_header
        %s151 = sphi 1, %s155
        %p152 = scmp.ge.s32.totalorder %s151, 128
        %v156 = vphi %v115, %v329
      $region27: #{loss_forward.3} parent=23 // loop_header_branch
        %154 = sbr.rel (%p152) target = $region31
      $region28: #{loss_forward.3} parent=23 // loop_body
        %158 = vset.pattern.permute.xlu0 0
        %159 = vperm.xlu0 %158, %v156
        %v160 = vpop.permute.xlu0 %159
        %v162 = vunpack.c.l.s4 839922192
        %v163 = vunpack.c.0.s8 %v162
        %v164 = vlaneseq
        %v165 = vshrl.u32 %v164, 7
        %v166 = vsub.s32 %v163, %v165
        %v167 = vrot.slane %v160, %v166
        %v169 = vsub.f32 %v115, %v167
        %v170 = vmul.f32 %v169, %v169
        %v172 = vcombine.high %v170, %v170
        %vm174 = vcmask 1042432
        %v175 = vsel %vm174, %v170, 0.0
        %v176 = vrot.slane %v175, 4
        %v177 = vadd.f32 %v175, %v176
        %v178 = vrot.slane %v177, 2
        %v179 = vadd.f32 %v177, %v178
        %v180 = vrot.slane %v179, 1
        %v181 = vadd.f32 %v179, %v180
        %v182 = vsel %vm174, %v172, 0.0
        %v183 = vrot.slane %v182, 4
        %v184 = vadd.f32 %v182, %v183
        %v185 = vrot.slane %v184, 2
        %v186 = vadd.f32 %v184, %v185
        %v187 = vrot.slane %v186, 1
        %v188 = vadd.f32 %v186, %v187
        %v189 = vld [vmem:[#allocation2] sm:$0x3]
        %v192 = vcombine.low %v181, %v188
        %v194 = vunpack.c.l.s4 1966171168
        %v195 = vunpack.c.0.s8 %v194
        %v196 = vlaneseq
        %v197 = vshrl.u32 %v196, 7
        %v198 = vsub.s32 %v195, %v197
        %v199 = vrot.slane %v192, %v198
        %v201 = vunpack.c.l.s4 1966171168
        %v202 = vunpack.c.0.s8 %v201
        %v203 = vlaneseq
        %v204 = vshrl.u32 %v203, 7
        %v205 = vsub.s32 %v202, %v204
        %v206 = vrot.slane %v199, %v205
        %v208 = vmin.f32 %v189, %v206
        %209 = vst.msk [vmem:[#allocation2] sm:$0x3] %vm122, %v208
        %v211 = vlaneseq
        %v212 = vshrl.u32 %v211, 7
        %v213 = vsub.s32 0, %v212
        %v214 = vrot.slane %v208, %v213
        %v215 = vlaneseq
        %v216 = vshrl.u32 %v215, 7
        %v217 = vsub.s32 1, %v216
        %v218 = vrot.slane %v208, %v217
        %vm221 = vcmask 1040384
        %v222 = vsel %vm221, %v214, -inf
        %v223 = vsel %vm221, %v218, -inf
        %v224 = vmax.f32 %v222, %v223
        %225 = vmax.xlane.f32.xlu0 %v224
        %v226 = vpop.xlane.xlu0 %225
        %v228 = vlaneseq
        %v229 = vshrl.u32 %v228, 7
        %v230 = vsub.s32 0, %v229
        %v231 = vrot.slane %v226, %v230
        %vm233 = vcmp.ge.f32.partialorder %v208, %v231
        %v234 = vcombine.low %v117, %v118
        %v236 = vunpack.c.l.s4 1966171168
        %v237 = vunpack.c.0.s8 %v236
        %v238 = vlaneseq
        %v239 = vshrl.u32 %v238, 7
        %v240 = vsub.s32 %v237, %v239
        %v241 = vrot.slane %v234, %v240
        %v243 = vunpack.c.l.s4 1966171168
        %v244 = vunpack.c.0.s8 %v243
        %v245 = vlaneseq
        %v246 = vshrl.u32 %v245, 7
        %v247 = vsub.s32 %v244, %v246
        %v248 = vrot.slane %v241, %v247
        %v249 = vsel %vm233, %v248, 256
        %v250 = vlaneseq
        %v251 = vshrl.u32 %v250, 7
        %v252 = vsub.s32 0, %v251
        %v253 = vrot.slane %v249, %v252
        %v254 = vlaneseq
        %v255 = vshrl.u32 %v254, 7
        %v256 = vsub.s32 1, %v255
        %v257 = vrot.slane %v249, %v256
        %v258 = vsel %vm221, %v253, 2147483647
        %v259 = vsel %vm221, %v257, 2147483647
        %vm260 = vcmp.lt.s32.totalorder %v258, %v259
        %v261 = vsel %vm260, %v258, %v259
        %v262 = vand.u32 %v261, 65535
        %v263 = vshra.s32 %v261, 16
        %v264 = vcvt.s32.f32 %v262
        %v265 = vcvt.s32.f32 %v263
        %266 = vmin.xlane.f32.xlu0 %v265
        %v267 = vpop.xlane.xlu0 %266
        %vm268 = vcmp.eq.f32.partialorder %v265, %v267
        %v269 = vsel %vm268, %v264, inf
        %270 = vmin.xlane.f32.xlu0 %v269
        %v271 = vpop.xlane.xlu0 %270
        %v272 = vcvt.f32.s32 %v271
        %v273 = vcvt.f32.s32 %v267
        %v274 = vshll.u32 %v273, 16
        %v275 = vadd.s32 %v274, %v272
        %vm276 = vcmp.eq.s32.totalorder %v117, %v275
        %vm277 = vcmp.eq.s32.totalorder %v118, %v275
        %v278 = vsel %vm276, 1, 0
        %v279 = vsel %vm277, 1, 0
        %v280 = vcvt.s32.f32 %v278
        %v281 = vcvt.s32.f32 %v279
        %v284 = vcombine.low %v280, %v281
        %v286 = vunpack.c.l.s4 1966171168
        %v287 = vunpack.c.0.s8 %v286
        %v288 = vlaneseq
        %v289 = vshrl.u32 %v288, 7
        %v290 = vsub.s32 %v287, %v289
        %v291 = vrot.slane %v284, %v290
        %v293 = vunpack.c.l.s4 1966171168
        %v294 = vunpack.c.0.s8 %v293
        %v295 = vlaneseq
        %v296 = vshrl.u32 %v295, 7
        %v297 = vsub.s32 %v294, %v296
        %v298 = vrot.slane %v291, %v297
        %s300 = sshra.s32 %s151, 3
        %s301 = sand.u32 %s151, 7
        %s302 = sshra.s32 %s151, 3
        %s303 = sand.u32 %s151, 7
        %s304 = smul.u32 %s300, 2
        %s305 = smul.u32 %s304, 8
        %s306 = sadd.s32 %s305, %s303
        %s307 = scalar_lea.vmem [#allocation3], %s306
        %308 = vst.msk [vmem:[%s307] ss:$8 sm:$0x3] %vm122, %v298
        %309 = vst.msk [vmem:[%s307] ss:$8 sm:$0x0] %vm122, %v298
        %v310 = vlaneseq
        %v311 = vshrl.u32 %v310, 7
        %v312 = vsub.s32 0, %v311
        %v313 = vrot.slane %v278, %v312
        %v314 = vlaneseq
        %v315 = vshrl.u32 %v314, 7
        %v316 = vsub.s32 0, %v315
        %v317 = vrot.slane %v279, %v316
        %vm318 = vcmp.eq.s32.totalorder %v313, 1
        %vm319 = vcmp.eq.s32.totalorder %v317, 1
        %v321 = vcombine.high %v115, %v115
        %v323 = vsel %vm318, %v115, 0.0
        %v324 = vsel %vm319, %v321, 0.0
        %v325 = vsel %vm174, %v323, 0.0
        %v326 = vsel %vm174, %v324, 0.0
        %v327 = vadd.f32 %v325, %v326
        %328 = vadd.xlane.f32.xlu0 %v327
        %v329 = vpop.xlane.xlu0 %328
      $region29: #{loss_forward.3} parent=23 // loop_footer
        %s155 = sadd.s32 1, %s151
      $region30: #{loss_forward.3} parent=23 // loop_footer_branch
        %150 = sbr.rel target = $region26
      $region31: #{loss_forward.3} parent=23 // loop_exit
        _
      %v330 = vld [vmem:[%s110] sm:$0xff]
      %v331 = vld [vmem:[#allocation3] sm:$0xff]
      %v332 = vld [vmem:[#allocation3 + $0x8] sm:$0xff]
      %v333 = vld [vmem:[#allocation3 + $0x10] sm:$0xff]
      %v334 = vld [vmem:[#allocation3 + $0x18] sm:$0xff]
      %v335 = vld [vmem:[#allocation3 + $0x20] sm:$0xff]
      %v336 = vld [vmem:[#allocation3 + $0x28] sm:$0xff]
      %v337 = vld [vmem:[#allocation3 + $0x30] sm:$0xff]
      %v338 = vld [vmem:[#allocation3 + $0x38] sm:$0xff]
      %v339 = vld [vmem:[#allocation3 + $0x40] sm:$0xff]
      %v340 = vld [vmem:[#allocation3 + $0x48] sm:$0xff]
      %v341 = vld [vmem:[#allocation3 + $0x50] sm:$0xff]
      %v342 = vld [vmem:[#allocation3 + $0x58] sm:$0xff]
      %v343 = vld [vmem:[#allocation3 + $0x60] sm:$0xff]
      %v344 = vld [vmem:[#allocation3 + $0x68] sm:$0xff]
      %v345 = vld [vmem:[#allocation3 + $0x70] sm:$0xff]
      %v346 = vld [vmem:[#allocation3 + $0x78] sm:$0xff]
      %v347 = vld [vmem:[#allocation3 + $0x80] sm:$0xff]
      %v348 = vld [vmem:[#allocation3 + $0x88] sm:$0xff]
      %v349 = vld [vmem:[#allocation3 + $0x90] sm:$0xff]
      %v350 = vld [vmem:[#allocation3 + $0x98] sm:$0xff]
      %v351 = vld [vmem:[#allocation3 + $0xa0] sm:$0xff]
      %v352 = vld [vmem:[#allocation3 + $0xa8] sm:$0xff]
      %v353 = vld [vmem:[#allocation3 + $0xb0] sm:$0xff]
      %v354 = vld [vmem:[#allocation3 + $0xb8] sm:$0xff]
      %v355 = vld [vmem:[#allocation3 + $0xc0] sm:$0xff]
      %v356 = vld [vmem:[#allocation3 + $0xc8] sm:$0xff]
      %v357 = vld [vmem:[#allocation3 + $0xd0] sm:$0xff]
      %v358 = vld [vmem:[#allocation3 + $0xd8] sm:$0xff]
      %v359 = vld [vmem:[#allocation3 + $0xe0] sm:$0xff]
      %v360 = vld [vmem:[#allocation3 + $0xe8] sm:$0xff]
      %v361 = vld [vmem:[#allocation3 + $0xf0] sm:$0xff]
      %v362 = vld [vmem:[#allocation3 + $0xf8] sm:$0xff]
      %v364 = vcombine.high %v330, %v330
      %366 = vmatprep.subr.mxu0 %v332
      %367 = vmatpush1.xpose.msra.mxu0 %v331
      %368 = vmatprep.subr.mxu0 %v334
      %369 = vmatpush1.xpose.msra.mxu0 %v333
      %370 = vmatprep.subr.mxu0 %v336
      %371 = vmatpush1.xpose.msra.mxu0 %v335
      %372 = vmatprep.subr.mxu0 %v338
      %373 = vmatpush1.xpose.msra.mxu0 %v337
      %374 = vmatprep.subr.mxu0 %v340
      %375 = vmatpush1.xpose.msra.mxu0 %v339
      %376 = vmatprep.subr.mxu0 %v342
      %377 = vmatpush1.xpose.msra.mxu0 %v341
      %378 = vmatprep.subr.mxu0 %v344
      %379 = vmatpush1.xpose.msra.mxu0 %v343
      %380 = vmatprep.subr.mxu0 %v346
      %381 = vmatpush1.xpose.msra.mxu0 %v345
      %382 = vmatprep.subr.mxu0 %v348
      %383 = vmatpush1.xpose.msra.mxu0 %v347
      %384 = vmatprep.subr.mxu0 %v350
      %385 = vmatpush1.xpose.msra.mxu0 %v349
      %386 = vmatprep.subr.mxu0 %v352
      %387 = vmatpush1.xpose.msra.mxu0 %v351
      %388 = vmatprep.subr.mxu0 %v354
      %389 = vmatpush1.xpose.msra.mxu0 %v353
      %390 = vmatprep.subr.mxu0 %v356
      %391 = vmatpush1.xpose.msra.mxu0 %v355
      %392 = vmatprep.subr.mxu0 %v358
      %393 = vmatpush1.xpose.msra.mxu0 %v357
      %394 = vmatprep.subr.mxu0 %v360
      %395 = vmatpush1.xpose.msra.mxu0 %v359
      %396 = vmatprep.subr.mxu0 %v362
      %397 = vmatpush1.xpose.msra.mxu0 %v361
      %398 = vmatprep.subr.mxu0 0.0
      %399 = vmatpush1.xpose.msra.mxu0 0.0
      %400 = vmatprep.subr.mxu0 0.0
      %401 = vmatpush1.xpose.msra.mxu0 0.0
      %402 = vmatprep.subr.mxu0 0.0
      %403 = vmatpush1.xpose.msra.mxu0 0.0
      %404 = vmatprep.subr.mxu0 0.0
      %405 = vmatpush1.xpose.msra.mxu0 0.0
      %406 = vmatprep.subr.mxu0 0.0
      %407 = vmatpush1.xpose.msra.mxu0 0.0
      %408 = vmatprep.subr.mxu0 0.0
      %409 = vmatpush1.xpose.msra.mxu0 0.0
      %410 = vmatprep.subr.mxu0 0.0
      %411 = vmatpush1.xpose.msra.mxu0 0.0
      %412 = vmatprep.subr.mxu0 0.0
      %413 = vmatpush1.xpose.msra.mxu0 0.0
      %414 = vmatprep.subr.mxu0 0.0
      %415 = vmatpush1.xpose.msra.mxu0 0.0
      %416 = vmatprep.subr.mxu0 0.0
      %417 = vmatpush1.xpose.msra.mxu0 0.0
      %418 = vmatprep.subr.mxu0 0.0
      %419 = vmatpush1.xpose.msra.mxu0 0.0
      %420 = vmatprep.subr.mxu0 0.0
      %421 = vmatpush1.xpose.msra.mxu0 0.0
      %422 = vmatprep.subr.mxu0 0.0
      %423 = vmatpush1.xpose.msra.mxu0 0.0
      %424 = vmatprep.subr.mxu0 0.0
      %425 = vmatpush1.xpose.msra.mxu0 0.0
      %426 = vmatprep.subr.mxu0 0.0
      %427 = vmatpush1.xpose.msra.mxu0 0.0
      %428 = vmatprep.subr.mxu0 0.0
      %429 = vmatpush1.xpose.msra.mxu0 0.0
      %430 = vmatprep.mubr.f32.mxu0 %v364
      %431 = vmatmul.mubr.f32.gmra.mrb[0].mxu0 %v330
      %v432 = vpop.f32.mrb[0].mxu0
      %v433 = vadd.f32 0.0, %v432
      %v434 = vpop.f32.mrb[0].mxu0
      %435 = vdwg.mxu0
      %436 = vst [vmem:[%s114] sm:$0xf] %v433
      %p437 = scmp.lt.s32.totalorder %s12, 1
      %s438 = scalar_select %p437, %s12, 1
      %s439 = smul.addr %s438, 4
      %s440 = scalar_lea.vmem %s1, %s439
      // Predicated region
      $region32: #{loss_forward.3} parent=23 // pred_check
        %p441 = pneg %p56
      $region33: #{loss_forward.3} parent=23 // pred_check_branch
        %443 = sbr.rel (%p441) target = $region35
      $region34: #{loss_forward.3} parent=23 // pred_region
        _
      $region35: #{loss_forward.3} parent=23 // pred_fallthru
        _
    $region24: #{loss_forward.3} parent=5 // pred_fallthru
      _
    %p444 = scmp.le.s32.totalorder 2, %s7
    // Predicated region
    $region36: #{loss_forward.3} parent=5 // pred_check
      %p445 = pneg %p444
    $region37: #{loss_forward.3} parent=5 // pred_check_branch
      %447 = sbr.rel (%p445) target = $region39
    $region38: #{loss_forward.3} parent=5 // pred_region
      %s448 = ssub.s32 %s7, 2
      // Predicated region
      $region40: #{loss_forward.3} parent=38 // pred_check
        %p449 = pneg %p62
      $region41: #{loss_forward.3} parent=38 // pred_check_branch
        %451 = sbr.rel (%p449) target = $region43
      $region42: #{loss_forward.3} parent=38 // pred_region
        %p452 = scmp.lt.s32.totalorder %s13, 1
        %s453 = scalar_select %p452, %s13, 1
        %s454 = smul.addr %s453, 4
        %s455 = scalar_lea.vmem %s1, %s454
      $region43: #{loss_forward.3} parent=38 // pred_fallthru
        _
    $region39: #{loss_forward.3} parent=5 // pred_fallthru
      _
  $region6: #{loss_forward.3} parent=0 // loop_footer
    %s11 = sadd.s32 1, %s7
  $region7: #{loss_forward.3} parent=0 // loop_footer_branch
    %6 = sbr.rel target = $region3
  $region8: #{loss_forward.3} parent=0 // loop_exit
    _

// kernel: loss_forward.4
$region0: #{loss_forward.4}
  #allocation0 [shape = 'u32[]', space=smem, size = 0x4, offset = 0x4, fixed_abs, tag = 'smem constant byte address 0x4 - core index']
  #allocation1 [shape = 'u32[144,128]{1,0:T(1,128)}', space=vmem, size = 0x12000, scoped, tag = 'internal scratch']
  #allocation2 [shape = 'f32[8,128]{1,0:T(8,128)}', space=vmem, size = 0x1000, scoped, tag = 'scratch operand']
  #allocation3 [shape = 'f32[8,128]{1,0:T(8,128)}', space=vmem, size = 0x1000, scoped, tag = 'scratch operand']
  #allocation4 [shape = 'f32[1,128]{1,0:T(1,128)}', space=vmem, size = 0x200, scoped, tag = 'scratch operand']
  #allocation5 [shape = 'f32[1,128]{1,0:T(1,128)}', space=vmem, size = 0x200, scoped, tag = 'scratch operand']
  #allocation6 [shape = 'f32[1,1]{1,0:T(1,128)}', space=vmem, size = 0x200, scoped, tag = 'scratch operand']
  %s0 = inlined_call_operand.vmem [shape: f32[2,7,128], index: 0, kind: input, shape index: {}]
  %s1 = inlined_call_operand.vmem [shape: f32[2,4,128], index: 1, kind: input, shape index: {}]
  %s2 = inlined_call_operand.vmem [shape: f32[2,128,1], index: 2, kind: input, shape index: {}]
  %s3 = inlined_call_operand.vmem [shape: f32[1,4,1], index: 3, kind: input, shape index: {}]
  %s4 = inlined_call_operand.vmem [shape: f32[2,1,1], index: 4, kind: output, shape index: {0}]
  %s5 = inlined_call_operand.vmem [shape: f32[2,1,1], index: 5, kind: output, shape index: {1}]
  %s6 = inlined_call_operand.vmem [shape: f32[2,1,1], index: 6, kind: output, shape index: {2}]
  %s7 = inlined_call_operand.hbm [shape: f32[2,1,128], index: 7, kind: output, shape index: {3}]
  %8 = xla_tuple %s4, %s5, %s6, %s7
  %s9 = sld [smem:[#allocation0]]
  $region81: #{loss_forward.4} parent=0
    _
  %s11 = ssub.s32 1, %s9
  %s12 = scalar_select 0, %s11, %s9
  $region1: #{loss_forward.4} parent=0
    #allocation7 [shape = 'u8[1024]{0}', space=vmem, size = 0x400, scoped, tag = 'output window, operand 3']
    #allocation8 [shape = 's32[2]{0}', space=sflag, size = 0x8, scoped, tag = 'scoped memory for loss_forward.4']
    %13 = vsyncpa [#allocation8], 0
    %s14 = scalar_lea.sflag [#allocation8], 1
    %15 = vsyncpa %s14, 0
    loop: start=0, step=1, limit=4
    $region2: #{loss_forward.4} parent=1 // loop_pre_header
      _
    $region3: #{loss_forward.4} parent=1 // loop_header
      %s17 = sphi 0, %s21
      %p18 = scmp.ge.s32.totalorder %s17, 4
      %s24 = sphi 0, %s36
      %s25 = sphi 0, %s32
      %s26 = sphi 0, %s24
      %s27 = sphi 0, %s25
      %s28 = sphi 0, %s26
      %s29 = sphi 0, %s27
      %s39 = sphi 0, %s41
      %s42 = sphi 0, %s39
      %s43 = sphi 0, %s42
      %s59 = sphi 0, %s43
      %s67 = sphi 0, %s69
      %s70 = sphi 0, %s67
      %s71 = sphi 0, %s70
      %s87 = sphi 0, %s71
      %s95 = sphi 0, %s97
      %s98 = sphi 0, %s95
      %s99 = sphi 0, %s98
      %s115 = sphi 0, %s99
      %s119 = sphi 0, %s119
      %s121 = sphi 0, %s119
      %s122 = sphi 0, %s121
      %s136 = sphi 0, %s122
      %s142 = sphi 0, %s144
      %s145 = sphi 0, %s142
      %s146 = sphi 0, %s145
      %s162 = sphi 0, %s146
      %s168 = sphi 0, %s170
      %s171 = sphi 0, %s168
      %s172 = sphi 0, %s171
      %s188 = sphi 0, %s172
      %s194 = sphi 0, %s196
      %s197 = sphi 0, %s194
      %s198 = sphi 0, %s197
      %s214 = sphi 0, %s198
      %s220 = sphi 0, %s222
      %s223 = sphi 0, %s220
      %s224 = sphi 0, %s223
      %s240 = sphi 0, %s224
    $region4: #{loss_forward.4} parent=1 // loop_header_branch
      %20 = sbr.rel (%p18) target = $region8
    $region5: #{loss_forward.4} parent=1 // loop_body
      %s22 = ssub.s32 %s17, 1
      %s23 = ssub.s32 %s17, 2
      %s30 = sadd.s32 1, %s25
      %p31 = scmp.ge.s32.totalorder %s30, 1
      %s32 = scalar_select %p31, 0, %s30
      %s33 = sadd.s32 1, %s24
      %s34 = scalar_select %p31, %s33, %s24
      %p35 = scmp.ge.s32.totalorder %s34, 2
      %s36 = scalar_select %p35, 0, %s34
      %s37 = ssub.s32 %s24, %s36
      %p38 = scmp.eq.s32.totalorder %s37, 0
      %s40 = sadd.s32 %s39, 1
      %s41 = scalar_select %p38, %s39, %s40
      %p44 = pneg %p38
      %p45 = scmp.eq.s32.totalorder %s17, 1
      %p46 = por %p44, %p45
      %p47 = scmp.ne.s32.totalorder %s39, %s42
      %p48 = scmp.eq.s32.totalorder %s17, 0
      %p49 = por %p47, %p48
      %p50 = scmp.ne.s32.totalorder %s39, %s42
      %p51 = scmp.eq.s32.totalorder %s22, 1
      %p52 = por %p50, %p51
      %p53 = scmp.ne.s32.totalorder %s42, %s43
      %p54 = scmp.eq.s32.totalorder %s22, 0
      %p55 = por %p53, %p54
      %p56 = scmp.ne.s32.totalorder %s42, %s43
      %p57 = scmp.eq.s32.totalorder %s23, 1
      %p58 = por %p56, %p57
      %p60 = scmp.ne.s32.totalorder %s43, %s59
      %p61 = scmp.eq.s32.totalorder %s23, 0
      %p62 = por %p60, %p61
      %s63 = ssub.s32 %s24, %s36
      %s64 = ssub.s32 %s25, %s32
      %s65 = sor.u32 %s63, %s64
      %p66 = scmp.eq.s32.totalorder %s65, 0
      %s68 = sadd.s32 %s67, 1
      %s69 = scalar_select %p66, %s67, %s68
      %p72 = pneg %p66
      %p73 = scmp.eq.s32.totalorder %s17, 1
      %p74 = por %p72, %p73
      %p75 = scmp.ne.s32.totalorder %s67, %s70
      %p76 = scmp.eq.s32.totalorder %s17, 0
      %p77 = por %p75, %p76
      %p78 = scmp.ne.s32.totalorder %s67, %s70
      %p79 = scmp.eq.s32.totalorder %s22, 1
      %p80 = por %p78, %p79
      %p81 = scmp.ne.s32.totalorder %s70, %s71
      %p82 = scmp.eq.s32.totalorder %s22, 0
      %p83 = por %p81, %p82
      %p84 = scmp.ne.s32.totalorder %s70, %s71
      %p85 = scmp.eq.s32.totalorder %s23, 1
      %p86 = por %p84, %p85
      %p88 = scmp.ne.s32.totalorder %s71, %s87
      %p89 = scmp.eq.s32.totalorder %s23, 0
      %p90 = por %p88, %p89
      %s91 = ssub.s32 %s24, %s36
      %s92 = ssub.s32 %s25, %s32
      %s93 = sor.u32 %s91, %s92
      %p94 = scmp.eq.s32.totalorder %s93, 0
      %s96 = sadd.s32 %s95, 1
      %s97 = scalar_select %p94, %s95, %s96
      %p100 = pneg %p94
      %p101 = scmp.eq.s32.totalorder %s17, 1
      %p102 = por %p100, %p101
      %p103 = scmp.ne.s32.totalorder %s95, %s98
      %p104 = scmp.eq.s32.totalorder %s17, 0
      %p105 = por %p103, %p104
      %p106 = scmp.ne.s32.totalorder %s95, %s98
      %p107 = scmp.eq.s32.totalorder %s22, 1
      %p108 = por %p106, %p107
      %p109 = scmp.ne.s32.totalorder %s98, %s99
      %p110 = scmp.eq.s32.totalorder %s22, 0
      %p111 = por %p109, %p110
      %p112 = scmp.ne.s32.totalorder %s98, %s99
      %p113 = scmp.eq.s32.totalorder %s23, 1
      %p114 = por %p112, %p113
      %p116 = scmp.ne.s32.totalorder %s99, %s115
      %p117 = scmp.eq.s32.totalorder %s23, 0
      %p118 = por %p116, %p117
      %s120 = sadd.s32 %s119, 1
      %p123 = scmp.eq.s32.totalorder %s17, 1
      %p124 = scmp.ne.s32.totalorder %s119, %s121
      %p125 = scmp.eq.s32.totalorder %s17, 0
      %p126 = por %p124, %p125
      %p127 = scmp.ne.s32.totalorder %s119, %s121
      %p128 = scmp.eq.s32.totalorder %s22, 1
      %p129 = por %p127, %p128
      %p130 = scmp.ne.s32.totalorder %s121, %s122
      %p131 = scmp.eq.s32.totalorder %s22, 0
      %p132 = por %p130, %p131
      %p133 = scmp.ne.s32.totalorder %s121, %s122
      %p134 = scmp.eq.s32.totalorder %s23, 1
      %p135 = por %p133, %p134
      %p137 = scmp.ne.s32.totalorder %s122, %s136
      %p138 = scmp.eq.s32.totalorder %s23, 0
      %p139 = por %p137, %p138
      %s140 = ssub.s32 %s24, %s36
      %p141 = scmp.eq.s32.totalorder %s140, 0
      %s143 = sadd.s32 %s142, 1
      %s144 = scalar_select %p141, %s142, %s143
      %p147 = pneg %p141
      %p148 = scmp.eq.s32.totalorder %s17, 1
      %p149 = por %p147, %p148
      %p150 = scmp.ne.s32.totalorder %s142, %s145
      %p151 = scmp.eq.s32.totalorder %s17, 0
      %p152 = por %p150, %p151
      %p153 = scmp.ne.s32.totalorder %s142, %s145
      %p154 = scmp.eq.s32.totalorder %s22, 1
      %p155 = por %p153, %p154
      %p156 = scmp.ne.s32.totalorder %s145, %s146
      %p157 = scmp.eq.s32.totalorder %s22, 0
      %p158 = por %p156, %p157
      %p159 = scmp.ne.s32.totalorder %s145, %s146
      %p160 = scmp.eq.s32.totalorder %s23, 1
      %p161 = por %p159, %p160
      %p163 = scmp.ne.s32.totalorder %s146, %s162
      %p164 = scmp.eq.s32.totalorder %s23, 0
      %p165 = por %p163, %p164
      %s166 = ssub.s32 %s24, %s36
      %p167 = scmp.eq.s32.totalorder %s166, 0
      %s169 = sadd.s32 %s168, 1
      %s170 = scalar_select %p167, %s168, %s169
      %p173 = pneg %p167
      %p174 = scmp.eq.s32.totalorder %s17, 1
      %p175 = por %p173, %p174
      %p176 = scmp.ne.s32.totalorder %s168, %s171
      %p177 = scmp.eq.s32.totalorder %s17, 0
      %p178 = por %p176, %p177
      %p179 = scmp.ne.s32.totalorder %s168, %s171
      %p180 = scmp.eq.s32.totalorder %s22, 1
      %p181 = por %p179, %p180
      %p182 = scmp.ne.s32.totalorder %s171, %s172
      %p183 = scmp.eq.s32.totalorder %s22, 0
      %p184 = por %p182, %p183
      %p185 = scmp.ne.s32.totalorder %s171, %s172
      %p186 = scmp.eq.s32.totalorder %s23, 1
      %p187 = por %p185, %p186
      %p189 = scmp.ne.s32.totalorder %s172, %s188
      %p190 = scmp.eq.s32.totalorder %s23, 0
      %p191 = por %p189, %p190
      %s192 = ssub.s32 %s24, %s36
      %p193 = scmp.eq.s32.totalorder %s192, 0
      %s195 = sadd.s32 %s194, 1
      %s196 = scalar_select %p193, %s194, %s195
      %p199 = pneg %p193
      %p200 = scmp.eq.s32.totalorder %s17, 1
      %p201 = por %p199, %p200
      %p202 = scmp.ne.s32.totalorder %s194, %s197
      %p203 = scmp.eq.s32.totalorder %s17, 0
      %p204 = por %p202, %p203
      %p205 = scmp.ne.s32.totalorder %s194, %s197
      %p206 = scmp.eq.s32.totalorder %s22, 1
      %p207 = por %p205, %p206
      %p208 = scmp.ne.s32.totalorder %s197, %s198
      %p209 = scmp.eq.s32.totalorder %s22, 0
      %p210 = por %p208, %p209
      %p211 = scmp.ne.s32.totalorder %s197, %s198
      %p212 = scmp.eq.s32.totalorder %s23, 1
      %p213 = por %p211, %p212
      %p215 = scmp.ne.s32.totalorder %s198, %s214
      %p216 = scmp.eq.s32.totalorder %s23, 0
      %p217 = por %p215, %p216
      %s218 = ssub.s32 %s24, %s36
      %p219 = scmp.eq.s32.totalorder %s218, 0
      %s221 = sadd.s32 %s220, 1
      %s222 = scalar_select %p219, %s220, %s221
      %p225 = pneg %p219
      %p226 = scmp.eq.s32.totalorder %s17, 1
      %p227 = por %p225, %p226
      %p228 = scmp.ne.s32.totalorder %s220, %s223
      %p229 = scmp.eq.s32.totalorder %s17, 0
      %p230 = por %p228, %p229
      %p231 = scmp.ne.s32.totalorder %s220, %s223
      %p232 = scmp.eq.s32.totalorder %s22, 1
      %p233 = por %p231, %p232
      %p234 = scmp.ne.s32.totalorder %s223, %s224
      %p235 = scmp.eq.s32.totalorder %s22, 0
      %p236 = por %p234, %p235
      %p237 = scmp.ne.s32.totalorder %s223, %s224
      %p238 = scmp.eq.s32.totalorder %s23, 1
      %p239 = por %p237, %p238
      %p241 = scmp.ne.s32.totalorder %s224, %s240
      %p242 = scmp.eq.s32.totalorder %s23, 0
      %p243 = por %p241, %p242
      %p244 = scmp.le.s32.totalorder 1, %s17
      %p245 = scmp.lt.s32.totalorder %s17, 3
      %p246 = pnand %p244, %p245
      %p247 = pneg %p246
      // Predicated region
      $region9: #{loss_forward.4} parent=5 // pred_check
        _
      $region10: #{loss_forward.4} parent=5 // pred_check_branch
        %249 = sbr.rel (%p246) target = $region12
      $region11: #{loss_forward.4} parent=5 // pred_region
        %s250 = ssub.s32 %s17, 1
        // Predicated region
        $region13: #{loss_forward.4} parent=11 // pred_check
          %p251 = pneg %p132
        $region14: #{loss_forward.4} parent=11 // pred_check_branch
          %253 = sbr.rel (%p251) target = $region16
        $region15: #{loss_forward.4} parent=11 // pred_region
          _
        $region16: #{loss_forward.4} parent=11 // pred_fallthru
          _
      $region12: #{loss_forward.4} parent=5 // pred_fallthru
        _
      %p254 = scmp.lt.s32.totalorder %s17, 2
      // Predicated region
      $region17: #{loss_forward.4} parent=5 // pred_check
        %p255 = pneg %p254
      $region18: #{loss_forward.4} parent=5 // pred_check_branch
        %257 = sbr.rel (%p255) target = $region20
      $region19: #{loss_forward.4} parent=5 // pred_region
        // Predicated region
        $region21: #{loss_forward.4} parent=19 // pred_check
          %p258 = pneg %p49
        $region22: #{loss_forward.4} parent=19 // pred_check_branch
          %260 = sbr.rel (%p258) target = $region24
        $region23: #{loss_forward.4} parent=19 // pred_region
          %p261 = scmp.lt.s32.totalorder %s24, 1
          %s262 = scalar_select %p261, %s24, 1
          %s263 = smul.addr %s262, 8
          %s264 = scalar_lea.vmem %s0, %s263
        $region24: #{loss_forward.4} parent=19 // pred_fallthru
          _
        // Predicated region
        $region25: #{loss_forward.4} parent=19 // pred_check
          %p265 = pneg %p77
        $region26: #{loss_forward.4} parent=19 // pred_check_branch
          %267 = sbr.rel (%p265) target = $region28
        $region27: #{loss_forward.4} parent=19 // pred_region
          %p268 = scmp.lt.s32.totalorder %s24, 1
          %s269 = scalar_select %p268, %s24, 1
          %p270 = scmp.lt.s32.totalorder %s25, 0
          %s271 = scalar_select %p270, %s25, 0
          %s272 = sadd.s32 %s271, %s269
          %s273 = smul.addr %s272, 4
          %s274 = scalar_lea.vmem %s1, %s273
        $region28: #{loss_forward.4} parent=19 // pred_fallthru
          _
        // Predicated region
        $region29: #{loss_forward.4} parent=19 // pred_check
          %p275 = pneg %p105
        $region30: #{loss_forward.4} parent=19 // pred_check_branch
          %277 = sbr.rel (%p275) target = $region32
        $region31: #{loss_forward.4} parent=19 // pred_region
          %s278 = smul.u32 16, %s25
          %p279 = scmp.lt.s32.totalorder %s24, 1
          %s280 = scalar_select %p279, %s24, 1
          %p281 = scmp.lt.s32.totalorder %s278, 15
          %s282 = scalar_select %p281, %s278, 15
          %s283 = smul.addr %s280, 16
          %s284 = sadd.s32 %s282, %s283
          %s285 = smul.addr %s284, 8
          %s286 = scalar_lea.vmem %s2, %s285
          %s287 = smul.u32 16, %s25
        $region32: #{loss_forward.4} parent=19 // pred_fallthru
          _
      $region20: #{loss_forward.4} parent=5 // pred_fallthru
        _
      %p288 = scmp.le.s32.totalorder 1, %s17
      %p289 = scmp.lt.s32.totalorder %s17, 3
      %p290 = pnand %p288, %p289
      %p291 = pneg %p290
      // Predicated region
      $region33: #{loss_forward.4} parent=5 // pred_check
        _
      $region34: #{loss_forward.4} parent=5 // pred_check_branch
        %293 = sbr.rel (%p290) target = $region36
      $region35: #{loss_forward.4} parent=5 // pred_region
        %s294 = ssub.s32 %s17, 1
        %p295 = scmp.lt.s32.totalorder %s26, 1
        %s296 = scalar_select %p295, %s26, 1
        %s297 = smul.addr %s296, 8
        %s298 = scalar_lea.vmem %s0, %s297
        %p299 = pneg %p55
        %p300 = pneg %p52
        %p301 = scmp.lt.s32.totalorder %s26, 1
        %s302 = scalar_select %p301, %s26, 1
        %p303 = scmp.lt.s32.totalorder %s27, 0
        %s304 = scalar_select %p303, %s27, 0
        %s305 = sadd.s32 %s304, %s302
        %s306 = smul.addr %s305, 4
        %s307 = scalar_lea.vmem %s1, %s306
        %p308 = pneg %p83
        %p309 = pneg %p80
        %s310 = smul.u32 16, %s27
        %p311 = scmp.lt.s32.totalorder %s26, 1
        %s312 = scalar_select %p311, %s26, 1
        %p313 = scmp.lt.s32.totalorder %s310, 15
        %s314 = scalar_select %p313, %s310, 15
        %s315 = smul.addr %s312, 16
        %s316 = sadd.s32 %s314, %s315
        %s317 = smul.addr %s316, 8
        %s318 = scalar_lea.vmem %s2, %s317
        %p319 = pneg %p111
        %p320 = pneg %p108
        %p321 = pneg %p132
        %p322 = pneg %p129
        %p323 = pneg %p158
        %p324 = pneg %p155
        %p325 = scmp.lt.s32.totalorder %s26, 1
        %s326 = scalar_select %p325, %s26, 1
        %s327 = scalar_lea.vmem %s4, %s326
        %p328 = pneg %p184
        %p329 = pneg %p181
        %p330 = scmp.lt.s32.totalorder %s26, 1
        %s331 = scalar_select %p330, %s26, 1
        %s332 = scalar_lea.vmem %s5, %s331
        %p333 = pneg %p210
        %p334 = pneg %p207
        %p335 = scmp.lt.s32.totalorder %s26, 1
        %s336 = scalar_select %p335, %s26, 1
        %s337 = scalar_lea.vmem %s6, %s336
        %p338 = pneg %p236
        %p339 = pneg %p233
        %s340 = sand.u32 %s223, 1
        %s341 = scalar_lea.sflag [#allocation8], %s340
        %s342 = sand.u32 %s223, 1
        %s343 = scalar_lea.vmem [#allocation7], %s342
        %p344 = scmp.lt.s32.totalorder %s26, 1
        %s345 = scalar_select %p344, %s26, 1
        %s346 = smul.addr %s345, 8
        %s347 = scalar_lea.vmem %s0, %s346
        %p348 = scmp.lt.s32.totalorder %s26, 1
        %s349 = scalar_select %p348, %s26, 1
        %p350 = scmp.lt.s32.totalorder %s27, 0
        %s351 = scalar_select %p350, %s27, 0
        %s352 = sadd.s32 %s351, %s349
        %s353 = smul.addr %s352, 4
        %s354 = scalar_lea.vmem %s1, %s353
        %s355 = smul.u32 16, %s27
        %p356 = scmp.lt.s32.totalorder %s26, 1
        %s357 = scalar_select %p356, %s26, 1
        %p358 = scmp.lt.s32.totalorder %s355, 15
        %s359 = scalar_select %p358, %s355, 15
        %s360 = smul.addr %s357, 16
        %s361 = sadd.s32 %s359, %s360
        %s362 = smul.addr %s361, 8
        %s363 = scalar_lea.vmem %s2, %s362
        %s364 = smul.u32 16, %s27
        %p365 = scmp.lt.s32.totalorder %s26, 1
        %s366 = scalar_select %p365, %s26, 1
        %s367 = scalar_lea.vmem %s4, %s366
        %p368 = scmp.lt.s32.totalorder %s26, 1
        %s369 = scalar_select %p368, %s26, 1
        %s370 = scalar_lea.vmem %s5, %s369
        %p371 = scmp.lt.s32.totalorder %s26, 1
        %s372 = scalar_select %p371, %s26, 1
        %s373 = scalar_lea.vmem %s6, %s372
        %p374 = scmp.eq.s32.totalorder %s27, 0
        // Predicated region
        $region37: #{loss_forward.4} parent=35 // pred_check
          %p375 = pneg %p374
        $region38: #{loss_forward.4} parent=35 // pred_check_branch
          %377 = sbr.rel (%p375) target = $region40
        $region39: #{loss_forward.4} parent=35 // pred_region
          %378 = vst [vmem:[#allocation4] sm:$0x1] 3e+38
          %379 = vst [vmem:[#allocation5] sm:$0x1] 0.0
          %vm380 = vcmask 0
          %381 = vst.msk [vmem:[#allocation6] sm:$0x1] %vm380, 0.0
          %v382 = vld [vmem:[%s347] sm:$0x7]
          %v383 = vmul.f32 %v382, %v382
          %vm384 = vcmask 1042432
          %v385 = vsel %vm384, %v383, 0.0
          %v386 = vrot.slane %v385, 4
          %v387 = vadd.f32 %v385, %v386
          %v388 = vrot.slane %v387, 2
          %v389 = vadd.f32 %v387, %v388
          %v390 = vrot.slane %v389, 1
          %v391 = vadd.f32 %v389, %v390
          %392 = vst [vmem:[#allocation2] sm:$0x7] %v382
          %393 = vst [vmem:[#allocation2 + $0x3] sm:$0x1] %v391
          %394 = vst [vmem:[#allocation2 + $0x4] sm:$0x1] 1.0
          %395 = vst [vmem:[#allocation2 + $0x5] sm:$0x7] 0.0
          %396 = vst [vmem:[#allocation3 + $0x3] sm:$0x1] 1.0
          %397 = vst [vmem:[#allocation3 + $0x5] sm:$0x7] 0.0
        $region40: #{loss_forward.4} parent=35 // pred_fallthru
          _
        %v398 = vld [vmem:[%s354] sm:$0x7]
        %v399 = vmul.f32 %v398, -2.0
        %400 = vst [vmem:[#allocation3] sm:$0x7] %v399
        %v401 = vmul.f32 %v398, %v398
        %vm402 = vcmask 1042432
        %v403 = vsel %vm402, %v401, 0.0
        %v404 = vrot.slane %v403, 4
        %v405 = vadd.f32 %v403, %v404
        %v406 = vrot.slane %v405, 2
        %v407 = vadd.f32 %v405, %v406
        %v408 = vrot.slane %v407, 1
        %v409 = vadd.f32 %v407, %v408
        %410 = vst [vmem:[#allocation3 + $0x4] sm:$0x1] %v409
        %v411 = vld [vmem:[#allocation3] sm:$0xff]
        %v412 = vld [vmem:[#allocation2] sm:$0xff]
        %413 = vxpose.xlu0.b32.start [1/16] %v411, 128
        %414 = vxpose.xlu0.b32.cont [2/16] 0.0, 128
        %415 = vxpose.xlu0.b32.cont [3/16] 0.0, 128
        %416 = vxpose.xlu0.b32.cont [4/16] 0.0, 128
        %417 = vxpose.xlu0.b32.cont [5/16] 0.0, 128
        %418 = vxpose.xlu0.b32.cont [6/16] 0.0, 128
        %419 = vxpose.xlu0.b32.cont [7/16] 0.0, 128
        %420 = vxpose.xlu0.b32.cont [8/16] 0.0, 128
        %421 = vxpose.xlu0.b32.cont [9/16] 0.0, 128
        %422 = vxpose.xlu0.b32.cont [10/16] 0.0, 128
        %423 = vxpose.xlu0.b32.cont [11/16] 0.0, 128
        %424 = vxpose.xlu0.b32.cont [12/16] 0.0, 128
        %425 = vxpose.xlu0.b32.cont [13/16] 0.0, 128
        %426 = vxpose.xlu0.b32.cont [14/16] 0.0, 128
        %427 = vxpose.xlu0.b32.cont [15/16] 0.0, 128
        %428 = vxpose.xlu0.b32.end [16/16] 0.0, 128
        %v429 = vpop.trf.xlu0
        %v430 = vpop.trf.xlu0
        %v431 = vpop.trf.xlu0
        %v432 = vpop.trf.xlu0
        %v433 = vpop.trf.xlu0
        %v434 = vpop.trf.xlu0
        %v435 = vpop.trf.xlu0
        %v436 = vpop.trf.xlu0
        %v437 = vpop.trf.xlu0
        %v438 = vpop.trf.xlu0
        %v439 = vpop.trf.xlu0
        %v440 = vpop.trf.xlu0
        %v441 = vpop.trf.xlu0
        %v442 = vpop.trf.xlu0
        %v443 = vpop.trf.xlu0
        %v444 = vpop.trf.xlu0
        %vm445 = vcmask 64512
        %v447 = vsel %vm445, %v429, 0
        %v450 = vsel %vm445, %v430, 0
        %v453 = vsel %vm445, %v431, 0
        %v456 = vsel %vm445, %v432, 0
        %v459 = vsel %vm445, %v433, 0
        %v462 = vsel %vm445, %v434, 0
        %v465 = vsel %vm445, %v435, 0
        %v468 = vsel %vm445, %v436, 0
        %v471 = vsel %vm445, %v437, 0
        %v474 = vsel %vm445, %v438, 0
        %v477 = vsel %vm445, %v439, 0
        %v480 = vsel %vm445, %v440, 0
        %v483 = vsel %vm445, %v441, 0
        %v486 = vsel %vm445, %v442, 0
        %v489 = vsel %vm445, %v443, 0
        %v492 = vsel %vm445, %v444, 0
        %494 = vmatprep.subr.mxu0 0.0
        %495 = vmatpush1.msra.mxu0 %v412
        %496 = vmatprep.subr.mxu0 0.0
        %497 = vmatpush1.msra.mxu0 0.0
        %498 = vmatprep.subr.mxu0 0.0
        %499 = vmatpush1.msra.mxu0 0.0
        %500 = vmatprep.subr.mxu0 0.0
        %501 = vmatpush1.msra.mxu0 0.0
        %502 = vmatprep.subr.mxu0 0.0
        %503 = vmatpush1.msra.mxu0 0.0
        %504 = vmatprep.subr.mxu0 0.0
        %505 = vmatpush1.msra.mxu0 0.0
        %506 = vmatprep.subr.mxu0 0.0
        %507 = vmatpush1.msra.mxu0 0.0
        %508 = vmatprep.subr.mxu0 0.0
        %509 = vmatpush1.msra.mxu0 0.0
        %510 = vmatprep.subr.mxu0 0.0
        %511 = vmatpush1.msra.mxu0 0.0
        %512 = vmatprep.subr.mxu0 0.0
        %513 = vmatpush1.msra.mxu0 0.0
        %514 = vmatprep.subr.mxu0 0.0
        %515 = vmatpush1.msra.mxu0 0.0
        %516 = vmatprep.subr.mxu0 0.0
        %517 = vmatpush1.msra.mxu0 0.0
        %518 = vmatprep.subr.mxu0 0.0
        %519 = vmatpush1.msra.mxu0 0.0
        %520 = vmatprep.subr.mxu0 0.0
        %521 = vmatpush1.msra.mxu0 0.0
        %522 = vmatprep.subr.mxu0 0.0
        %523 = vmatpush1.msra.mxu0 0.0
        %524 = vmatprep.subr.mxu0 0.0
        %525 = vmatpush1.msra.mxu0 0.0
        %526 = vmatprep.subr.mxu0 0.0
        %527 = vmatpush1.msra.mxu0 0.0
        %528 = vmatprep.subr.mxu0 0.0
        %529 = vmatpush1.msra.mxu0 0.0
        %530 = vmatprep.subr.mxu0 0.0
        %531 = vmatpush1.msra.mxu0 0.0
        %532 = vmatprep.subr.mxu0 0.0
        %533 = vmatpush1.msra.mxu0 0.0
        %534 = vmatprep.subr.mxu0 0.0
        %535 = vmatpush1.msra.mxu0 0.0
        %536 = vmatprep.subr.mxu0 0.0
        %537 = vmatpush1.msra.mxu0 0.0
        %538 = vmatprep.subr.mxu0 0.0
        %539 = vmatpush1.msra.mxu0 0.0
        %540 = vmatprep.subr.mxu0 0.0
        %541 = vmatpush1.msra.mxu0 0.0
        %542 = vmatprep.subr.mxu0 0.0
        %543 = vmatpush1.msra.mxu0 0.0
        %544 = vmatprep.subr.mxu0 0.0
        %545 = vmatpush1.msra.mxu0 0.0
        %546 = vmatprep.subr.mxu0 0.0
        %547 = vmatpush1.msra.mxu0 0.0
        %548 = vmatprep.subr.mxu0 0.0
        %549 = vmatpush1.msra.mxu0 0.0
        %550 = vmatprep.subr.mxu0 0.0
        %551 = vmatpush1.msra.mxu0 0.0
        %552 = vmatprep.subr.mxu0 0.0
        %553 = vmatpush1.msra.mxu0 0.0
        %554 = vmatprep.subr.mxu0 0.0
        %555 = vmatpush1.msra.mxu0 0.0
        %556 = vmatprep.subr.mxu0 0.0
        %557 = vmatpush1.msra.mxu0 0.0
        %558 = vmatprep.mubr.f32.mxu0 0.0
        %559 = vmatmul.mubr.f32.gmra.mrb[0].mxu0 %v447
        %v560 = vpop.f32.mrb[0].mxu0
        %v561 = vadd.f32 0.0, %v560
        %v562 = vpop.f32.mrb[0].mxu0
        %563 = vmatprep.mubr.f32.mxu0 0.0
        %564 = vmatmul.mubr.f32.gmra.mrb[0].mxu0 %v450
        %v565 = vpop.f32.mrb[0].mxu0
        %v566 = vadd.f32 0.0, %v565
        %v567 = vpop.f32.mrb[0].mxu0
        %568 = vmatprep.mubr.f32.mxu0 0.0
        %569 = vmatmul.mubr.f32.gmra.mrb[0].mxu0 %v453
        %v570 = vpop.f32.mrb[0].mxu0
        %v571 = vadd.f32 0.0, %v570
        %v572 = vpop.f32.mrb[0].mxu0
        %573 = vmatprep.mubr.f32.mxu0 0.0
        %574 = vmatmul.mubr.f32.gmra.mrb[0].mxu0 %v456
        %v575 = vpop.f32.mrb[0].mxu0
        %v576 = vadd.f32 0.0, %v575
        %v577 = vpop.f32.mrb[0].mxu0
        %578 = vmatprep.mubr.f32.mxu0 0.0
        %579 = vmatmul.mubr.f32.gmra.mrb[0].mxu0 %v459
        %v580 = vpop.f32.mrb[0].mxu0
        %v581 = vadd.f32 0.0, %v580
        %v582 = vpop.f32.mrb[0].mxu0
        %583 = vmatprep.mubr.f32.mxu0 0.0
        %584 = vmatmul.mubr.f32.gmra.mrb[0].mxu0 %v462
        %v585 = vpop.f32.mrb[0].mxu0
        %v586 = vadd.f32 0.0, %v585
        %v587 = vpop.f32.mrb[0].mxu0
        %588 = vmatprep.mubr.f32.mxu0 0.0
        %589 = vmatmul.mubr.f32.gmra.mrb[0].mxu0 %v465
        %v590 = vpop.f32.mrb[0].mxu0
        %v591 = vadd.f32 0.0, %v590
        %v592 = vpop.f32.mrb[0].mxu0
        %593 = vmatprep.mubr.f32.mxu0 0.0
        %594 = vmatmul.mubr.f32.gmra.mrb[0].mxu0 %v468
        %v595 = vpop.f32.mrb[0].mxu0
        %v596 = vadd.f32 0.0, %v595
        %v597 = vpop.f32.mrb[0].mxu0
        %598 = vmatprep.mubr.f32.mxu0 0.0
        %599 = vmatmul.mubr.f32.gmra.mrb[0].mxu0 %v471
        %v600 = vpop.f32.mrb[0].mxu0
        %v601 = vadd.f32 0.0, %v600
        %v602 = vpop.f32.mrb[0].mxu0
        %603 = vmatprep.mubr.f32.mxu0 0.0
        %604 = vmatmul.mubr.f32.gmra.mrb[0].mxu0 %v474
        %v605 = vpop.f32.mrb[0].mxu0
        %v606 = vadd.f32 0.0, %v605
        %v607 = vpop.f32.mrb[0].mxu0
        %608 = vmatprep.mubr.f32.mxu0 0.0
        %609 = vmatmul.mubr.f32.gmra.mrb[0].mxu0 %v477
        %v610 = vpop.f32.mrb[0].mxu0
        %v611 = vadd.f32 0.0, %v610
        %v612 = vpop.f32.mrb[0].mxu0
        %613 = vmatprep.mubr.f32.mxu0 0.0
        %614 = vmatmul.mubr.f32.gmra.mrb[0].mxu0 %v480
        %v615 = vpop.f32.mrb[0].mxu0
        %v616 = vadd.f32 0.0, %v615
        %v617 = vpop.f32.mrb[0].mxu0
        %618 = vmatprep.mubr.f32.mxu0 0.0
        %619 = vmatmul.mubr.f32.gmra.mrb[0].mxu0 %v483
        %v620 = vpop.f32.mrb[0].mxu0
        %v621 = vadd.f32 0.0, %v620
        %v622 = vpop.f32.mrb[0].mxu0
        %623 = vmatprep.mubr.f32.mxu0 0.0
        %624 = vmatmul.mubr.f32.gmra.mrb[0].mxu0 %v486
        %v625 = vpop.f32.mrb[0].mxu0
        %v626 = vadd.f32 0.0, %v625
        %v627 = vpop.f32.mrb[0].mxu0
        %628 = vmatprep.mubr.f32.mxu0 0.0
        %629 = vmatmul.mubr.f32.gmra.mrb[0].mxu0 %v489
        %v630 = vpop.f32.mrb[0].mxu0
        %v631 = vadd.f32 0.0, %v630
        %v632 = vpop.f32.mrb[0].mxu0
        %633 = vmatprep.mubr.f32.mxu0 0.0
        %634 = vmatmul.mubr.f32.gmra.mrb[0].mxu0 %v492
        %v635 = vpop.f32.mrb[0].mxu0
        %v636 = vadd.f32 0.0, %v635
        %v637 = vpop.f32.mrb[0].mxu0
        %638 = vdwg.mxu0
        %v639 = vmin.f32 %v561, %v581
        %v640 = vmin.f32 %v566, %v586
        %v641 = vmin.f32 %v571, %v591
        %v642 = vmin.f32 %v576, %v596
        %v643 = vmin.f32 %v639, %v601
        %v644 = vmin.f32 %v640, %v606
        %v645 = vmin.f32 %v641, %v611
        %v646 = vmin.f32 %v642, %v616
        %v647 = vmin.f32 %v643, %v621
        %v648 = vmin.f32 %v644, %v626
        %v649 = vmin.f32 %v645, %v631
        %v650 = vmin.f32 %v646, %v636
        %v651 = vmin.f32 %v647, %v648
        %v652 = vmin.f32 %v649, %v650
        %v653 = vmin.f32 %v651, %v652
        %v654 = vrot.slane %v653, 4
        %v655 = vmin.f32 %v653, %v654
        %v656 = vrot.slane %v655, 2
        %v657 = vmin.f32 %v655, %v656
        %v658 = vrot.slane %v657, 1
        %v659 = vmin.f32 %v657, %v658
        %v660 = vld [vmem:[%s363] sm:$0xff]
        %v661 = vld [vmem:[%s363 + $0x8] sm:$0xff]
        %v662 = vld [vmem:[%s363 + $0x10] sm:$0xff]
        %v663 = vld [vmem:[%s363 + $0x18] sm:$0xff]
        %v664 = vld [vmem:[%s363 + $0x20] sm:$0xff]
        %v665 = vld [vmem:[%s363 + $0x28] sm:$0xff]
        %v666 = vld [vmem:[%s363 + $0x30] sm:$0xff]
        %v667 = vld [vmem:[%s363 + $0x38] sm:$0xff]
        %v668 = vld [vmem:[%s363 + $0x40] sm:$0xff]
        %v669 = vld [vmem:[%s363 + $0x48] sm:$0xff]
        %v670 = vld [vmem:[%s363 + $0x50] sm:$0xff]
        %v671 = vld [vmem:[%s363 + $0x58] sm:$0xff]
        %v672 = vld [vmem:[%s363 + $0x60] sm:$0xff]
        %v673 = vld [vmem:[%s363 + $0x68] sm:$0xff]
        %v674 = vld [vmem:[%s363 + $0x70] sm:$0xff]
        %v675 = vld [vmem:[%s363 + $0x78] sm:$0xff]
        %vm676 = vcmp.le.f32.partialorder %v561, %v659
        %vm677 = vcmp.le.f32.partialorder %v566, %v659
        %vm678 = vcmp.le.f32.partialorder %v571, %v659
        %vm679 = vcmp.le.f32.partialorder %v576, %v659
        %vm680 = vcmp.le.f32.partialorder %v581, %v659
        %vm681 = vcmp.le.f32.partialorder %v586, %v659
        %vm682 = vcmp.le.f32.partialorder %v591, %v659
        %vm683 = vcmp.le.f32.partialorder %v596, %v659
        %vm684 = vcmp.le.f32.partialorder %v601, %v659
        %vm685 = vcmp.le.f32.partialorder %v606, %v659
        %vm686 = vcmp.le.f32.partialorder %v611, %v659
        %vm687 = vcmp.le.f32.partialorder %v616, %v659
        %vm688 = vcmp.le.f32.partialorder %v621, %v659
        %vm689 = vcmp.le.f32.partialorder %v626, %v659
        %vm690 = vcmp.le.f32.partialorder %v631, %v659
        %vm691 = vcmp.le.f32.partialorder %v636, %v659
        %693 = vset.pattern.permute.xlu0 0
        %694 = vperm.xlu0 %693, %v660
        %v695 = vpop.permute.xlu0 %694
        %698 = vset.pattern.permute.xlu0 0
        %699 = vperm.xlu0 %698, %v661
        %v700 = vpop.permute.xlu0 %699
        %703 = vset.pattern.permute.xlu0 0
        %704 = vperm.xlu0 %703, %v662
        %v705 = vpop.permute.xlu0 %704
        %708 = vset.pattern.permute.xlu0 0
        %709 = vperm.xlu0 %708, %v663
        %v710 = vpop.permute.xlu0 %709
        %713 = vset.pattern.permute.xlu0 0
        %714 = vperm.xlu0 %713, %v664
        %v715 = vpop.permute.xlu0 %714
        %718 = vset.pattern.permute.xlu0 0
        %719 = vperm.xlu0 %718, %v665
        %v720 = vpop.permute.xlu0 %719
        %723 = vset.pattern.permute.xlu0 0
        %724 = vperm.xlu0 %723, %v666
        %v725 = vpop.permute.xlu0 %724
        %728 = vset.pattern.permute.xlu0 0
        %729 = vperm.xlu0 %728, %v667
        %v730 = vpop.permute.xlu0 %729
        %733 = vset.pattern.permute.xlu0 0
        %734 = vperm.xlu0 %733, %v668
        %v735 = vpop.permute.xlu0 %734
        %738 = vset.pattern.permute.xlu0 0
        %739 = vperm.xlu0 %738, %v669
        %v740 = vpop.permute.xlu0 %739
        %743 = vset.pattern.permute.xlu0 0
        %744 = vperm.xlu0 %743, %v670
        %v745 = vpop.permute.xlu0 %744
        %748 = vset.pattern.permute.xlu0 0
        %749 = vperm.xlu0 %748, %v671
        %v750 = vpop.permute.xlu0 %749
        %753 = vset.pattern.permute.xlu0 0
        %754 = vperm.xlu0 %753, %v672
        %v755 = vpop.permute.xlu0 %754
        %758 = vset.pattern.permute.xlu0 0
        %759 = vperm.xlu0 %758, %v673
        %v760 = vpop.permute.xlu0 %759
        %763 = vset.pattern.permute.xlu0 0
        %764 = vperm.xlu0 %763, %v674
        %v765 = vpop.permute.xlu0 %764
        %768 = vset.pattern.permute.xlu0 0
        %769 = vperm.xlu0 %768, %v675
        %v770 = vpop.permute.xlu0 %769
        %v772 = vsel %vm676, %v695, 3e+38
        %v773 = vsel %vm677, %v700, 3e+38
        %v774 = vsel %vm678, %v705, 3e+38
        %v775 = vsel %vm679, %v710, 3e+38
        %v776 = vsel %vm680, %v715, 3e+38
        %v777 = vsel %vm681, %v720, 3e+38
        %v778 = vsel %vm682, %v725, 3e+38
        %v779 = vsel %vm683, %v730, 3e+38
        %v780 = vsel %vm684, %v735, 3e+38
        %v781 = vsel %vm685, %v740, 3e+38
        %v782 = vsel %vm686, %v745, 3e+38
        %v783 = vsel %vm687, %v750, 3e+38
        %v784 = vsel %vm688, %v755, 3e+38
        %v785 = vsel %vm689, %v760, 3e+38
        %v786 = vsel %vm690, %v765, 3e+38
        %v787 = vsel %vm691, %v770, 3e+38
        %v788 = vmin.f32 %v772, %v776
        %v789 = vmin.f32 %v773, %v777
        %v790 = vmin.f32 %v774, %v778
        %v791 = vmin.f32 %v775, %v779
        %v792 = vmin.f32 %v788, %v780
        %v793 = vmin.f32 %v789, %v781
        %v794 = vmin.f32 %v790, %v782
        %v795 = vmin.f32 %v791, %v783
        %v796 = vmin.f32 %v792, %v784
        %v797 = vmin.f32 %v793, %v785
        %v798 = vmin.f32 %v794, %v786
        %v799 = vmin.f32 %v795, %v787
        %v800 = vmin.f32 %v796, %v797
        %v801 = vmin.f32 %v798, %v799
        %v802 = vmin.f32 %v800, %v801
        %v803 = vrot.slane %v802, 4
        %v804 = vmin.f32 %v802, %v803
        %v805 = vrot.slane %v804, 2
        %v806 = vmin.f32 %v804, %v805
        %v807 = vrot.slane %v806, 1
        %v808 = vmin.f32 %v806, %v807
        %v809 = vld [vmem:[#allocation4] sm:$0x1]
        %vm810 = vcmp.lt.f32.partialorder %v659, %v809
        %v811 = vld [vmem:[#allocation5] sm:$0x1]
        %v812 = vsel %vm810, %v808, %v811
        %813 = vst [vmem:[#allocation5] sm:$0x1] %v812
        %v814 = vld [vmem:[#allocation4] sm:$0x1]
        %v815 = vmin.f32 %v814, %v659
        %816 = vst [vmem:[#allocation4] sm:$0x1] %v815
        %817 = vmin.xlane.f32.xlu0 %v561
        %v818 = vpop.xlane.xlu0 %817
        %819 = vmin.xlane.f32.xlu0 %v566
        %v820 = vpop.xlane.xlu0 %819
        %821 = vmin.xlane.f32.xlu0 %v571
        %v822 = vpop.xlane.xlu0 %821
        %823 = vmin.xlane.f32.xlu0 %v576
        %v824 = vpop.xlane.xlu0 %823
        %825 = vmin.xlane.f32.xlu0 %v581
        %v826 = vpop.xlane.xlu0 %825
        %827 = vmin.xlane.f32.xlu0 %v586
        %v828 = vpop.xlane.xlu0 %827
        %829 = vmin.xlane.f32.xlu0 %v591
        %v830 = vpop.xlane.xlu0 %829
        %831 = vmin.xlane.f32.xlu0 %v596
        %v832 = vpop.xlane.xlu0 %831
        %833 = vmin.xlane.f32.xlu0 %v601
        %v834 = vpop.xlane.xlu0 %833
        %835 = vmin.xlane.f32.xlu0 %v606
        %v836 = vpop.xlane.xlu0 %835
        %837 = vmin.xlane.f32.xlu0 %v611
        %v838 = vpop.xlane.xlu0 %837
        %839 = vmin.xlane.f32.xlu0 %v616
        %v840 = vpop.xlane.xlu0 %839
        %841 = vmin.xlane.f32.xlu0 %v621
        %v842 = vpop.xlane.xlu0 %841
        %843 = vmin.xlane.f32.xlu0 %v626
        %v844 = vpop.xlane.xlu0 %843
        %845 = vmin.xlane.f32.xlu0 %v631
        %v846 = vpop.xlane.xlu0 %845
        %847 = vmin.xlane.f32.xlu0 %v636
        %v848 = vpop.xlane.xlu0 %847
        %v849 = vmax.f32 %v818, 0.0
        %v850 = vmax.f32 %v820, 0.0
        %v851 = vmax.f32 %v822, 0.0
        %v852 = vmax.f32 %v824, 0.0
        %v853 = vmax.f32 %v826, 0.0
        %v854 = vmax.f32 %v828, 0.0
        %v855 = vmax.f32 %v830, 0.0
        %v856 = vmax.f32 %v832, 0.0
        %v857 = vmax.f32 %v834, 0.0
        %v858 = vmax.f32 %v836, 0.0
        %v859 = vmax.f32 %v838, 0.0
        %v860 = vmax.f32 %v840, 0.0
        %v861 = vmax.f32 %v842, 0.0
        %v862 = vmax.f32 %v844, 0.0
        %v863 = vmax.f32 %v846, 0.0
        %v864 = vmax.f32 %v848, 0.0
        %v865 = vrsqrt.pop %v849
        %v866 = vmul.f32 %v849, %v865
        %vm867 = vcmp.eq.f32.partialorder %v849, inf
        %v868 = vsel %vm867, %v849, %v866
        %vm869 = vcmp.eq.f32.partialorder %v849, 0.0
        %v870 = vand.u32 %v849, 2147483648
        %v871 = vsel %vm869, %v870, %v868
        %v872 = vrsqrt.pop %v850
        %v873 = vmul.f32 %v850, %v872
        %vm874 = vcmp.eq.f32.partialorder %v850, inf
        %v875 = vsel %vm874, %v850, %v873
        %vm876 = vcmp.eq.f32.partialorder %v850, 0.0
        %v877 = vand.u32 %v850, 2147483648
        %v878 = vsel %vm876, %v877, %v875
        %v879 = vrsqrt.pop %v851
        %v880 = vmul.f32 %v851, %v879
        %vm881 = vcmp.eq.f32.partialorder %v851, inf
        %v882 = vsel %vm881, %v851, %v880
        %vm883 = vcmp.eq.f32.partialorder %v851, 0.0
        %v884 = vand.u32 %v851, 2147483648
        %v885 = vsel %vm883, %v884, %v882
        %v886 = vrsqrt.pop %v852
        %v887 = vmul.f32 %v852, %v886
        %vm888 = vcmp.eq.f32.partialorder %v852, inf
        %v889 = vsel %vm888, %v852, %v887
        %vm890 = vcmp.eq.f32.partialorder %v852, 0.0
        %v891 = vand.u32 %v852, 2147483648
        %v892 = vsel %vm890, %v891, %v889
        %v893 = vrsqrt.pop %v853
        %v894 = vmul.f32 %v853, %v893
        %vm895 = vcmp.eq.f32.partialorder %v853, inf
        %v896 = vsel %vm895, %v853, %v894
        %vm897 = vcmp.eq.f32.partialorder %v853, 0.0
        %v898 = vand.u32 %v853, 2147483648
        %v899 = vsel %vm897, %v898, %v896
        %v900 = vrsqrt.pop %v854
        %v901 = vmul.f32 %v854, %v900
        %vm902 = vcmp.eq.f32.partialorder %v854, inf
        %v903 = vsel %vm902, %v854, %v901
        %vm904 = vcmp.eq.f32.partialorder %v854, 0.0
        %v905 = vand.u32 %v854, 2147483648
        %v906 = vsel %vm904, %v905, %v903
        %v907 = vrsqrt.pop %v855
        %v908 = vmul.f32 %v855, %v907
        %vm909 = vcmp.eq.f32.partialorder %v855, inf
        %v910 = vsel %vm909, %v855, %v908
        %vm911 = vcmp.eq.f32.partialorder %v855, 0.0
        %v912 = vand.u32 %v855, 2147483648
        %v913 = vsel %vm911, %v912, %v910
        %v914 = vrsqrt.pop %v856
        %v915 = vmul.f32 %v856, %v914
        %vm916 = vcmp.eq.f32.partialorder %v856, inf
        %v917 = vsel %vm916, %v856, %v915
        %vm918 = vcmp.eq.f32.partialorder %v856, 0.0
        %v919 = vand.u32 %v856, 2147483648
        %v920 = vsel %vm918, %v919, %v917
        %v921 = vrsqrt.pop %v857
        %v922 = vmul.f32 %v857, %v921
        %vm923 = vcmp.eq.f32.partialorder %v857, inf
        %v924 = vsel %vm923, %v857, %v922
        %vm925 = vcmp.eq.f32.partialorder %v857, 0.0
        %v926 = vand.u32 %v857, 2147483648
        %v927 = vsel %vm925, %v926, %v924
        %v928 = vrsqrt.pop %v858
        %v929 = vmul.f32 %v858, %v928
        %vm930 = vcmp.eq.f32.partialorder %v858, inf
        %v931 = vsel %vm930, %v858, %v929
        %vm932 = vcmp.eq.f32.partialorder %v858, 0.0
        %v933 = vand.u32 %v858, 2147483648
        %v934 = vsel %vm932, %v933, %v931
        %v935 = vrsqrt.pop %v859
        %v936 = vmul.f32 %v859, %v935
        %vm937 = vcmp.eq.f32.partialorder %v859, inf
        %v938 = vsel %vm937, %v859, %v936
        %vm939 = vcmp.eq.f32.partialorder %v859, 0.0
        %v940 = vand.u32 %v859, 2147483648
        %v941 = vsel %vm939, %v940, %v938
        %v942 = vrsqrt.pop %v860
        %v943 = vmul.f32 %v860, %v942
        %vm944 = vcmp.eq.f32.partialorder %v860, inf
        %v945 = vsel %vm944, %v860, %v943
        %vm946 = vcmp.eq.f32.partialorder %v860, 0.0
        %v947 = vand.u32 %v860, 2147483648
        %v948 = vsel %vm946, %v947, %v945
        %v949 = vrsqrt.pop %v861
        %v950 = vmul.f32 %v861, %v949
        %vm951 = vcmp.eq.f32.partialorder %v861, inf
        %v952 = vsel %vm951, %v861, %v950
        %vm953 = vcmp.eq.f32.partialorder %v861, 0.0
        %v954 = vand.u32 %v861, 2147483648
        %v955 = vsel %vm953, %v954, %v952
        %v956 = vrsqrt.pop %v862
        %v957 = vmul.f32 %v862, %v956
        %vm958 = vcmp.eq.f32.partialorder %v862, inf
        %v959 = vsel %vm958, %v862, %v957
        %vm960 = vcmp.eq.f32.partialorder %v862, 0.0
        %v961 = vand.u32 %v862, 2147483648
        %v962 = vsel %vm960, %v961, %v959
        %v963 = vrsqrt.pop %v863
        %v964 = vmul.f32 %v863, %v963
        %vm965 = vcmp.eq.f32.partialorder %v863, inf
        %v966 = vsel %vm965, %v863, %v964
        %vm967 = vcmp.eq.f32.partialorder %v863, 0.0
        %v968 = vand.u32 %v863, 2147483648
        %v969 = vsel %vm967, %v968, %v966
        %v970 = vrsqrt.pop %v864
        %v971 = vmul.f32 %v864, %v970
        %vm972 = vcmp.eq.f32.partialorder %v864, inf
        %v973 = vsel %vm972, %v864, %v971
        %vm974 = vcmp.eq.f32.partialorder %v864, 0.0
        %v975 = vand.u32 %v864, 2147483648
        %v976 = vsel %vm974, %v975, %v973
        %v977 = vld [vmem:[#allocation6] sm:$0x1]
        %vm978 = vcmask 7168
        %v979 = vsel %vm978, %v871, 0.0
        %v980 = vsel %vm978, %v878, 0.0
        %v981 = vadd.f32 %v979, %v980
        %v982 = vsel %vm978, %v885, 0.0
        %v983 = vadd.f32 %v981, %v982
        %v984 = vsel %vm978, %v892, 0.0
        %v985 = vadd.f32 %v983, %v984
        %v986 = vsel %vm978, %v899, 0.0
        %v987 = vadd.f32 %v985, %v986
        %v988 = vsel %vm978, %v906, 0.0
        %v989 = vadd.f32 %v987, %v988
        %v990 = vsel %vm978, %v913, 0.0
        %v991 = vadd.f32 %v989, %v990
        %v992 = vsel %vm978, %v920, 0.0
        %v993 = vadd.f32 %v991, %v992
        %v994 = vsel %vm978, %v927, 0.0
        %v995 = vadd.f32 %v993, %v994
        %v996 = vsel %vm978, %v934, 0.0
        %v997 = vadd.f32 %v995, %v996
        %v998 = vsel %vm978, %v941, 0.0
        %v999 = vadd.f32 %v997, %v998
        %v1000 = vsel %vm978, %v948, 0.0
        %v1001 = vadd.f32 %v999, %v1000
        %v1002 = vsel %vm978, %v955, 0.0
        %v1003 = vadd.f32 %v1001, %v1002
        %v1004 = vsel %vm978, %v962, 0.0
        %v1005 = vadd.f32 %v1003, %v1004
        %v1006 = vsel %vm978, %v969, 0.0
        %v1007 = vadd.f32 %v1005, %v1006
        %v1008 = vsel %vm978, %v976, 0.0
        %v1009 = vadd.f32 %v1007, %v1008
        %1010 = vadd.xlane.f32.xlu0 %v1009
        %v1011 = vpop.xlane.xlu0 %1010
        %v1012 = vrot.slane %v1011, 4
        %v1013 = vadd.f32 %v1011, %v1012
        %v1014 = vrot.slane %v1013, 2
        %v1015 = vadd.f32 %v1013, %v1014
        %v1016 = vrot.slane %v1015, 1
        %v1017 = vadd.f32 %v1015, %v1016
        %s1018 = vtos %v1017
        %v1019 = vstv %s1018
        %v1020 = vadd.f32 %v977, %v1019
        %vm1021 = vcmask 0
        %1022 = vst.msk [vmem:[#allocation6] sm:$0x1] %vm1021, %v1020
        // Predicated region
        $region41: #{loss_forward.4} parent=35 // pred_check
          %p1023 = pneg %p374
        $region42: #{loss_forward.4} parent=35 // pred_check_branch
          %1025 = sbr.rel (%p1023) target = $region44
        $region43: #{loss_forward.4} parent=35 // pred_region
          %v1026 = vld [vmem:[#allocation4] sm:$0x1]
          %v1027 = vmax.f32 %v1026, 0.0
          %v1028 = vrsqrt.pop %v1027
          %v1029 = vmul.f32 %v1027, %v1028
          %vm1030 = vcmp.eq.f32.partialorder %v1027, inf
          %v1031 = vsel %vm1030, %v1027, %v1029
          %vm1032 = vcmp.eq.f32.partialorder %v1027, 0.0
          %v1033 = vand.u32 %v1027, 2147483648
          %v1034 = vsel %vm1032, %v1033, %v1031
          %vm1035 = vcmask 1040384
          %v1036 = vsel %vm1035, %v1034, 0.0
          %1037 = vadd.xlane.f32.xlu0 %v1036
          %v1038 = vpop.xlane.xlu0 %1037
          %v1039 = vrot.slane %v1038, 4
          %v1040 = vadd.f32 %v1038, %v1039
          %v1041 = vrot.slane %v1040, 2
          %v1042 = vadd.f32 %v1040, %v1041
          %v1043 = vrot.slane %v1042, 1
          %v1044 = vadd.f32 %v1042, %v1043
          %s1045 = vtos %v1044
          %v1046 = vstv %s1045
          %1047 = vst.msk [vmem:[%s367] sm:$0x1] %vm1021, %v1046
          %v1048 = vld [vmem:[#allocation6] sm:$0x1]
          %1049 = vst.msk [vmem:[%s370] sm:$0x1] %vm1021, %v1048
          %v1050 = vld [vmem:[#allocation5] sm:$0x1]
          %1051 = vst [vmem:[%s343] sm:$0x1] %v1050
          %v1052 = vld [vmem:[%s347 + $0x3] sm:$0xf]
          %v1053 = vld [vmem:[%s3] sm:$0xf]
          %vm1054 = vcmask 1043456
          %v1055 = vsel %vm1054, %v1052, -inf
          %v1056 = vrot.slane %v1055, 4
          %v1057 = vmax.f32 %v1055, %v1056
          %v1058 = vrot.slane %v1057, 2
          %v1059 = vmax.f32 %v1057, %v1058
          %v1060 = vrot.slane %v1059, 1
          %v1061 = vmax.f32 %v1059, %v1060
          %v1062 = vsub.f32 %v1052, %v1061
          %v1063 = vmul.f32 %v1062, 1.442695
          %v1064 = vpow.pop %v1063
          %v1065 = vsel %vm1054, %v1064, 0.0
          %v1066 = vrot.slane %v1065, 4
          %v1067 = vadd.f32 %v1065, %v1066
          %v1068 = vrot.slane %v1067, 2
          %v1069 = vadd.f32 %v1067, %v1068
          %v1070 = vrot.slane %v1069, 1
          %v1071 = vadd.f32 %v1069, %v1070
          %v1072 = vlog2.pop %v1071
          %v1073 = vmul.f32 %v1072, 0.6931472
          %v1074 = vsub.f32 %v1062, %v1073
          %v1075 = vlaneseq
          %v1076 = vshrl.u32 %v1075, 7
          %v1077 = vcvt.f32.s32.to.zero.pseudo %v1050
          %v1078 = vlaneseq
          %v1079 = vshrl.u32 %v1078, 7
          %v1080 = vsub.s32 0, %v1079
          %v1081 = vrot.slane %v1077, %v1080
          %vm1082 = vcmp.eq.s32.totalorder %v1076, %v1081
          %v1083 = vsel %vm1082, %v1074, 0.0
          %v1084 = vsel %vm1054, %v1083, 0.0
          %v1085 = vrot.slane %v1084, 4
          %v1086 = vadd.f32 %v1084, %v1085
          %v1087 = vrot.slane %v1086, 2
          %v1088 = vadd.f32 %v1086, %v1087
          %v1089 = vrot.slane %v1088, 1
          %v1090 = vadd.f32 %v1088, %v1089
          %1092 = vset.pattern.permute.xlu0 0
          %1093 = vperm.xlu0 %1092, %v1053
          %v1094 = vpop.permute.xlu0 %1093
          %v1096 = vsel %vm1082, %v1094, 0.0
          %v1097 = vsel %vm1054, %v1096, 0.0
          %v1098 = vrot.slane %v1097, 4
          %v1099 = vadd.f32 %v1097, %v1098
          %v1100 = vrot.slane %v1099, 2
          %v1101 = vadd.f32 %v1099, %v1100
          %v1102 = vrot.slane %v1101, 1
          %v1103 = vadd.f32 %v1101, %v1102
          %v1104 = vmul.f32 %v1090, 1.442695
          %v1105 = vpow.pop %v1104
          %v1106 = vsub.f32 1.0, %v1105
          %v1107 = vmax.f32 %v1106, 1e-30
          %v1108 = vlog2.pop %v1107
          %v1109 = vmul.f32 %v1108, 0.6931472
          %v1110 = vmul.f32 %v1109, 0.25
          %v1111 = vmul.f32 %v1110, 1.442695
          %v1112 = vpow.pop %v1111
          %v1113 = vmul.f32 %v1112, %v1103
          %v1114 = vmul.f32 %v1113, %v1090
          %v1115 = vsub.f32 0.0, %v1114
          %v1116 = vsel %vm1035, %v1115, 0.0
          %1117 = vadd.xlane.f32.xlu0 %v1116
          %v1118 = vpop.xlane.xlu0 %1117
          %v1119 = vrot.slane %v1118, 4
          %v1120 = vadd.f32 %v1118, %v1119
          %v1121 = vrot.slane %v1120, 2
          %v1122 = vadd.f32 %v1120, %v1121
          %v1123 = vrot.slane %v1122, 1
          %v1124 = vadd.f32 %v1122, %v1123
          %s1125 = vtos %v1124
          %v1126 = vstv %s1125
          %1127 = vst.msk [vmem:[%s373] sm:$0x1] %vm1021, %v1126
        $region44: #{loss_forward.4} parent=35 // pred_fallthru
          _
        %p1128 = scmp.lt.s32.totalorder %s26, 1
        %s1129 = scalar_select %p1128, %s26, 1
        %s1130 = scalar_lea.vmem %s4, %s1129
        %p1131 = scmp.lt.s32.totalorder %s26, 1
        %s1132 = scalar_select %p1131, %s26, 1
        %s1133 = scalar_lea.vmem %s5, %s1132
        %p1134 = scmp.lt.s32.totalorder %s26, 1
        %s1135 = scalar_select %p1134, %s26, 1
        %s1136 = scalar_lea.vmem %s6, %s1135
        %s1137 = sand.u32 %s223, 1
        %s1138 = scalar_lea.sflag [#allocation8], %s1137
        %s1139 = sand.u32 %s223, 1
        %s1140 = scalar_lea.vmem [#allocation7], %s1139
        // Predicated region
        $region45: #{loss_forward.4} parent=35 // pred_check
          %p1141 = pneg %p155
        $region46: #{loss_forward.4} parent=35 // pred_check_branch
          %1143 = sbr.rel (%p1141) target = $region48
        $region47: #{loss_forward.4} parent=35 // pred_region
          _
        $region48: #{loss_forward.4} parent=35 // pred_fallthru
          _
        // Predicated region
        $region49: #{loss_forward.4} parent=35 // pred_check
          %p1144 = pneg %p181
        $region50: #{loss_forward.4} parent=35 // pred_check_branch
          %1146 = sbr.rel (%p1144) target = $region52
        $region51: #{loss_forward.4} parent=35 // pred_region
          _
        $region52: #{loss_forward.4} parent=35 // pred_fallthru
          _
        // Predicated region
        $region53: #{loss_forward.4} parent=35 // pred_check
          %p1147 = pneg %p207
        $region54: #{loss_forward.4} parent=35 // pred_check_branch
          %1149 = sbr.rel (%p1147) target = $region56
        $region55: #{loss_forward.4} parent=35 // pred_region
          _
        $region56: #{loss_forward.4} parent=35 // pred_fallthru
          _
        // Predicated region
        $region57: #{loss_forward.4} parent=35 // pred_check
          %p1150 = pneg %p233
        $region58: #{loss_forward.4} parent=35 // pred_check_branch
          %1152 = sbr.rel (%p1150) target = $region60
        $region59: #{loss_forward.4} parent=35 // pred_region
          %s1154 = ssub.s32 16, 16
          %1155 = vsyncadd %s1138, %s1154
          %s1156 = smul.addr %s26, 16
          %s1157 = scalar_lea.hbm %s7, %s1156
          %s1159 = sshll.u32 %s1140, 4
          %s1160 = int_to_ptr.vmem [resolvable:$true] %s1159
          %1162 = dma.vmem_to_hbm [thread:$0]  %s1160, 16, %s1157, %s1138
        $region60: #{loss_forward.4} parent=35 // pred_fallthru
          _
      $region36: #{loss_forward.4} parent=5 // pred_fallthru
        _
      %p1163 = scmp.le.s32.totalorder 2, %s17
      // Predicated region
      $region61: #{loss_forward.4} parent=5 // pred_check
        %p1164 = pneg %p1163
      $region62: #{loss_forward.4} parent=5 // pred_check_branch
        %1166 = sbr.rel (%p1164) target = $region64
      $region63: #{loss_forward.4} parent=5 // pred_region
        %s1167 = ssub.s32 %s17, 2
        // Predicated region
        $region65: #{loss_forward.4} parent=63 // pred_check
          %p1168 = pneg %p161
        $region66: #{loss_forward.4} parent=63 // pred_check_branch
          %1170 = sbr.rel (%p1168) target = $region68
        $region67: #{loss_forward.4} parent=63 // pred_region
          %p1171 = scmp.lt.s32.totalorder %s28, 1
          %s1172 = scalar_select %p1171, %s28, 1
          %s1173 = scalar_lea.vmem %s4, %s1172
        $region68: #{loss_forward.4} parent=63 // pred_fallthru
          _
        // Predicated region
        $region69: #{loss_forward.4} parent=63 // pred_check
          %p1174 = pneg %p187
        $region70: #{loss_forward.4} parent=63 // pred_check_branch
          %1176 = sbr.rel (%p1174) target = $region72
        $region71: #{loss_forward.4} parent=63 // pred_region
          %p1177 = scmp.lt.s32.totalorder %s28, 1
          %s1178 = scalar_select %p1177, %s28, 1
          %s1179 = scalar_lea.vmem %s5, %s1178
        $region72: #{loss_forward.4} parent=63 // pred_fallthru
          _
        // Predicated region
        $region73: #{loss_forward.4} parent=63 // pred_check
          %p1180 = pneg %p213
        $region74: #{loss_forward.4} parent=63 // pred_check_branch
          %1182 = sbr.rel (%p1180) target = $region76
        $region75: #{loss_forward.4} parent=63 // pred_region
          %p1183 = scmp.lt.s32.totalorder %s28, 1
          %s1184 = scalar_select %p1183, %s28, 1
          %s1185 = scalar_lea.vmem %s6, %s1184
        $region76: #{loss_forward.4} parent=63 // pred_fallthru
          _
        // Predicated region
        $region77: #{loss_forward.4} parent=63 // pred_check
          %p1186 = pneg %p239
        $region78: #{loss_forward.4} parent=63 // pred_check_branch
          %1188 = sbr.rel (%p1186) target = $region80
        $region79: #{loss_forward.4} parent=63 // pred_region
          %s1189 = sand.u32 %s224, 1
          %s1190 = scalar_lea.sflag [#allocation8], %s1189
          %s1191 = sand.u32 %s224, 1
          %s1192 = scalar_lea.vmem [#allocation7], %s1191
          %1193 = dma.done %s1190, 16
        $region80: #{loss_forward.4} parent=63 // pred_fallthru
          _
      $region64: #{loss_forward.4} parent=5 // pred_fallthru
        _
    $region6: #{loss_forward.4} parent=1 // loop_footer
      %s21 = sadd.s32 1, %s17
    $region7: #{loss_forward.4} parent=1 // loop_footer_branch
      %16 = sbr.rel target = $region3
    $region8: #{loss_forward.4} parent=1 // loop_exit
      _
    %1194 = vsyncpa [#allocation8], 1
    %s1195 = scalar_lea.sflag [#allocation8], 1
    %1196 = vsyncpa %s1195, 1

// kernel: loss_forward.5
$region0: #{loss_forward.5}
  #allocation0 [shape = 'u32[]', space=smem, size = 0x4, offset = 0x4, fixed_abs, tag = 'smem constant byte address 0x4 - core index']
  #allocation1 [shape = 'u32[144,128]{1,0:T(1,128)}', space=vmem, size = 0x12000, scoped, tag = 'internal scratch']
  #allocation2 [shape = 'f32[8,256]{1,0:T(8,128)}', space=vmem, size = 0x2000, scoped, tag = 'scratch operand']
  #allocation3 [shape = 'f32[8,256]{1,0:T(8,128)}', space=vmem, size = 0x2000, scoped, tag = 'scratch operand']
  #allocation4 [shape = 'f32[1,256]{1,0:T(1,128)}', space=vmem, size = 0x400, scoped, tag = 'scratch operand']
  #allocation5 [shape = 'f32[1,256]{1,0:T(1,128)}', space=vmem, size = 0x400, scoped, tag = 'scratch operand']
  #allocation6 [shape = 'f32[1,1]{1,0:T(1,128)}', space=vmem, size = 0x200, scoped, tag = 'scratch operand']
  %s0 = inlined_call_operand.vmem [shape: f32[2,7,256], index: 0, kind: input, shape index: {}]
  %s1 = inlined_call_operand.vmem [shape: f32[2,4,256], index: 1, kind: input, shape index: {}]
  %s2 = inlined_call_operand.vmem [shape: f32[2,256,1], index: 2, kind: input, shape index: {}]
  %s3 = inlined_call_operand.vmem [shape: f32[1,4,1], index: 3, kind: input, shape index: {}]
  %s4 = inlined_call_operand.vmem [shape: f32[2,1,1], index: 4, kind: output, shape index: {0}]
  %s5 = inlined_call_operand.vmem [shape: f32[2,1,1], index: 5, kind: output, shape index: {1}]
  %s6 = inlined_call_operand.vmem [shape: f32[2,1,1], index: 6, kind: output, shape index: {2}]
  %s7 = inlined_call_operand.vmem [shape: f32[2,1,256], index: 7, kind: output, shape index: {3}]
  %8 = xla_tuple %s4, %s5, %s6, %s7
  %s9 = sld [smem:[#allocation0]]
  $region81: #{loss_forward.5} parent=0
    _
  %s11 = ssub.s32 1, %s9
  %s12 = scalar_select 0, %s11, %s9
  loop: start=0, step=1, limit=4
  $region2: #{loss_forward.5} parent=0 // loop_pre_header
    _
  $region3: #{loss_forward.5} parent=0 // loop_header
    %s14 = sphi 0, %s18
    %p15 = scmp.ge.s32.totalorder %s14, 4
    %s21 = sphi 0, %s33
    %s22 = sphi 0, %s29
    %s23 = sphi 0, %s21
    %s24 = sphi 0, %s22
    %s25 = sphi 0, %s23
    %s26 = sphi 0, %s24
    %s36 = sphi 0, %s38
    %s39 = sphi 0, %s36
    %s40 = sphi 0, %s39
    %s56 = sphi 0, %s40
    %s64 = sphi 0, %s66
    %s67 = sphi 0, %s64
    %s68 = sphi 0, %s67
    %s84 = sphi 0, %s68
    %s92 = sphi 0, %s94
    %s95 = sphi 0, %s92
    %s96 = sphi 0, %s95
    %s112 = sphi 0, %s96
    %s116 = sphi 0, %s116
    %s118 = sphi 0, %s116
    %s119 = sphi 0, %s118
    %s133 = sphi 0, %s119
    %s139 = sphi 0, %s141
    %s142 = sphi 0, %s139
    %s143 = sphi 0, %s142
    %s159 = sphi 0, %s143
    %s165 = sphi 0, %s167
    %s168 = sphi 0, %s165
    %s169 = sphi 0, %s168
    %s185 = sphi 0, %s169
    %s191 = sphi 0, %s193
    %s194 = sphi 0, %s191
    %s195 = sphi 0, %s194
    %s211 = sphi 0, %s195
    %s217 = sphi 0, %s219
    %s220 = sphi 0, %s217
    %s221 = sphi 0, %s220
    %s237 = sphi 0, %s221
  $region4: #{loss_forward.5} parent=0 // loop_header_branch
    %17 = sbr.rel (%p15) target = $region8
  $region5: #{loss_forward.5} parent=0 // loop_body
    %s19 = ssub.s32 %s14, 1
    %s20 = ssub.s32 %s14, 2
    %s27 = sadd.s32 1, %s22
    %p28 = scmp.ge.s32.totalorder %s27, 1
    %s29 = scalar_select %p28, 0, %s27
    %s30 = sadd.s32 1, %s21
    %s31 = scalar_select %p28, %s30, %s21
    %p32 = scmp.ge.s32.totalorder %s31, 2
    %s33 = scalar_select %p32, 0, %s31
    %s34 = ssub.s32 %s21, %s33
    %p35 = scmp.eq.s32.totalorder %s34, 0
    %s37 = sadd.s32 %s36, 1
    %s38 = scalar_select %p35, %s36, %s37
    %p41 = pneg %p35
    %p42 = scmp.eq.s32.totalorder %s14, 1
    %p43 = por %p41, %p42
    %p44 = scmp.ne.s32.totalorder %s36, %s39
    %p45 = scmp.eq.s32.totalorder %s14, 0
    %p46 = por %p44, %p45
    %p47 = scmp.ne.s32.totalorder %s36, %s39
    %p48 = scmp.eq.s32.totalorder %s19, 1
    %p49 = por %p47, %p48
    %p50 = scmp.ne.s32.totalorder %s39, %s40
    %p51 = scmp.eq.s32.totalorder %s19, 0
    %p52 = por %p50, %p51
    %p53 = scmp.ne.s32.totalorder %s39, %s40
    %p54 = scmp.eq.s32.totalorder %s20, 1
    %p55 = por %p53, %p54
    %p57 = scmp.ne.s32.totalorder %s40, %s56
    %p58 = scmp.eq.s32.totalorder %s20, 0
    %p59 = por %p57, %p58
    %s60 = ssub.s32 %s21, %s33
    %s61 = ssub.s32 %s22, %s29
    %s62 = sor.u32 %s60, %s61
    %p63 = scmp.eq.s32.totalorder %s62, 0
    %s65 = sadd.s32 %s64, 1
    %s66 = scalar_select %p63, %s64, %s65
    %p69 = pneg %p63
    %p70 = scmp.eq.s32.totalorder %s14, 1
    %p71 = por %p69, %p70
    %p72 = scmp.ne.s32.totalorder %s64, %s67
    %p73 = scmp.eq.s32.totalorder %s14, 0
    %p74 = por %p72, %p73
    %p75 = scmp.ne.s32.totalorder %s64, %s67
    %p76 = scmp.eq.s32.totalorder %s19, 1
    %p77 = por %p75, %p76
    %p78 = scmp.ne.s32.totalorder %s67, %s68
    %p79 = scmp.eq.s32.totalorder %s19, 0
    %p80 = por %p78, %p79
    %p81 = scmp.ne.s32.totalorder %s67, %s68
    %p82 = scmp.eq.s32.totalorder %s20, 1
    %p83 = por %p81, %p82
    %p85 = scmp.ne.s32.totalorder %s68, %s84
    %p86 = scmp.eq.s32.totalorder %s20, 0
    %p87 = por %p85, %p86
    %s88 = ssub.s32 %s21, %s33
    %s89 = ssub.s32 %s22, %s29
    %s90 = sor.u32 %s88, %s89
    %p91 = scmp.eq.s32.totalorder %s90, 0
    %s93 = sadd.s32 %s92, 1
    %s94 = scalar_select %p91, %s92, %s93
    %p97 = pneg %p91
    %p98 = scmp.eq.s32.totalorder %s14, 1
    %p99 = por %p97, %p98
    %p100 = scmp.ne.s32.totalorder %s92, %s95
    %p101 = scmp.eq.s32.totalorder %s14, 0
    %p102 = por %p100, %p101
    %p103 = scmp.ne.s32.totalorder %s92, %s95
    %p104 = scmp.eq.s32.totalorder %s19, 1
    %p105 = por %p103, %p104
    %p106 = scmp.ne.s32.totalorder %s95, %s96
    %p107 = scmp.eq.s32.totalorder %s19, 0
    %p108 = por %p106, %p107
    %p109 = scmp.ne.s32.totalorder %s95, %s96
    %p110 = scmp.eq.s32.totalorder %s20, 1
    %p111 = por %p109, %p110
    %p113 = scmp.ne.s32.totalorder %s96, %s112
    %p114 = scmp.eq.s32.totalorder %s20, 0
    %p115 = por %p113, %p114
    %s117 = sadd.s32 %s116, 1
    %p120 = scmp.eq.s32.totalorder %s14, 1
    %p121 = scmp.ne.s32.totalorder %s116, %s118
    %p122 = scmp.eq.s32.totalorder %s14, 0
    %p123 = por %p121, %p122
    %p124 = scmp.ne.s32.totalorder %s116, %s118
    %p125 = scmp.eq.s32.totalorder %s19, 1
    %p126 = por %p124, %p125
    %p127 = scmp.ne.s32.totalorder %s118, %s119
    %p128 = scmp.eq.s32.totalorder %s19, 0
    %p129 = por %p127, %p128
    %p130 = scmp.ne.s32.totalorder %s118, %s119
    %p131 = scmp.eq.s32.totalorder %s20, 1
    %p132 = por %p130, %p131
    %p134 = scmp.ne.s32.totalorder %s119, %s133
    %p135 = scmp.eq.s32.totalorder %s20, 0
    %p136 = por %p134, %p135
    %s137 = ssub.s32 %s21, %s33
    %p138 = scmp.eq.s32.totalorder %s137, 0
    %s140 = sadd.s32 %s139, 1
    %s141 = scalar_select %p138, %s139, %s140
    %p144 = pneg %p138
    %p145 = scmp.eq.s32.totalorder %s14, 1
    %p146 = por %p144, %p145
    %p147 = scmp.ne.s32.totalorder %s139, %s142
    %p148 = scmp.eq.s32.totalorder %s14, 0
    %p149 = por %p147, %p148
    %p150 = scmp.ne.s32.totalorder %s139, %s142
    %p151 = scmp.eq.s32.totalorder %s19, 1
    %p152 = por %p150, %p151
    %p153 = scmp.ne.s32.totalorder %s142, %s143
    %p154 = scmp.eq.s32.totalorder %s19, 0
    %p155 = por %p153, %p154
    %p156 = scmp.ne.s32.totalorder %s142, %s143
    %p157 = scmp.eq.s32.totalorder %s20, 1
    %p158 = por %p156, %p157
    %p160 = scmp.ne.s32.totalorder %s143, %s159
    %p161 = scmp.eq.s32.totalorder %s20, 0
    %p162 = por %p160, %p161
    %s163 = ssub.s32 %s21, %s33
    %p164 = scmp.eq.s32.totalorder %s163, 0
    %s166 = sadd.s32 %s165, 1
    %s167 = scalar_select %p164, %s165, %s166
    %p170 = pneg %p164
    %p171 = scmp.eq.s32.totalorder %s14, 1
    %p172 = por %p170, %p171
    %p173 = scmp.ne.s32.totalorder %s165, %s168
    %p174 = scmp.eq.s32.totalorder %s14, 0
    %p175 = por %p173, %p174
    %p176 = scmp.ne.s32.totalorder %s165, %s168
    %p177 = scmp.eq.s32.totalorder %s19, 1
    %p178 = por %p176, %p177
    %p179 = scmp.ne.s32.totalorder %s168, %s169
    %p180 = scmp.eq.s32.totalorder %s19, 0
    %p181 = por %p179, %p180
    %p182 = scmp.ne.s32.totalorder %s168, %s169
    %p183 = scmp.eq.s32.totalorder %s20, 1
    %p184 = por %p182, %p183
    %p186 = scmp.ne.s32.totalorder %s169, %s185
    %p187 = scmp.eq.s32.totalorder %s20, 0
    %p188 = por %p186, %p187
    %s189 = ssub.s32 %s21, %s33
    %p190 = scmp.eq.s32.totalorder %s189, 0
    %s192 = sadd.s32 %s191, 1
    %s193 = scalar_select %p190, %s191, %s192
    %p196 = pneg %p190
    %p197 = scmp.eq.s32.totalorder %s14, 1
    %p198 = por %p196, %p197
    %p199 = scmp.ne.s32.totalorder %s191, %s194
    %p200 = scmp.eq.s32.totalorder %s14, 0
    %p201 = por %p199, %p200
    %p202 = scmp.ne.s32.totalorder %s191, %s194
    %p203 = scmp.eq.s32.totalorder %s19, 1
    %p204 = por %p202, %p203
    %p205 = scmp.ne.s32.totalorder %s194, %s195
    %p206 = scmp.eq.s32.totalorder %s19, 0
    %p207 = por %p205, %p206
    %p208 = scmp.ne.s32.totalorder %s194, %s195
    %p209 = scmp.eq.s32.totalorder %s20, 1
    %p210 = por %p208, %p209
    %p212 = scmp.ne.s32.totalorder %s195, %s211
    %p213 = scmp.eq.s32.totalorder %s20, 0
    %p214 = por %p212, %p213
    %s215 = ssub.s32 %s21, %s33
    %p216 = scmp.eq.s32.totalorder %s215, 0
    %s218 = sadd.s32 %s217, 1
    %s219 = scalar_select %p216, %s217, %s218
    %p222 = pneg %p216
    %p223 = scmp.eq.s32.totalorder %s14, 1
    %p224 = por %p222, %p223
    %p225 = scmp.ne.s32.totalorder %s217, %s220
    %p226 = scmp.eq.s32.totalorder %s14, 0
    %p227 = por %p225, %p226
    %p228 = scmp.ne.s32.totalorder %s217, %s220
    %p229 = scmp.eq.s32.totalorder %s19, 1
    %p230 = por %p228, %p229
    %p231 = scmp.ne.s32.totalorder %s220, %s221
    %p232 = scmp.eq.s32.totalorder %s19, 0
    %p233 = por %p231, %p232
    %p234 = scmp.ne.s32.totalorder %s220, %s221
    %p235 = scmp.eq.s32.totalorder %s20, 1
    %p236 = por %p234, %p235
    %p238 = scmp.ne.s32.totalorder %s221, %s237
    %p239 = scmp.eq.s32.totalorder %s20, 0
    %p240 = por %p238, %p239
    %p241 = scmp.le.s32.totalorder 1, %s14
    %p242 = scmp.lt.s32.totalorder %s14, 3
    %p243 = pnand %p241, %p242
    %p244 = pneg %p243
    // Predicated region
    $region9: #{loss_forward.5} parent=5 // pred_check
      _
    $region10: #{loss_forward.5} parent=5 // pred_check_branch
      %246 = sbr.rel (%p243) target = $region12
    $region11: #{loss_forward.5} parent=5 // pred_region
      %s247 = ssub.s32 %s14, 1
      // Predicated region
      $region13: #{loss_forward.5} parent=11 // pred_check
        %p248 = pneg %p129
      $region14: #{loss_forward.5} parent=11 // pred_check_branch
        %250 = sbr.rel (%p248) target = $region16
      $region15: #{loss_forward.5} parent=11 // pred_region
        _
      $region16: #{loss_forward.5} parent=11 // pred_fallthru
        _
    $region12: #{loss_forward.5} parent=5 // pred_fallthru
      _
    %p251 = scmp.lt.s32.totalorder %s14, 2
    // Predicated region
    $region17: #{loss_forward.5} parent=5 // pred_check
      %p252 = pneg %p251
    $region18: #{loss_forward.5} parent=5 // pred_check_branch
      %254 = sbr.rel (%p252) target = $region20
    $region19: #{loss_forward.5} parent=5 // pred_region
      // Predicated region
      $region21: #{loss_forward.5} parent=19 // pred_check
        %p255 = pneg %p46
      $region22: #{loss_forward.5} parent=19 // pred_check_branch
        %257 = sbr.rel (%p255) target = $region24
      $region23: #{loss_forward.5} parent=19 // pred_region
        %p258 = scmp.lt.s32.totalorder %s21, 1
        %s259 = scalar_select %p258, %s21, 1
        %s260 = smul.addr %s259, 2
        %s261 = smul.addr %s260, 8
        %s262 = scalar_lea.vmem %s0, %s261
      $region24: #{loss_forward.5} parent=19 // pred_fallthru
        _
      // Predicated region
      $region25: #{loss_forward.5} parent=19 // pred_check
        %p263 = pneg %p74
      $region26: #{loss_forward.5} parent=19 // pred_check_branch
        %265 = sbr.rel (%p263) target = $region28
      $region27: #{loss_forward.5} parent=19 // pred_region
        %s266 = smul.u32 2, %s22
        %p267 = scmp.lt.s32.totalorder %s21, 1
        %s268 = scalar_select %p267, %s21, 1
        %p269 = scmp.lt.s32.totalorder %s266, 1
        %s270 = scalar_select %p269, %s266, 1
        %s271 = smul.addr %s268, 2
        %s272 = sadd.s32 %s270, %s271
        %s273 = smul.addr %s272, 4
        %s274 = scalar_lea.vmem %s1, %s273
        %s275 = smul.u32 2, %s22
      $region28: #{loss_forward.5} parent=19 // pred_fallthru
        _
      // Predicated region
      $region29: #{loss_forward.5} parent=19 // pred_check
        %p276 = pneg %p102
      $region30: #{loss_forward.5} parent=19 // pred_check_branch
        %278 = sbr.rel (%p276) target = $region32
      $region31: #{loss_forward.5} parent=19 // pred_region
        %s279 = smul.u32 32, %s22
        %p280 = scmp.lt.s32.totalorder %s21, 1
        %s281 = scalar_select %p280, %s21, 1
        %p282 = scmp.lt.s32.totalorder %s279, 31
        %s283 = scalar_select %p282, %s279, 31
        %s284 = smul.addr %s281, 32
        %s285 = sadd.s32 %s283, %s284
        %s286 = smul.addr %s285, 8
        %s287 = scalar_lea.vmem %s2, %s286
        %s288 = smul.u32 32, %s22
      $region32: #{loss_forward.5} parent=19 // pred_fallthru
        _
    $region20: #{loss_forward.5} parent=5 // pred_fallthru
      _
    %p289 = scmp.le.s32.totalorder 1, %s14
    %p290 = scmp.lt.s32.totalorder %s14, 3
    %p291 = pnand %p289, %p290
    %p292 = pneg %p291
    // Predicated region
    $region33: #{loss_forward.5} parent=5 // pred_check
      _
    $region34: #{loss_forward.5} parent=5 // pred_check_branch
      %294 = sbr.rel (%p291) target = $region36
    $region35: #{loss_forward.5} parent=5 // pred_region
      %s295 = ssub.s32 %s14, 1
      %p296 = scmp.lt.s32.totalorder %s23, 1
      %s297 = scalar_select %p296, %s23, 1
      %s298 = smul.addr %s297, 2
      %s299 = smul.addr %s298, 8
      %s300 = scalar_lea.vmem %s0, %s299
      %p301 = pneg %p52
      %p302 = pneg %p49
      %s303 = smul.u32 2, %s24
      %p304 = scmp.lt.s32.totalorder %s23, 1
      %s305 = scalar_select %p304, %s23, 1
      %p306 = scmp.lt.s32.totalorder %s303, 1
      %s307 = scalar_select %p306, %s303, 1
      %s308 = smul.addr %s305, 2
      %s309 = sadd.s32 %s307, %s308
      %s310 = smul.addr %s309, 4
      %s311 = scalar_lea.vmem %s1, %s310
      %p312 = pneg %p80
      %p313 = pneg %p77
      %s314 = smul.u32 32, %s24
      %p315 = scmp.lt.s32.totalorder %s23, 1
      %s316 = scalar_select %p315, %s23, 1
      %p317 = scmp.lt.s32.totalorder %s314, 31
      %s318 = scalar_select %p317, %s314, 31
      %s319 = smul.addr %s316, 32
      %s320 = sadd.s32 %s318, %s319
      %s321 = smul.addr %s320, 8
      %s322 = scalar_lea.vmem %s2, %s321
      %p323 = pneg %p108
      %p324 = pneg %p105
      %p325 = pneg %p129
      %p326 = pneg %p126
      %p327 = pneg %p155
      %p328 = pneg %p152
      %p329 = scmp.lt.s32.totalorder %s23, 1
      %s330 = scalar_select %p329, %s23, 1
      %s331 = scalar_lea.vmem %s4, %s330
      %p332 = pneg %p181
      %p333 = pneg %p178
      %p334 = scmp.lt.s32.totalorder %s23, 1
      %s335 = scalar_select %p334, %s23, 1
      %s336 = scalar_lea.vmem %s5, %s335
      %p337 = pneg %p207
      %p338 = pneg %p204
      %p339 = scmp.lt.s32.totalorder %s23, 1
      %s340 = scalar_select %p339, %s23, 1
      %s341 = scalar_lea.vmem %s6, %s340
      %p342 = pneg %p233
      %p343 = pneg %p230
      %p344 = scmp.lt.s32.totalorder %s23, 1
      %s345 = scalar_select %p344, %s23, 1
      %s346 = smul.addr %s345, 2
      %s347 = scalar_lea.vmem %s7, %s346
      %p348 = scmp.lt.s32.totalorder %s23, 1
      %s349 = scalar_select %p348, %s23, 1
      %s350 = smul.addr %s349, 2
      %s351 = smul.addr %s350, 8
      %s352 = scalar_lea.vmem %s0, %s351
      %s353 = smul.u32 2, %s24
      %p354 = scmp.lt.s32.totalorder %s23, 1
      %s355 = scalar_select %p354, %s23, 1
      %p356 = scmp.lt.s32.totalorder %s353, 1
      %s357 = scalar_select %p356, %s353, 1
      %s358 = smul.addr %s355, 2
      %s359 = sadd.s32 %s357, %s358
      %s360 = smul.addr %s359, 4
      %s361 = scalar_lea.vmem %s1, %s360
      %s362 = smul.u32 2, %s24
      %s363 = smul.u32 32, %s24
      %p364 = scmp.lt.s32.totalorder %s23, 1
      %s365 = scalar_select %p364, %s23, 1
      %p366 = scmp.lt.s32.totalorder %s363, 31
      %s367 = scalar_select %p366, %s363, 31
      %s368 = smul.addr %s365, 32
      %s369 = sadd.s32 %s367, %s368
      %s370 = smul.addr %s369, 8
      %s371 = scalar_lea.vmem %s2, %s370
      %s372 = smul.u32 32, %s24
      %p373 = scmp.lt.s32.totalorder %s23, 1
      %s374 = scalar_select %p373, %s23, 1
      %s375 = scalar_lea.vmem %s4, %s374
      %p376 = scmp.lt.s32.totalorder %s23, 1
      %s377 = scalar_select %p376, %s23, 1
      %s378 = scalar_lea.vmem %s5, %s377
      %p379 = scmp.lt.s32.totalorder %s23, 1
      %s380 = scalar_select %p379, %s23, 1
      %s381 = scalar_lea.vmem %s6, %s380
      %p382 = scmp.lt.s32.totalorder %s23, 1
      %s383 = scalar_select %p382, %s23, 1
      %s384 = smul.addr %s383, 2
      %s385 = scalar_lea.vmem %s7, %s384
      %p386 = scmp.eq.s32.totalorder %s24, 0
      // Predicated region
      $region37: #{loss_forward.5} parent=35 // pred_check
        %p387 = pneg %p386
      $region38: #{loss_forward.5} parent=35 // pred_check_branch
        %389 = sbr.rel (%p387) target = $region40
      $region39: #{loss_forward.5} parent=35 // pred_region
        %v390 = vlaneseq
        %vm391 = vcmp.ge.s32.totalorder %v390, 0
        %vm392 = vcmp.lt.s32.totalorder %v390, 256
        %vm393 = vmand %vm391, %vm392
        %394 = vst.msk [vmem:[#allocation4] sm:$0x3] %vm393, 3e+38
        %395 = vst.msk [vmem:[#allocation5] sm:$0x3] %vm393, 0.0
        %vm396 = vcmask 0
        %397 = vst.msk [vmem:[#allocation6] sm:$0x1] %vm396, 0.0
        %v398 = vld [vmem:[%s352] sm:$0x7]
        %v399 = vld [vmem:[%s352 + $0x8] sm:$0x7]
        %v400 = vmul.f32 %v398, %v398
        %v401 = vmul.f32 %v399, %v399
        %vm402 = vcmask 1042432
        %v403 = vsel %vm402, %v400, 0.0
        %v404 = vrot.slane %v403, 4
        %v405 = vadd.f32 %v403, %v404
        %v406 = vrot.slane %v405, 2
        %v407 = vadd.f32 %v405, %v406
        %v408 = vrot.slane %v407, 1
        %v409 = vadd.f32 %v407, %v408
        %v410 = vsel %vm402, %v401, 0.0
        %v411 = vrot.slane %v410, 4
        %v412 = vadd.f32 %v410, %v411
        %v413 = vrot.slane %v412, 2
        %v414 = vadd.f32 %v412, %v413
        %v415 = vrot.slane %v414, 1
        %v416 = vadd.f32 %v414, %v415
        %417 = vst [vmem:[#allocation2] sm:$0x7] %v398
        %418 = vst [vmem:[#allocation2 + $0x8] sm:$0x7] %v399
        %v421 = vcombine.low %v409, %v416
        %v423 = vunpack.c.l.s4 1966171168
        %v424 = vunpack.c.0.s8 %v423
        %v425 = vlaneseq
        %v426 = vshrl.u32 %v425, 7
        %v427 = vsub.s32 %v424, %v426
        %v428 = vrot.slane %v421, %v427
        %v430 = vunpack.c.l.s4 1966171168
        %v431 = vunpack.c.0.s8 %v430
        %v432 = vlaneseq
        %v433 = vshrl.u32 %v432, 7
        %v434 = vsub.s32 %v431, %v433
        %v435 = vrot.slane %v428, %v434
        %s437 = scalar_lea.vmem [#allocation2], 3
        %438 = vst.msk [vmem:[%s437] ss:$8 sm:$0x3] %vm393, %v435
        %439 = vst.msk [vmem:[%s437] ss:$8 sm:$0x0] %vm393, %v435
        %s440 = scalar_lea.vmem [#allocation2], 4
        %441 = vst.msk [vmem:[%s440] ss:$8 sm:$0x3] %vm393, 1.0
        %442 = vst.msk [vmem:[%s440] ss:$8 sm:$0x0] %vm393, 1.0
        %443 = vst [vmem:[#allocation2] sm:$0xe0] 0.0
        %444 = vst [vmem:[#allocation2 + $0x8] sm:$0xe0] 0.0
        %s445 = scalar_lea.vmem [#allocation3], 3
        %446 = vst.msk [vmem:[%s445] ss:$8 sm:$0x3] %vm393, 1.0
        %447 = vst.msk [vmem:[%s445] ss:$8 sm:$0x0] %vm393, 1.0
        %448 = vst [vmem:[#allocation3] sm:$0xe0] 0.0
        %449 = vst [vmem:[#allocation3 + $0x8] sm:$0xe0] 0.0
      $region40: #{loss_forward.5} parent=35 // pred_fallthru
        _
      %v450 = vld [vmem:[%s361] sm:$0x77]
      %v451 = vmul.f32 %v450, -2.0
      %v453 = vcombine.high %v451, %v451
      %455 = vst [vmem:[#allocation3] sm:$0x7] %v451
      %456 = vst [vmem:[#allocation3 + $0x8] sm:$0x7] %v453
      %v457 = vmul.f32 %v450, %v450
      %v459 = vcombine.high %v457, %v457
      %vm461 = vcmask 1042432
      %v462 = vsel %vm461, %v457, 0.0
      %v463 = vrot.slane %v462, 4
      %v464 = vadd.f32 %v462, %v463
      %v465 = vrot.slane %v464, 2
      %v466 = vadd.f32 %v464, %v465
      %v467 = vrot.slane %v466, 1
      %v468 = vadd.f32 %v466, %v467
      %v469 = vsel %vm461, %v459, 0.0
      %v470 = vrot.slane %v469, 4
      %v471 = vadd.f32 %v469, %v470
      %v472 = vrot.slane %v471, 2
      %v473 = vadd.f32 %v471, %v472
      %v474 = vrot.slane %v473, 1
      %v475 = vadd.f32 %v473, %v474
      %v478 = vcombine.low %v468, %v475
      %v480 = vunpack.c.l.s4 1966171168
      %v481 = vunpack.c.0.s8 %v480
      %v482 = vlaneseq
      %v483 = vshrl.u32 %v482, 7
      %v484 = vsub.s32 %v481, %v483
      %v485 = vrot.slane %v478, %v484
      %v487 = vunpack.c.l.s4 1966171168
      %v488 = vunpack.c.0.s8 %v487
      %v489 = vlaneseq
      %v490 = vshrl.u32 %v489, 7
      %v491 = vsub.s32 %v488, %v490
      %v492 = vrot.slane %v485, %v491
      %v494 = vlaneseq
      %vm495 = vcmp.ge.s32.totalorder %v494, 0
      %vm496 = vcmp.lt.s32.totalorder %v494, 256
      %vm497 = vmand %vm495, %vm496
      %s498 = scalar_lea.vmem [#allocation3], 4
      %499 = vst.msk [vmem:[%s498] ss:$8 sm:$0x3] %vm497, %v492
      %500 = vst.msk [vmem:[%s498] ss:$8 sm:$0x0] %vm497, %v492
      %v501 = vld [vmem:[#allocation3] sm:$0xff]
      %v502 = vld [vmem:[#allocation3 + $0x8] sm:$0xff]
      %v503 = vld [vmem:[#allocation2] sm:$0xff]
      %v504 = vld [vmem:[#allocation2 + $0x8] sm:$0xff]
      %505 = vxpose.xlu0.b32.start [1/16] %v501, 128
      %506 = vxpose.xlu0.b32.cont [2/16] 0.0, 128
      %507 = vxpose.xlu0.b32.cont [3/16] 0.0, 128
      %508 = vxpose.xlu0.b32.cont [4/16] 0.0, 128
      %509 = vxpose.xlu0.b32.cont [5/16] 0.0, 128
      %510 = vxpose.xlu0.b32.cont [6/16] 0.0, 128
      %511 = vxpose.xlu0.b32.cont [7/16] 0.0, 128
      %512 = vxpose.xlu0.b32.cont [8/16] 0.0, 128
      %513 = vxpose.xlu0.b32.cont [9/16] 0.0, 128
      %514 = vxpose.xlu0.b32.cont [10/16] 0.0, 128
      %515 = vxpose.xlu0.b32.cont [11/16] 0.0, 128
      %516 = vxpose.xlu0.b32.cont [12/16] 0.0, 128
      %517 = vxpose.xlu0.b32.cont [13/16] 0.0, 128
      %518 = vxpose.xlu0.b32.cont [14/16] 0.0, 128
      %519 = vxpose.xlu0.b32.cont [15/16] 0.0, 128
      %520 = vxpose.xlu0.b32.end [16/16] 0.0, 128
      %v521 = vpop.trf.xlu0
      %v522 = vpop.trf.xlu0
      %v523 = vpop.trf.xlu0
      %v524 = vpop.trf.xlu0
      %v525 = vpop.trf.xlu0
      %v526 = vpop.trf.xlu0
      %v527 = vpop.trf.xlu0
      %v528 = vpop.trf.xlu0
      %v529 = vpop.trf.xlu0
      %v530 = vpop.trf.xlu0
      %v531 = vpop.trf.xlu0
      %v532 = vpop.trf.xlu0
      %v533 = vpop.trf.xlu0
      %v534 = vpop.trf.xlu0
      %v535 = vpop.trf.xlu0
      %v536 = vpop.trf.xlu0
      %537 = vxpose.xlu0.b32.start [1/16] %v502, 128
      %538 = vxpose.xlu0.b32.cont [2/16] 0.0, 128
      %539 = vxpose.xlu0.b32.cont [3/16] 0.0, 128
      %540 = vxpose.xlu0.b32.cont [4/16] 0.0, 128
      %541 = vxpose.xlu0.b32.cont [5/16] 0.0, 128
      %542 = vxpose.xlu0.b32.cont [6/16] 0.0, 128
      %543 = vxpose.xlu0.b32.cont [7/16] 0.0, 128
      %544 = vxpose.xlu0.b32.cont [8/16] 0.0, 128
      %545 = vxpose.xlu0.b32.cont [9/16] 0.0, 128
      %546 = vxpose.xlu0.b32.cont [10/16] 0.0, 128
      %547 = vxpose.xlu0.b32.cont [11/16] 0.0, 128
      %548 = vxpose.xlu0.b32.cont [12/16] 0.0, 128
      %549 = vxpose.xlu0.b32.cont [13/16] 0.0, 128
      %550 = vxpose.xlu0.b32.cont [14/16] 0.0, 128
      %551 = vxpose.xlu0.b32.cont [15/16] 0.0, 128
      %552 = vxpose.xlu0.b32.end [16/16] 0.0, 128
      %v553 = vpop.trf.xlu0
      %v554 = vpop.trf.xlu0
      %v555 = vpop.trf.xlu0
      %v556 = vpop.trf.xlu0
      %v557 = vpop.trf.xlu0
      %v558 = vpop.trf.xlu0
      %v559 = vpop.trf.xlu0
      %v560 = vpop.trf.xlu0
      %v561 = vpop.trf.xlu0
      %v562 = vpop.trf.xlu0
      %v563 = vpop.trf.xlu0
      %v564 = vpop.trf.xlu0
      %v565 = vpop.trf.xlu0
      %v566 = vpop.trf.xlu0
      %v567 = vpop.trf.xlu0
      %v568 = vpop.trf.xlu0
      %vm569 = vcmask 64512
      %v571 = vsel %vm569, %v521, 0
      %v574 = vsel %vm569, %v522, 0
      %v577 = vsel %vm569, %v523, 0
      %v580 = vsel %vm569, %v524, 0
      %v583 = vsel %vm569, %v525, 0
      %v586 = vsel %vm569, %v526, 0
      %v589 = vsel %vm569, %v527, 0
      %v592 = vsel %vm569, %v528, 0
      %v595 = vsel %vm569, %v529, 0
      %v598 = vsel %vm569, %v530, 0
      %v601 = vsel %vm569, %v531, 0
      %v604 = vsel %vm569, %v532, 0
      %v607 = vsel %vm569, %v533, 0
      %v610 = vsel %vm569, %v534, 0
      %v613 = vsel %vm569, %v535, 0
      %v616 = vsel %vm569, %v536, 0
      %v619 = vsel %vm569, %v553, 0
      %v622 = vsel %vm569, %v554, 0
      %v625 = vsel %vm569, %v555, 0
      %v628 = vsel %vm569, %v556, 0
      %v631 = vsel %vm569, %v557, 0
      %v634 = vsel %vm569, %v558, 0
      %v637 = vsel %vm569, %v559, 0
      %v640 = vsel %vm569, %v560, 0
      %v643 = vsel %vm569, %v561, 0
      %v646 = vsel %vm569, %v562, 0
      %v649 = vsel %vm569, %v563, 0
      %v652 = vsel %vm569, %v564, 0
      %v655 = vsel %vm569, %v565, 0
      %v658 = vsel %vm569, %v566, 0
      %v661 = vsel %vm569, %v567, 0
      %v664 = vsel %vm569, %v568, 0
      %666 = vmatprep.subr.mxu0 %v504
      %667 = vmatpush1.msra.mxu0 %v503
      %668 = vmatprep.subr.mxu0 0.0
      %669 = vmatpush1.msra.mxu0 0.0
      %670 = vmatprep.subr.mxu0 0.0
      %671 = vmatpush1.msra.mxu0 0.0
      %672 = vmatprep.subr.mxu0 0.0
      %673 = vmatpush1.msra.mxu0 0.0
      %674 = vmatprep.subr.mxu0 0.0
      %675 = vmatpush1.msra.mxu0 0.0
      %676 = vmatprep.subr.mxu0 0.0
      %677 = vmatpush1.msra.mxu0 0.0
      %678 = vmatprep.subr.mxu0 0.0
      %679 = vmatpush1.msra.mxu0 0.0
      %680 = vmatprep.subr.mxu0 0.0
      %681 = vmatpush1.msra.mxu0 0.0
      %682 = vmatprep.subr.mxu0 0.0
      %683 = vmatpush1.msra.mxu0 0.0
      %684 = vmatprep.subr.mxu0 0.0
      %685 = vmatpush1.msra.mxu0 0.0
      %686 = vmatprep.subr.mxu0 0.0
      %687 = vmatpush1.msra.mxu0 0.0
      %688 = vmatprep.subr.mxu0 0.0
      %689 = vmatpush1.msra.mxu0 0.0
      %690 = vmatprep.subr.mxu0 0.0
      %691 = vmatpush1.msra.mxu0 0.0
      %692 = vmatprep.subr.mxu0 0.0
      %693 = vmatpush1.msra.mxu0 0.0
      %694 = vmatprep.subr.mxu0 0.0
      %695 = vmatpush1.msra.mxu0 0.0
      %696 = vmatprep.subr.mxu0 0.0
      %697 = vmatpush1.msra.mxu0 0.0
      %698 = vmatprep.subr.mxu0 0.0
      %699 = vmatpush1.msra.mxu0 0.0
      %700 = vmatprep.subr.mxu0 0.0
      %701 = vmatpush1.msra.mxu0 0.0
      %702 = vmatprep.subr.mxu0 0.0
      %703 = vmatpush1.msra.mxu0 0.0
      %704 = vmatprep.subr.mxu0 0.0
      %705 = vmatpush1.msra.mxu0 0.0
      %706 = vmatprep.subr.mxu0 0.0
      %707 = vmatpush1.msra.mxu0 0.0
      %708 = vmatprep.subr.mxu0 0.0
      %709 = vmatpush1.msra.mxu0 0.0
      %710 = vmatprep.subr.mxu0 0.0
      %711 = vmatpush1.msra.mxu0 0.0
      %712 = vmatprep.subr.mxu0 0.0
      %713 = vmatpush1.msra.mxu0 0.0
      %714 = vmatprep.subr.mxu0 0.0
      %715 = vmatpush1.msra.mxu0 0.0
      %716 = vmatprep.subr.mxu0 0.0
      %717 = vmatpush1.msra.mxu0 0.0
      %718 = vmatprep.subr.mxu0 0.0
      %719 = vmatpush1.msra.mxu0 0.0
      %720 = vmatprep.subr.mxu0 0.0
      %721 = vmatpush1.msra.mxu0 0.0
      %722 = vmatprep.subr.mxu0 0.0
      %723 = vmatpush1.msra.mxu0 0.0
      %724 = vmatprep.subr.mxu0 0.0
      %725 = vmatpush1.msra.mxu0 0.0
      %726 = vmatprep.subr.mxu0 0.0
      %727 = vmatpush1.msra.mxu0 0.0
      %728 = vmatprep.subr.mxu0 0.0
      %729 = vmatpush1.msra.mxu0 0.0
      %730 = vmatprep.mubr.f32.mxu0 0.0
      %731 = vmatmul.mubr.f32.gmra.mrb[0].mxu0 %v571
      %v732 = vpop.f32.mrb[0].mxu0
      %v733 = vadd.f32 0.0, %v732
      %v734 = vpop.f32.mrb[0].mxu0
      %v735 = vadd.f32 0.0, %v734
      %736 = vmatprep.mubr.f32.mxu0 0.0
      %737 = vmatmul.mubr.f32.gmra.mrb[0].mxu0 %v574
      %v738 = vpop.f32.mrb[0].mxu0
      %v739 = vadd.f32 0.0, %v738
      %v740 = vpop.f32.mrb[0].mxu0
      %v741 = vadd.f32 0.0, %v740
      %742 = vmatprep.mubr.f32.mxu0 0.0
      %743 = vmatmul.mubr.f32.gmra.mrb[0].mxu0 %v577
      %v744 = vpop.f32.mrb[0].mxu0
      %v745 = vadd.f32 0.0, %v744
      %v746 = vpop.f32.mrb[0].mxu0
      %v747 = vadd.f32 0.0, %v746
      %748 = vmatprep.mubr.f32.mxu0 0.0
      %749 = vmatmul.mubr.f32.gmra.mrb[0].mxu0 %v580
      %v750 = vpop.f32.mrb[0].mxu0
      %v751 = vadd.f32 0.0, %v750
      %v752 = vpop.f32.mrb[0].mxu0
      %v753 = vadd.f32 0.0, %v752
      %754 = vmatprep.mubr.f32.mxu0 0.0
      %755 = vmatmul.mubr.f32.gmra.mrb[0].mxu0 %v583
      %v756 = vpop.f32.mrb[0].mxu0
      %v757 = vadd.f32 0.0, %v756
      %v758 = vpop.f32.mrb[0].mxu0
      %v759 = vadd.f32 0.0, %v758
      %760 = vmatprep.mubr.f32.mxu0 0.0
      %761 = vmatmul.mubr.f32.gmra.mrb[0].mxu0 %v586
      %v762 = vpop.f32.mrb[0].mxu0
      %v763 = vadd.f32 0.0, %v762
      %v764 = vpop.f32.mrb[0].mxu0
      %v765 = vadd.f32 0.0, %v764
      %766 = vmatprep.mubr.f32.mxu0 0.0
      %767 = vmatmul.mubr.f32.gmra.mrb[0].mxu0 %v589
      %v768 = vpop.f32.mrb[0].mxu0
      %v769 = vadd.f32 0.0, %v768
      %v770 = vpop.f32.mrb[0].mxu0
      %v771 = vadd.f32 0.0, %v770
      %772 = vmatprep.mubr.f32.mxu0 0.0
      %773 = vmatmul.mubr.f32.gmra.mrb[0].mxu0 %v592
      %v774 = vpop.f32.mrb[0].mxu0
      %v775 = vadd.f32 0.0, %v774
      %v776 = vpop.f32.mrb[0].mxu0
      %v777 = vadd.f32 0.0, %v776
      %778 = vmatprep.mubr.f32.mxu0 0.0
      %779 = vmatmul.mubr.f32.gmra.mrb[0].mxu0 %v595
      %v780 = vpop.f32.mrb[0].mxu0
      %v781 = vadd.f32 0.0, %v780
      %v782 = vpop.f32.mrb[0].mxu0
      %v783 = vadd.f32 0.0, %v782
      %784 = vmatprep.mubr.f32.mxu0 0.0
      %785 = vmatmul.mubr.f32.gmra.mrb[0].mxu0 %v598
      %v786 = vpop.f32.mrb[0].mxu0
      %v787 = vadd.f32 0.0, %v786
      %v788 = vpop.f32.mrb[0].mxu0
      %v789 = vadd.f32 0.0, %v788
      %790 = vmatprep.mubr.f32.mxu0 0.0
      %791 = vmatmul.mubr.f32.gmra.mrb[0].mxu0 %v601
      %v792 = vpop.f32.mrb[0].mxu0
      %v793 = vadd.f32 0.0, %v792
      %v794 = vpop.f32.mrb[0].mxu0
      %v795 = vadd.f32 0.0, %v794
      %796 = vmatprep.mubr.f32.mxu0 0.0
      %797 = vmatmul.mubr.f32.gmra.mrb[0].mxu0 %v604
      %v798 = vpop.f32.mrb[0].mxu0
      %v799 = vadd.f32 0.0, %v798
      %v800 = vpop.f32.mrb[0].mxu0
      %v801 = vadd.f32 0.0, %v800
      %802 = vmatprep.mubr.f32.mxu0 0.0
      %803 = vmatmul.mubr.f32.gmra.mrb[0].mxu0 %v607
      %v804 = vpop.f32.mrb[0].mxu0
      %v805 = vadd.f32 0.0, %v804
      %v806 = vpop.f32.mrb[0].mxu0
      %v807 = vadd.f32 0.0, %v806
      %808 = vmatprep.mubr.f32.mxu0 0.0
      %809 = vmatmul.mubr.f32.gmra.mrb[0].mxu0 %v610
      %v810 = vpop.f32.mrb[0].mxu0
      %v811 = vadd.f32 0.0, %v810
      %v812 = vpop.f32.mrb[0].mxu0
      %v813 = vadd.f32 0.0, %v812
      %814 = vmatprep.mubr.f32.mxu0 0.0
      %815 = vmatmul.mubr.f32.gmra.mrb[0].mxu0 %v613
      %v816 = vpop.f32.mrb[0].mxu0
      %v817 = vadd.f32 0.0, %v816
      %v818 = vpop.f32.mrb[0].mxu0
      %v819 = vadd.f32 0.0, %v818
      %820 = vmatprep.mubr.f32.mxu0 0.0
      %821 = vmatmul.mubr.f32.gmra.mrb[0].mxu0 %v616
      %v822 = vpop.f32.mrb[0].mxu0
      %v823 = vadd.f32 0.0, %v822
      %v824 = vpop.f32.mrb[0].mxu0
      %v825 = vadd.f32 0.0, %v824
      %826 = vmatprep.mubr.f32.mxu0 0.0
      %827 = vmatmul.mubr.f32.gmra.mrb[0].mxu0 %v619
      %v828 = vpop.f32.mrb[0].mxu0
      %v829 = vadd.f32 0.0, %v828
      %v830 = vpop.f32.mrb[0].mxu0
      %v831 = vadd.f32 0.0, %v830
      %832 = vmatprep.mubr.f32.mxu0 0.0
      %833 = vmatmul.mubr.f32.gmra.mrb[0].mxu0 %v622
      %v834 = vpop.f32.mrb[0].mxu0
      %v835 = vadd.f32 0.0, %v834
      %v836 = vpop.f32.mrb[0].mxu0
      %v837 = vadd.f32 0.0, %v836
      %838 = vmatprep.mubr.f32.mxu0 0.0
      %839 = vmatmul.mubr.f32.gmra.mrb[0].mxu0 %v625
      %v840 = vpop.f32.mrb[0].mxu0
      %v841 = vadd.f32 0.0, %v840
      %v842 = vpop.f32.mrb[0].mxu0
      %v843 = vadd.f32 0.0, %v842
      %844 = vmatprep.mubr.f32.mxu0 0.0
      %845 = vmatmul.mubr.f32.gmra.mrb[0].mxu0 %v628
      %v846 = vpop.f32.mrb[0].mxu0
      %v847 = vadd.f32 0.0, %v846
      %v848 = vpop.f32.mrb[0].mxu0
      %v849 = vadd.f32 0.0, %v848
      %850 = vmatprep.mubr.f32.mxu0 0.0
      %851 = vmatmul.mubr.f32.gmra.mrb[0].mxu0 %v631
      %v852 = vpop.f32.mrb[0].mxu0
      %v853 = vadd.f32 0.0, %v852
      %v854 = vpop.f32.mrb[0].mxu0
      %v855 = vadd.f32 0.0, %v854
      %856 = vmatprep.mubr.f32.mxu0 0.0
      %857 = vmatmul.mubr.f32.gmra.mrb[0].mxu0 %v634
      %v858 = vpop.f32.mrb[0].mxu0
      %v859 = vadd.f32 0.0, %v858
      %v860 = vpop.f32.mrb[0].mxu0
      %v861 = vadd.f32 0.0, %v860
      %862 = vmatprep.mubr.f32.mxu0 0.0
      %863 = vmatmul.mubr.f32.gmra.mrb[0].mxu0 %v637
      %v864 = vpop.f32.mrb[0].mxu0
      %v865 = vadd.f32 0.0, %v864
      %v866 = vpop.f32.mrb[0].mxu0
      %v867 = vadd.f32 0.0, %v866
      %868 = vmatprep.mubr.f32.mxu0 0.0
      %869 = vmatmul.mubr.f32.gmra.mrb[0].mxu0 %v640
      %v870 = vpop.f32.mrb[0].mxu0
      %v871 = vadd.f32 0.0, %v870
      %v872 = vpop.f32.mrb[0].mxu0
      %v873 = vadd.f32 0.0, %v872
      %874 = vmatprep.mubr.f32.mxu0 0.0
      %875 = vmatmul.mubr.f32.gmra.mrb[0].mxu0 %v643
      %v876 = vpop.f32.mrb[0].mxu0
      %v877 = vadd.f32 0.0, %v876
      %v878 = vpop.f32.mrb[0].mxu0
      %v879 = vadd.f32 0.0, %v878
      %880 = vmatprep.mubr.f32.mxu0 0.0
      %881 = vmatmul.mubr.f32.gmra.mrb[0].mxu0 %v646
      %v882 = vpop.f32.mrb[0].mxu0
      %v883 = vadd.f32 0.0, %v882
      %v884 = vpop.f32.mrb[0].mxu0
      %v885 = vadd.f32 0.0, %v884
      %886 = vmatprep.mubr.f32.mxu0 0.0
      %887 = vmatmul.mubr.f32.gmra.mrb[0].mxu0 %v649
      %v888 = vpop.f32.mrb[0].mxu0
      %v889 = vadd.f32 0.0, %v888
      %v890 = vpop.f32.mrb[0].mxu0
      %v891 = vadd.f32 0.0, %v890
      %892 = vmatprep.mubr.f32.mxu0 0.0
      %893 = vmatmul.mubr.f32.gmra.mrb[0].mxu0 %v652
      %v894 = vpop.f32.mrb[0].mxu0
      %v895 = vadd.f32 0.0, %v894
      %v896 = vpop.f32.mrb[0].mxu0
      %v897 = vadd.f32 0.0, %v896
      %898 = vmatprep.mubr.f32.mxu0 0.0
      %899 = vmatmul.mubr.f32.gmra.mrb[0].mxu0 %v655
      %v900 = vpop.f32.mrb[0].mxu0
      %v901 = vadd.f32 0.0, %v900
      %v902 = vpop.f32.mrb[0].mxu0
      %v903 = vadd.f32 0.0, %v902
      %904 = vmatprep.mubr.f32.mxu0 0.0
      %905 = vmatmul.mubr.f32.gmra.mrb[0].mxu0 %v658
      %v906 = vpop.f32.mrb[0].mxu0
      %v907 = vadd.f32 0.0, %v906
      %v908 = vpop.f32.mrb[0].mxu0
      %v909 = vadd.f32 0.0, %v908
      %910 = vmatprep.mubr.f32.mxu0 0.0
      %911 = vmatmul.mubr.f32.gmra.mrb[0].mxu0 %v661
      %v912 = vpop.f32.mrb[0].mxu0
      %v913 = vadd.f32 0.0, %v912
      %v914 = vpop.f32.mrb[0].mxu0
      %v915 = vadd.f32 0.0, %v914
      %916 = vmatprep.mubr.f32.mxu0 0.0
      %917 = vmatmul.mubr.f32.gmra.mrb[0].mxu0 %v664
      %v918 = vpop.f32.mrb[0].mxu0
      %v919 = vadd.f32 0.0, %v918
      %v920 = vpop.f32.mrb[0].mxu0
      %v921 = vadd.f32 0.0, %v920
      %922 = vdwg.mxu0
      %v923 = vmin.f32 %v733, %v745
      %v924 = vmin.f32 %v739, %v751
      %v925 = vmin.f32 %v923, %v757
      %v926 = vmin.f32 %v924, %v763
      %v927 = vmin.f32 %v925, %v769
      %v928 = vmin.f32 %v926, %v775
      %v929 = vmin.f32 %v927, %v781
      %v930 = vmin.f32 %v928, %v787
      %v931 = vmin.f32 %v929, %v793
      %v932 = vmin.f32 %v930, %v799
      %v933 = vmin.f32 %v931, %v805
      %v934 = vmin.f32 %v932, %v811
      %v935 = vmin.f32 %v933, %v817
      %v936 = vmin.f32 %v934, %v823
      %v937 = vmin.f32 %v935, %v829
      %v938 = vmin.f32 %v936, %v835
      %v939 = vmin.f32 %v937, %v841
      %v940 = vmin.f32 %v938, %v847
      %v941 = vmin.f32 %v939, %v853
      %v942 = vmin.f32 %v940, %v859
      %v943 = vmin.f32 %v941, %v865
      %v944 = vmin.f32 %v942, %v871
      %v945 = vmin.f32 %v943, %v877
      %v946 = vmin.f32 %v944, %v883
      %v947 = vmin.f32 %v945, %v889
      %v948 = vmin.f32 %v946, %v895
      %v949 = vmin.f32 %v947, %v901
      %v950 = vmin.f32 %v948, %v907
      %v951 = vmin.f32 %v949, %v913
      %v952 = vmin.f32 %v950, %v919
      %v953 = vmin.f32 %v951, %v952
      %v954 = vrot.slane %v953, 4
      %v955 = vmin.f32 %v953, %v954
      %v956 = vrot.slane %v955, 2
      %v957 = vmin.f32 %v955, %v956
      %v958 = vrot.slane %v957, 1
      %v959 = vmin.f32 %v957, %v958
      %v960 = vmin.f32 %v735, %v747
      %v961 = vmin.f32 %v741, %v753
      %v962 = vmin.f32 %v960, %v759
      %v963 = vmin.f32 %v961, %v765
      %v964 = vmin.f32 %v962, %v771
      %v965 = vmin.f32 %v963, %v777
      %v966 = vmin.f32 %v964, %v783
      %v967 = vmin.f32 %v965, %v789
      %v968 = vmin.f32 %v966, %v795
      %v969 = vmin.f32 %v967, %v801
      %v970 = vmin.f32 %v968, %v807
      %v971 = vmin.f32 %v969, %v813
      %v972 = vmin.f32 %v970, %v819
      %v973 = vmin.f32 %v971, %v825
      %v974 = vmin.f32 %v972, %v831
      %v975 = vmin.f32 %v973, %v837
      %v976 = vmin.f32 %v974, %v843
      %v977 = vmin.f32 %v975, %v849
      %v978 = vmin.f32 %v976, %v855
      %v979 = vmin.f32 %v977, %v861
      %v980 = vmin.f32 %v978, %v867
      %v981 = vmin.f32 %v979, %v873
      %v982 = vmin.f32 %v980, %v879
      %v983 = vmin.f32 %v981, %v885
      %v984 = vmin.f32 %v982, %v891
      %v985 = vmin.f32 %v983, %v897
      %v986 = vmin.f32 %v984, %v903
      %v987 = vmin.f32 %v985, %v909
      %v988 = vmin.f32 %v986, %v915
      %v989 = vmin.f32 %v987, %v921
      %v990 = vmin.f32 %v988, %v989
      %v991 = vrot.slane %v990, 4
      %v992 = vmin.f32 %v990, %v991
      %v993 = vrot.slane %v992, 2
      %v994 = vmin.f32 %v992, %v993
      %v995 = vrot.slane %v994, 1
      %v996 = vmin.f32 %v994, %v995
      %v997 = vld [vmem:[%s371] sm:$0xff]
      %v998 = vld [vmem:[%s371 + $0x8] sm:$0xff]
      %v999 = vld [vmem:[%s371 + $0x10] sm:$0xff]
      %v1000 = vld [vmem:[%s371 + $0x18] sm:$0xff]
      %v1001 = vld [vmem:[%s371 + $0x20] sm:$0xff]
      %v1002 = vld [vmem:[%s371 + $0x28] sm:$0xff]
      %v1003 = vld [vmem:[%s371 + $0x30] sm:$0xff]
      %v1004 = vld [vmem:[%s371 + $0x38] sm:$0xff]
      %v1005 = vld [vmem:[%s371 + $0x40] sm:$0xff]
      %v1006 = vld [vmem:[%s371 + $0x48] sm:$0xff]
      %v1007 = vld [vmem:[%s371 + $0x50] sm:$0xff]
      %v1008 = vld [vmem:[%s371 + $0x58] sm:$0xff]
      %v1009 = vld [vmem:[%s371 + $0x60] sm:$0xff]
      %v1010 = vld [vmem:[%s371 + $0x68] sm:$0xff]
      %v1011 = vld [vmem:[%s371 + $0x70] sm:$0xff]
      %v1012 = vld [vmem:[%s371 + $0x78] sm:$0xff]
      %v1013 = vld [vmem:[%s371 + $0x80] sm:$0xff]
      %v1014 = vld [vmem:[%s371 + $0x88] sm:$0xff]
      %v1015 = vld [vmem:[%s371 + $0x90] sm:$0xff]
      %v1016 = vld [vmem:[%s371 + $0x98] sm:$0xff]
      %v1017 = vld [vmem:[%s371 + $0xa0] sm:$0xff]
      %v1018 = vld [vmem:[%s371 + $0xa8] sm:$0xff]
      %v1019 = vld [vmem:[%s371 + $0xb0] sm:$0xff]
      %v1020 = vld [vmem:[%s371 + $0xb8] sm:$0xff]
      %v1021 = vld [vmem:[%s371 + $0xc0] sm:$0xff]
      %v1022 = vld [vmem:[%s371 + $0xc8] sm:$0xff]
      %v1023 = vld [vmem:[%s371 + $0xd0] sm:$0xff]
      %v1024 = vld [vmem:[%s371 + $0xd8] sm:$0xff]
      %v1025 = vld [vmem:[%s371 + $0xe0] sm:$0xff]
      %v1026 = vld [vmem:[%s371 + $0xe8] sm:$0xff]
      %v1027 = vld [vmem:[%s371 + $0xf0] sm:$0xff]
      %v1028 = vld [vmem:[%s371 + $0xf8] sm:$0xff]
      %vm1029 = vcmp.le.f32.partialorder %v733, %v959
      %vm1030 = vcmp.le.f32.partialorder %v735, %v996
      %vm1031 = vcmp.le.f32.partialorder %v739, %v959
      %vm1032 = vcmp.le.f32.partialorder %v741, %v996
      %vm1033 = vcmp.le.f32.partialorder %v745, %v959
      %vm1034 = vcmp.le.f32.partialorder %v747, %v996
      %vm1035 = vcmp.le.f32.partialorder %v751, %v959
      %vm1036 = vcmp.le.f32.partialorder %v753, %v996
      %vm1037 = vcmp.le.f32.partialorder %v757, %v959
      %vm1038 = vcmp.le.f32.partialorder %v759, %v996
      %vm1039 = vcmp.le.f32.partialorder %v763, %v959
      %vm1040 = vcmp.le.f32.partialorder %v765, %v996
      %vm1041 = vcmp.le.f32.partialorder %v769, %v959
      %vm1042 = vcmp.le.f32.partialorder %v771, %v996
      %vm1043 = vcmp.le.f32.partialorder %v775, %v959
      %vm1044 = vcmp.le.f32.partialorder %v777, %v996
      %vm1045 = vcmp.le.f32.partialorder %v781, %v959
      %vm1046 = vcmp.le.f32.partialorder %v783, %v996
      %vm1047 = vcmp.le.f32.partialorder %v787, %v959
      %vm1048 = vcmp.le.f32.partialorder %v789, %v996
      %vm1049 = vcmp.le.f32.partialorder %v793, %v959
      %vm1050 = vcmp.le.f32.partialorder %v795, %v996
      %vm1051 = vcmp.le.f32.partialorder %v799, %v959
      %vm1052 = vcmp.le.f32.partialorder %v801, %v996
      %vm1053 = vcmp.le.f32.partialorder %v805, %v959
      %vm1054 = vcmp.le.f32.partialorder %v807, %v996
      %vm1055 = vcmp.le.f32.partialorder %v811, %v959
      %vm1056 = vcmp.le.f32.partialorder %v813, %v996
      %vm1057 = vcmp.le.f32.partialorder %v817, %v959
      %vm1058 = vcmp.le.f32.partialorder %v819, %v996
      %vm1059 = vcmp.le.f32.partialorder %v823, %v959
      %vm1060 = vcmp.le.f32.partialorder %v825, %v996
      %vm1061 = vcmp.le.f32.partialorder %v829, %v959
      %vm1062 = vcmp.le.f32.partialorder %v831, %v996
      %vm1063 = vcmp.le.f32.partialorder %v835, %v959
      %vm1064 = vcmp.le.f32.partialorder %v837, %v996
      %vm1065 = vcmp.le.f32.partialorder %v841, %v959
      %vm1066 = vcmp.le.f32.partialorder %v843, %v996
      %vm1067 = vcmp.le.f32.partialorder %v847, %v959
      %vm1068 = vcmp.le.f32.partialorder %v849, %v996
      %vm1069 = vcmp.le.f32.partialorder %v853, %v959
      %vm1070 = vcmp.le.f32.partialorder %v855, %v996
      %vm1071 = vcmp.le.f32.partialorder %v859, %v959
      %vm1072 = vcmp.le.f32.partialorder %v861, %v996
      %vm1073 = vcmp.le.f32.partialorder %v865, %v959
      %vm1074 = vcmp.le.f32.partialorder %v867, %v996
      %vm1075 = vcmp.le.f32.partialorder %v871, %v959
      %vm1076 = vcmp.le.f32.partialorder %v873, %v996
      %vm1077 = vcmp.le.f32.partialorder %v877, %v959
      %vm1078 = vcmp.le.f32.partialorder %v879, %v996
      %vm1079 = vcmp.le.f32.partialorder %v883, %v959
      %vm1080 = vcmp.le.f32.partialorder %v885, %v996
      %vm1081 = vcmp.le.f32.partialorder %v889, %v959
      %vm1082 = vcmp.le.f32.partialorder %v891, %v996
      %vm1083 = vcmp.le.f32.partialorder %v895, %v959
      %vm1084 = vcmp.le.f32.partialorder %v897, %v996
      %vm1085 = vcmp.le.f32.partialorder %v901, %v959
      %vm1086 = vcmp.le.f32.partialorder %v903, %v996
      %vm1087 = vcmp.le.f32.partialorder %v907, %v959
      %vm1088 = vcmp.le.f32.partialorder %v909, %v996
      %vm1089 = vcmp.le.f32.partialorder %v913, %v959
      %vm1090 = vcmp.le.f32.partialorder %v915, %v996
      %vm1091 = vcmp.le.f32.partialorder %v919, %v959
      %vm1092 = vcmp.le.f32.partialorder %v921, %v996
      %1094 = vset.pattern.permute.xlu0 0
      %1095 = vperm.xlu0 %1094, %v997
      %v1096 = vpop.permute.xlu0 %1095
      %1099 = vset.pattern.permute.xlu0 0
      %1100 = vperm.xlu0 %1099, %v998
      %v1101 = vpop.permute.xlu0 %1100
      %1104 = vset.pattern.permute.xlu0 0
      %1105 = vperm.xlu0 %1104, %v999
      %v1106 = vpop.permute.xlu0 %1105
      %1109 = vset.pattern.permute.xlu0 0
      %1110 = vperm.xlu0 %1109, %v1000
      %v1111 = vpop.permute.xlu0 %1110
      %1114 = vset.pattern.permute.xlu0 0
      %1115 = vperm.xlu0 %1114, %v1001
      %v1116 = vpop.permute.xlu0 %1115
      %1119 = vset.pattern.permute.xlu0 0
      %1120 = vperm.xlu0 %1119, %v1002
      %v1121 = vpop.permute.xlu0 %1120
      %1124 = vset.pattern.permute.xlu0 0
      %1125 = vperm.xlu0 %1124, %v1003
      %v1126 = vpop.permute.xlu0 %1125
      %1129 = vset.pattern.permute.xlu0 0
      %1130 = vperm.xlu0 %1129, %v1004
      %v1131 = vpop.permute.xlu0 %1130
      %1134 = vset.pattern.permute.xlu0 0
      %1135 = vperm.xlu0 %1134, %v1005
      %v1136 = vpop.permute.xlu0 %1135
      %1139 = vset.pattern.permute.xlu0 0
      %1140 = vperm.xlu0 %1139, %v1006
      %v1141 = vpop.permute.xlu0 %1140
      %1144 = vset.pattern.permute.xlu0 0
      %1145 = vperm.xlu0 %1144, %v1007
      %v1146 = vpop.permute.xlu0 %1145
      %1149 = vset.pattern.permute.xlu0 0
      %1150 = vperm.xlu0 %1149, %v1008
      %v1151 = vpop.permute.xlu0 %1150
      %1154 = vset.pattern.permute.xlu0 0
      %1155 = vperm.xlu0 %1154, %v1009
      %v1156 = vpop.permute.xlu0 %1155
      %1159 = vset.pattern.permute.xlu0 0
      %1160 = vperm.xlu0 %1159, %v1010
      %v1161 = vpop.permute.xlu0 %1160
      %1164 = vset.pattern.permute.xlu0 0
      %1165 = vperm.xlu0 %1164, %v1011
      %v1166 = vpop.permute.xlu0 %1165
      %1169 = vset.pattern.permute.xlu0 0
      %1170 = vperm.xlu0 %1169, %v1012
      %v1171 = vpop.permute.xlu0 %1170
      %1174 = vset.pattern.permute.xlu0 0
      %1175 = vperm.xlu0 %1174, %v1013
      %v1176 = vpop.permute.xlu0 %1175
      %1179 = vset.pattern.permute.xlu0 0
      %1180 = vperm.xlu0 %1179, %v1014
      %v1181 = vpop.permute.xlu0 %1180
      %1184 = vset.pattern.permute.xlu0 0
      %1185 = vperm.xlu0 %1184, %v1015
      %v1186 = vpop.permute.xlu0 %1185
      %1189 = vset.pattern.permute.xlu0 0
      %1190 = vperm.xlu0 %1189, %v1016
      %v1191 = vpop.permute.xlu0 %1190
      %1194 = vset.pattern.permute.xlu0 0
      %1195 = vperm.xlu0 %1194, %v1017
      %v1196 = vpop.permute.xlu0 %1195
      %1199 = vset.pattern.permute.xlu0 0
      %1200 = vperm.xlu0 %1199, %v1018
      %v1201 = vpop.permute.xlu0 %1200
      %1204 = vset.pattern.permute.xlu0 0
      %1205 = vperm.xlu0 %1204, %v1019
      %v1206 = vpop.permute.xlu0 %1205
      %1209 = vset.pattern.permute.xlu0 0
      %1210 = vperm.xlu0 %1209, %v1020
      %v1211 = vpop.permute.xlu0 %1210
      %1214 = vset.pattern.permute.xlu0 0
      %1215 = vperm.xlu0 %1214, %v1021
      %v1216 = vpop.permute.xlu0 %1215
      %1219 = vset.pattern.permute.xlu0 0
      %1220 = vperm.xlu0 %1219, %v1022
      %v1221 = vpop.permute.xlu0 %1220
      %1224 = vset.pattern.permute.xlu0 0
      %1225 = vperm.xlu0 %1224, %v1023
      %v1226 = vpop.permute.xlu0 %1225
      %1229 = vset.pattern.permute.xlu0 0
      %1230 = vperm.xlu0 %1229, %v1024
      %v1231 = vpop.permute.xlu0 %1230
      %1234 = vset.pattern.permute.xlu0 0
      %1235 = vperm.xlu0 %1234, %v1025
      %v1236 = vpop.permute.xlu0 %1235
      %1239 = vset.pattern.permute.xlu0 0
      %1240 = vperm.xlu0 %1239, %v1026
      %v1241 = vpop.permute.xlu0 %1240
      %1244 = vset.pattern.permute.xlu0 0
      %1245 = vperm.xlu0 %1244, %v1027
      %v1246 = vpop.permute.xlu0 %1245
      %1249 = vset.pattern.permute.xlu0 0
      %1250 = vperm.xlu0 %1249, %v1028
      %v1251 = vpop.permute.xlu0 %1250
      %v1253 = vsel %vm1029, %v1096, 3e+38
      %v1254 = vsel %vm1030, %v1096, 3e+38
      %v1255 = vsel %vm1031, %v1101, 3e+38
      %v1256 = vsel %vm1032, %v1101, 3e+38
      %v1257 = vsel %vm1033, %v1106, 3e+38
      %v1258 = vsel %vm1034, %v1106, 3e+38
      %v1259 = vsel %vm1035, %v1111, 3e+38
      %v1260 = vsel %vm1036, %v1111, 3e+38
      %v1261 = vsel %vm1037, %v1116, 3e+38
      %v1262 = vsel %vm1038, %v1116, 3e+38
      %v1263 = vsel %vm1039, %v1121, 3e+38
      %v1264 = vsel %vm1040, %v1121, 3e+38
      %v1265 = vsel %vm1041, %v1126, 3e+38
      %v1266 = vsel %vm1042, %v1126, 3e+38
      %v1267 = vsel %vm1043, %v1131, 3e+38
      %v1268 = vsel %vm1044, %v1131, 3e+38
      %v1269 = vsel %vm1045, %v1136, 3e+38
      %v1270 = vsel %vm1046, %v1136, 3e+38
      %v1271 = vsel %vm1047, %v1141, 3e+38
      %v1272 = vsel %vm1048, %v1141, 3e+38
      %v1273 = vsel %vm1049, %v1146, 3e+38
      %v1274 = vsel %vm1050, %v1146, 3e+38
      %v1275 = vsel %vm1051, %v1151, 3e+38
      %v1276 = vsel %vm1052, %v1151, 3e+38
      %v1277 = vsel %vm1053, %v1156, 3e+38
      %v1278 = vsel %vm1054, %v1156, 3e+38
      %v1279 = vsel %vm1055, %v1161, 3e+38
      %v1280 = vsel %vm1056, %v1161, 3e+38
      %v1281 = vsel %vm1057, %v1166, 3e+38
      %v1282 = vsel %vm1058, %v1166, 3e+38
      %v1283 = vsel %vm1059, %v1171, 3e+38
      %v1284 = vsel %vm1060, %v1171, 3e+38
      %v1285 = vsel %vm1061, %v1176, 3e+38
      %v1286 = vsel %vm1062, %v1176, 3e+38
      %v1287 = vsel %vm1063, %v1181, 3e+38
      %v1288 = vsel %vm1064, %v1181, 3e+38
      %v1289 = vsel %vm1065, %v1186, 3e+38
      %v1290 = vsel %vm1066, %v1186, 3e+38
      %v1291 = vsel %vm1067, %v1191, 3e+38
      %v1292 = vsel %vm1068, %v1191, 3e+38
      %v1293 = vsel %vm1069, %v1196, 3e+38
      %v1294 = vsel %vm1070, %v1196, 3e+38
      %v1295 = vsel %vm1071, %v1201, 3e+38
      %v1296 = vsel %vm1072, %v1201, 3e+38
      %v1297 = vsel %vm1073, %v1206, 3e+38
      %v1298 = vsel %vm1074, %v1206, 3e+38
      %v1299 = vsel %vm1075, %v1211, 3e+38
      %v1300 = vsel %vm1076, %v1211, 3e+38
      %v1301 = vsel %vm1077, %v1216, 3e+38
      %v1302 = vsel %vm1078, %v1216, 3e+38
      %v1303 = vsel %vm1079, %v1221, 3e+38
      %v1304 = vsel %vm1080, %v1221, 3e+38
      %v1305 = vsel %vm1081, %v1226, 3e+38
      %v1306 = vsel %vm1082, %v1226, 3e+38
      %v1307 = vsel %vm1083, %v1231, 3e+38
      %v1308 = vsel %vm1084, %v1231, 3e+38
      %v1309 = vsel %vm1085, %v1236, 3e+38
      %v1310 = vsel %vm1086, %v1236, 3e+38
      %v1311 = vsel %vm1087, %v1241, 3e+38
      %v1312 = vsel %vm1088, %v1241, 3e+38
      %v1313 = vsel %vm1089, %v1246, 3e+38
      %v1314 = vsel %vm1090, %v1246, 3e+38
      %v1315 = vsel %vm1091, %v1251, 3e+38
      %v1316 = vsel %vm1092, %v1251, 3e+38
      %v1317 = vmin.f32 %v1253, %v1257
      %v1318 = vmin.f32 %v1255, %v1259
      %v1319 = vmin.f32 %v1317, %v1261
      %v1320 = vmin.f32 %v1318, %v1263
      %v1321 = vmin.f32 %v1319, %v1265
      %v1322 = vmin.f32 %v1320, %v1267
      %v1323 = vmin.f32 %v1321, %v1269
      %v1324 = vmin.f32 %v1322, %v1271
      %v1325 = vmin.f32 %v1323, %v1273
      %v1326 = vmin.f32 %v1324, %v1275
      %v1327 = vmin.f32 %v1325, %v1277
      %v1328 = vmin.f32 %v1326, %v1279
      %v1329 = vmin.f32 %v1327, %v1281
      %v1330 = vmin.f32 %v1328, %v1283
      %v1331 = vmin.f32 %v1329, %v1285
      %v1332 = vmin.f32 %v1330, %v1287
      %v1333 = vmin.f32 %v1331, %v1289
      %v1334 = vmin.f32 %v1332, %v1291
      %v1335 = vmin.f32 %v1333, %v1293
      %v1336 = vmin.f32 %v1334, %v1295
      %v1337 = vmin.f32 %v1335, %v1297
      %v1338 = vmin.f32 %v1336, %v1299
      %v1339 = vmin.f32 %v1337, %v1301
      %v1340 = vmin.f32 %v1338, %v1303
      %v1341 = vmin.f32 %v1339, %v1305
      %v1342 = vmin.f32 %v1340, %v1307
      %v1343 = vmin.f32 %v1341, %v1309
      %v1344 = vmin.f32 %v1342, %v1311
      %v1345 = vmin.f32 %v1343, %v1313
      %v1346 = vmin.f32 %v1344, %v1315
      %v1347 = vmin.f32 %v1345, %v1346
      %v1348 = vrot.slane %v1347, 4
      %v1349 = vmin.f32 %v1347, %v1348
      %v1350 = vrot.slane %v1349, 2
      %v1351 = vmin.f32 %v1349, %v1350
      %v1352 = vrot.slane %v1351, 1
      %v1353 = vmin.f32 %v1351, %v1352
      %v1354 = vmin.f32 %v1254, %v1258
      %v1355 = vmin.f32 %v1256, %v1260
      %v1356 = vmin.f32 %v1354, %v1262
      %v1357 = vmin.f32 %v1355, %v1264
      %v1358 = vmin.f32 %v1356, %v1266
      %v1359 = vmin.f32 %v1357, %v1268
      %v1360 = vmin.f32 %v1358, %v1270
      %v1361 = vmin.f32 %v1359, %v1272
      %v1362 = vmin.f32 %v1360, %v1274
      %v1363 = vmin.f32 %v1361, %v1276
      %v1364 = vmin.f32 %v1362, %v1278
      %v1365 = vmin.f32 %v1363, %v1280
      %v1366 = vmin.f32 %v1364, %v1282
      %v1367 = vmin.f32 %v1365, %v1284
      %v1368 = vmin.f32 %v1366, %v1286
      %v1369 = vmin.f32 %v1367, %v1288
      %v1370 = vmin.f32 %v1368, %v1290
      %v1371 = vmin.f32 %v1369, %v1292
      %v1372 = vmin.f32 %v1370, %v1294
      %v1373 = vmin.f32 %v1371, %v1296
      %v1374 = vmin.f32 %v1372, %v1298
      %v1375 = vmin.f32 %v1373, %v1300
      %v1376 = vmin.f32 %v1374, %v1302
      %v1377 = vmin.f32 %v1375, %v1304
      %v1378 = vmin.f32 %v1376, %v1306
      %v1379 = vmin.f32 %v1377, %v1308
      %v1380 = vmin.f32 %v1378, %v1310
      %v1381 = vmin.f32 %v1379, %v1312
      %v1382 = vmin.f32 %v1380, %v1314
      %v1383 = vmin.f32 %v1381, %v1316
      %v1384 = vmin.f32 %v1382, %v1383
      %v1385 = vrot.slane %v1384, 4
      %v1386 = vmin.f32 %v1384, %v1385
      %v1387 = vrot.slane %v1386, 2
      %v1388 = vmin.f32 %v1386, %v1387
      %v1389 = vrot.slane %v1388, 1
      %v1390 = vmin.f32 %v1388, %v1389
      %v1391 = vld [vmem:[#allocation4] sm:$0x3]
      %v1393 = vlaneseq
      %v1394 = vshrl.u32 %v1393, 7
      %v1395 = vsub.s32 0, %v1394
      %v1396 = vrot.slane %v1391, %v1395
      %v1397 = vlaneseq
      %v1398 = vshrl.u32 %v1397, 7
      %v1399 = vsub.s32 1, %v1398
      %v1400 = vrot.slane %v1391, %v1399
      %vm1403 = vcmp.lt.f32.partialorder %v959, %v1396
      %vm1404 = vcmp.lt.f32.partialorder %v996, %v1400
      %v1405 = vld [vmem:[#allocation5] sm:$0x3]
      %v1407 = vlaneseq
      %v1408 = vshrl.u32 %v1407, 7
      %v1409 = vsub.s32 0, %v1408
      %v1410 = vrot.slane %v1405, %v1409
      %v1411 = vlaneseq
      %v1412 = vshrl.u32 %v1411, 7
      %v1413 = vsub.s32 1, %v1412
      %v1414 = vrot.slane %v1405, %v1413
      %v1417 = vsel %vm1403, %v1353, %v1410
      %v1418 = vsel %vm1404, %v1390, %v1414
      %v1421 = vcombine.low %v1417, %v1418
      %v1423 = vunpack.c.l.s4 1966171168
      %v1424 = vunpack.c.0.s8 %v1423
      %v1425 = vlaneseq
      %v1426 = vshrl.u32 %v1425, 7
      %v1427 = vsub.s32 %v1424, %v1426
      %v1428 = vrot.slane %v1421, %v1427
      %v1430 = vunpack.c.l.s4 1966171168
      %v1431 = vunpack.c.0.s8 %v1430
      %v1432 = vlaneseq
      %v1433 = vshrl.u32 %v1432, 7
      %v1434 = vsub.s32 %v1431, %v1433
      %v1435 = vrot.slane %v1428, %v1434
      %1437 = vst.msk [vmem:[#allocation5] sm:$0x3] %vm497, %v1435
      %v1438 = vld [vmem:[#allocation4] sm:$0x3]
      %v1441 = vcombine.low %v959, %v996
      %v1443 = vunpack.c.l.s4 1966171168
      %v1444 = vunpack.c.0.s8 %v1443
      %v1445 = vlaneseq
      %v1446 = vshrl.u32 %v1445, 7
      %v1447 = vsub.s32 %v1444, %v1446
      %v1448 = vrot.slane %v1441, %v1447
      %v1450 = vunpack.c.l.s4 1966171168
      %v1451 = vunpack.c.0.s8 %v1450
      %v1452 = vlaneseq
      %v1453 = vshrl.u32 %v1452, 7
      %v1454 = vsub.s32 %v1451, %v1453
      %v1455 = vrot.slane %v1448, %v1454
      %v1457 = vmin.f32 %v1438, %v1455
      %1458 = vst.msk [vmem:[#allocation4] sm:$0x3] %vm497, %v1457
      %v1459 = vmin.f32 %v733, %v735
      %1460 = vmin.xlane.f32.xlu0 %v1459
      %v1461 = vpop.xlane.xlu0 %1460
      %v1462 = vmin.f32 %v739, %v741
      %1463 = vmin.xlane.f32.xlu0 %v1462
      %v1464 = vpop.xlane.xlu0 %1463
      %v1465 = vmin.f32 %v745, %v747
      %1466 = vmin.xlane.f32.xlu0 %v1465
      %v1467 = vpop.xlane.xlu0 %1466
      %v1468 = vmin.f32 %v751, %v753
      %1469 = vmin.xlane.f32.xlu0 %v1468
      %v1470 = vpop.xlane.xlu0 %1469
      %v1471 = vmin.f32 %v757, %v759
      %1472 = vmin.xlane.f32.xlu0 %v1471
      %v1473 = vpop.xlane.xlu0 %1472
      %v1474 = vmin.f32 %v763, %v765
      %1475 = vmin.xlane.f32.xlu0 %v1474
      %v1476 = vpop.xlane.xlu0 %1475
      %v1477 = vmin.f32 %v769, %v771
      %1478 = vmin.xlane.f32.xlu0 %v1477
      %v1479 = vpop.xlane.xlu0 %1478
      %v1480 = vmin.f32 %v775, %v777
      %1481 = vmin.xlane.f32.xlu0 %v1480
      %v1482 = vpop.xlane.xlu0 %1481
      %v1483 = vmin.f32 %v781, %v783
      %1484 = vmin.xlane.f32.xlu0 %v1483
      %v1485 = vpop.xlane.xlu0 %1484
      %v1486 = vmin.f32 %v787, %v789
      %1487 = vmin.xlane.f32.xlu0 %v1486
      %v1488 = vpop.xlane.xlu0 %1487
      %v1489 = vmin.f32 %v793, %v795
      %1490 = vmin.xlane.f32.xlu0 %v1489
      %v1491 = vpop.xlane.xlu0 %1490
      %v1492 = vmin.f32 %v799, %v801
      %1493 = vmin.xlane.f32.xlu0 %v1492
      %v1494 = vpop.xlane.xlu0 %1493
      %v1495 = vmin.f32 %v805, %v807
      %1496 = vmin.xlane.f32.xlu0 %v1495
      %v1497 = vpop.xlane.xlu0 %1496
      %v1498 = vmin.f32 %v811, %v813
      %1499 = vmin.xlane.f32.xlu0 %v1498
      %v1500 = vpop.xlane.xlu0 %1499
      %v1501 = vmin.f32 %v817, %v819
      %1502 = vmin.xlane.f32.xlu0 %v1501
      %v1503 = vpop.xlane.xlu0 %1502
      %v1504 = vmin.f32 %v823, %v825
      %1505 = vmin.xlane.f32.xlu0 %v1504
      %v1506 = vpop.xlane.xlu0 %1505
      %v1507 = vmin.f32 %v829, %v831
      %1508 = vmin.xlane.f32.xlu0 %v1507
      %v1509 = vpop.xlane.xlu0 %1508
      %v1510 = vmin.f32 %v835, %v837
      %1511 = vmin.xlane.f32.xlu0 %v1510
      %v1512 = vpop.xlane.xlu0 %1511
      %v1513 = vmin.f32 %v841, %v843
      %1514 = vmin.xlane.f32.xlu0 %v1513
      %v1515 = vpop.xlane.xlu0 %1514
      %v1516 = vmin.f32 %v847, %v849
      %1517 = vmin.xlane.f32.xlu0 %v1516
      %v1518 = vpop.xlane.xlu0 %1517
      %v1519 = vmin.f32 %v853, %v855
      %1520 = vmin.xlane.f32.xlu0 %v1519
      %v1521 = vpop.xlane.xlu0 %1520
      %v1522 = vmin.f32 %v859, %v861
      %1523 = vmin.xlane.f32.xlu0 %v1522
      %v1524 = vpop.xlane.xlu0 %1523
      %v1525 = vmin.f32 %v865, %v867
      %1526 = vmin.xlane.f32.xlu0 %v1525
      %v1527 = vpop.xlane.xlu0 %1526
      %v1528 = vmin.f32 %v871, %v873
      %1529 = vmin.xlane.f32.xlu0 %v1528
      %v1530 = vpop.xlane.xlu0 %1529
      %v1531 = vmin.f32 %v877, %v879
      %1532 = vmin.xlane.f32.xlu0 %v1531
      %v1533 = vpop.xlane.xlu0 %1532
      %v1534 = vmin.f32 %v883, %v885
      %1535 = vmin.xlane.f32.xlu0 %v1534
      %v1536 = vpop.xlane.xlu0 %1535
      %v1537 = vmin.f32 %v889, %v891
      %1538 = vmin.xlane.f32.xlu0 %v1537
      %v1539 = vpop.xlane.xlu0 %1538
      %v1540 = vmin.f32 %v895, %v897
      %1541 = vmin.xlane.f32.xlu0 %v1540
      %v1542 = vpop.xlane.xlu0 %1541
      %v1543 = vmin.f32 %v901, %v903
      %1544 = vmin.xlane.f32.xlu0 %v1543
      %v1545 = vpop.xlane.xlu0 %1544
      %v1546 = vmin.f32 %v907, %v909
      %1547 = vmin.xlane.f32.xlu0 %v1546
      %v1548 = vpop.xlane.xlu0 %1547
      %v1549 = vmin.f32 %v913, %v915
      %1550 = vmin.xlane.f32.xlu0 %v1549
      %v1551 = vpop.xlane.xlu0 %1550
      %v1552 = vmin.f32 %v919, %v921
      %1553 = vmin.xlane.f32.xlu0 %v1552
      %v1554 = vpop.xlane.xlu0 %1553
      %v1555 = vmax.f32 %v1461, 0.0
      %v1556 = vmax.f32 %v1464, 0.0
      %v1557 = vmax.f32 %v1467, 0.0
      %v1558 = vmax.f32 %v1470, 0.0
      %v1559 = vmax.f32 %v1473, 0.0
      %v1560 = vmax.f32 %v1476, 0.0
      %v1561 = vmax.f32 %v1479, 0.0
      %v1562 = vmax.f32 %v1482, 0.0
      %v1563 = vmax.f32 %v1485, 0.0
      %v1564 = vmax.f32 %v1488, 0.0
      %v1565 = vmax.f32 %v1491, 0.0
      %v1566 = vmax.f32 %v1494, 0.0
      %v1567 = vmax.f32 %v1497, 0.0
      %v1568 = vmax.f32 %v1500, 0.0
      %v1569 = vmax.f32 %v1503, 0.0
      %v1570 = vmax.f32 %v1506, 0.0
      %v1571 = vmax.f32 %v1509, 0.0
      %v1572 = vmax.f32 %v1512, 0.0
      %v1573 = vmax.f32 %v1515, 0.0
      %v1574 = vmax.f32 %v1518, 0.0
      %v1575 = vmax.f32 %v1521, 0.0
      %v1576 = vmax.f32 %v1524, 0.0
      %v1577 = vmax.f32 %v1527, 0.0
      %v1578 = vmax.f32 %v1530, 0.0
      %v1579 = vmax.f32 %v1533, 0.0
      %v1580 = vmax.f32 %v1536, 0.0
      %v1581 = vmax.f32 %v1539, 0.0
      %v1582 = vmax.f32 %v1542, 0.0
      %v1583 = vmax.f32 %v1545, 0.0
      %v1584 = vmax.f32 %v1548, 0.0
      %v1585 = vmax.f32 %v1551, 0.0
      %v1586 = vmax.f32 %v1554, 0.0
      %v1587 = vrsqrt.pop %v1555
      %v1588 = vmul.f32 %v1555, %v1587
      %vm1589 = vcmp.eq.f32.partialorder %v1555, inf
      %v1590 = vsel %vm1589, %v1555, %v1588
      %vm1591 = vcmp.eq.f32.partialorder %v1555, 0.0
      %v1592 = vand.u32 %v1555, 2147483648
      %v1593 = vsel %vm1591, %v1592, %v1590
      %v1594 = vrsqrt.pop %v1556
      %v1595 = vmul.f32 %v1556, %v1594
      %vm1596 = vcmp.eq.f32.partialorder %v1556, inf
      %v1597 = vsel %vm1596, %v1556, %v1595
      %vm1598 = vcmp.eq.f32.partialorder %v1556, 0.0
      %v1599 = vand.u32 %v1556, 2147483648
      %v1600 = vsel %vm1598, %v1599, %v1597
      %v1601 = vrsqrt.pop %v1557
      %v1602 = vmul.f32 %v1557, %v1601
      %vm1603 = vcmp.eq.f32.partialorder %v1557, inf
      %v1604 = vsel %vm1603, %v1557, %v1602
      %vm1605 = vcmp.eq.f32.partialorder %v1557, 0.0
      %v1606 = vand.u32 %v1557, 2147483648
      %v1607 = vsel %vm1605, %v1606, %v1604
      %v1608 = vrsqrt.pop %v1558
      %v1609 = vmul.f32 %v1558, %v1608
      %vm1610 = vcmp.eq.f32.partialorder %v1558, inf
      %v1611 = vsel %vm1610, %v1558, %v1609
      %vm1612 = vcmp.eq.f32.partialorder %v1558, 0.0
      %v1613 = vand.u32 %v1558, 2147483648
      %v1614 = vsel %vm1612, %v1613, %v1611
      %v1615 = vrsqrt.pop %v1559
      %v1616 = vmul.f32 %v1559, %v1615
      %vm1617 = vcmp.eq.f32.partialorder %v1559, inf
      %v1618 = vsel %vm1617, %v1559, %v1616
      %vm1619 = vcmp.eq.f32.partialorder %v1559, 0.0
      %v1620 = vand.u32 %v1559, 2147483648
      %v1621 = vsel %vm1619, %v1620, %v1618
      %v1622 = vrsqrt.pop %v1560
      %v1623 = vmul.f32 %v1560, %v1622
      %vm1624 = vcmp.eq.f32.partialorder %v1560, inf
      %v1625 = vsel %vm1624, %v1560, %v1623
      %vm1626 = vcmp.eq.f32.partialorder %v1560, 0.0
      %v1627 = vand.u32 %v1560, 2147483648
      %v1628 = vsel %vm1626, %v1627, %v1625
      %v1629 = vrsqrt.pop %v1561
      %v1630 = vmul.f32 %v1561, %v1629
      %vm1631 = vcmp.eq.f32.partialorder %v1561, inf
      %v1632 = vsel %vm1631, %v1561, %v1630
      %vm1633 = vcmp.eq.f32.partialorder %v1561, 0.0
      %v1634 = vand.u32 %v1561, 2147483648
      %v1635 = vsel %vm1633, %v1634, %v1632
      %v1636 = vrsqrt.pop %v1562
      %v1637 = vmul.f32 %v1562, %v1636
      %vm1638 = vcmp.eq.f32.partialorder %v1562, inf
      %v1639 = vsel %vm1638, %v1562, %v1637
      %vm1640 = vcmp.eq.f32.partialorder %v1562, 0.0
      %v1641 = vand.u32 %v1562, 2147483648
      %v1642 = vsel %vm1640, %v1641, %v1639
      %v1643 = vrsqrt.pop %v1563
      %v1644 = vmul.f32 %v1563, %v1643
      %vm1645 = vcmp.eq.f32.partialorder %v1563, inf
      %v1646 = vsel %vm1645, %v1563, %v1644
      %vm1647 = vcmp.eq.f32.partialorder %v1563, 0.0
      %v1648 = vand.u32 %v1563, 2147483648
      %v1649 = vsel %vm1647, %v1648, %v1646
      %v1650 = vrsqrt.pop %v1564
      %v1651 = vmul.f32 %v1564, %v1650
      %vm1652 = vcmp.eq.f32.partialorder %v1564, inf
      %v1653 = vsel %vm1652, %v1564, %v1651
      %vm1654 = vcmp.eq.f32.partialorder %v1564, 0.0
      %v1655 = vand.u32 %v1564, 2147483648
      %v1656 = vsel %vm1654, %v1655, %v1653
      %v1657 = vrsqrt.pop %v1565
      %v1658 = vmul.f32 %v1565, %v1657
      %vm1659 = vcmp.eq.f32.partialorder %v1565, inf
      %v1660 = vsel %vm1659, %v1565, %v1658
      %vm1661 = vcmp.eq.f32.partialorder %v1565, 0.0
      %v1662 = vand.u32 %v1565, 2147483648
      %v1663 = vsel %vm1661, %v1662, %v1660
      %v1664 = vrsqrt.pop %v1566
      %v1665 = vmul.f32 %v1566, %v1664
      %vm1666 = vcmp.eq.f32.partialorder %v1566, inf
      %v1667 = vsel %vm1666, %v1566, %v1665
      %vm1668 = vcmp.eq.f32.partialorder %v1566, 0.0
      %v1669 = vand.u32 %v1566, 2147483648
      %v1670 = vsel %vm1668, %v1669, %v1667
      %v1671 = vrsqrt.pop %v1567
      %v1672 = vmul.f32 %v1567, %v1671
      %vm1673 = vcmp.eq.f32.partialorder %v1567, inf
      %v1674 = vsel %vm1673, %v1567, %v1672
      %vm1675 = vcmp.eq.f32.partialorder %v1567, 0.0
      %v1676 = vand.u32 %v1567, 2147483648
      %v1677 = vsel %vm1675, %v1676, %v1674
      %v1678 = vrsqrt.pop %v1568
      %v1679 = vmul.f32 %v1568, %v1678
      %vm1680 = vcmp.eq.f32.partialorder %v1568, inf
      %v1681 = vsel %vm1680, %v1568, %v1679
      %vm1682 = vcmp.eq.f32.partialorder %v1568, 0.0
      %v1683 = vand.u32 %v1568, 2147483648
      %v1684 = vsel %vm1682, %v1683, %v1681
      %v1685 = vrsqrt.pop %v1569
      %v1686 = vmul.f32 %v1569, %v1685
      %vm1687 = vcmp.eq.f32.partialorder %v1569, inf
      %v1688 = vsel %vm1687, %v1569, %v1686
      %vm1689 = vcmp.eq.f32.partialorder %v1569, 0.0
      %v1690 = vand.u32 %v1569, 2147483648
      %v1691 = vsel %vm1689, %v1690, %v1688
      %v1692 = vrsqrt.pop %v1570
      %v1693 = vmul.f32 %v1570, %v1692
      %vm1694 = vcmp.eq.f32.partialorder %v1570, inf
      %v1695 = vsel %vm1694, %v1570, %v1693
      %vm1696 = vcmp.eq.f32.partialorder %v1570, 0.0
      %v1697 = vand.u32 %v1570, 2147483648
      %v1698 = vsel %vm1696, %v1697, %v1695
      %v1699 = vrsqrt.pop %v1571
      %v1700 = vmul.f32 %v1571, %v1699
      %vm1701 = vcmp.eq.f32.partialorder %v1571, inf
      %v1702 = vsel %vm1701, %v1571, %v1700
      %vm1703 = vcmp.eq.f32.partialorder %v1571, 0.0
      %v1704 = vand.u32 %v1571, 2147483648
      %v1705 = vsel %vm1703, %v1704, %v1702
      %v1706 = vrsqrt.pop %v1572
      %v1707 = vmul.f32 %v1572, %v1706
      %vm1708 = vcmp.eq.f32.partialorder %v1572, inf
      %v1709 = vsel %vm1708, %v1572, %v1707
      %vm1710 = vcmp.eq.f32.partialorder %v1572, 0.0
      %v1711 = vand.u32 %v1572, 2147483648
      %v1712 = vsel %vm1710, %v1711, %v1709
      %v1713 = vrsqrt.pop %v1573
      %v1714 = vmul.f32 %v1573, %v1713
      %vm1715 = vcmp.eq.f32.partialorder %v1573, inf
      %v1716 = vsel %vm1715, %v1573, %v1714
      %vm1717 = vcmp.eq.f32.partialorder %v1573, 0.0
      %v1718 = vand.u32 %v1573, 2147483648
      %v1719 = vsel %vm1717, %v1718, %v1716
      %v1720 = vrsqrt.pop %v1574
      %v1721 = vmul.f32 %v1574, %v1720
      %vm1722 = vcmp.eq.f32.partialorder %v1574, inf
      %v1723 = vsel %vm1722, %v1574, %v1721
      %vm1724 = vcmp.eq.f32.partialorder %v1574, 0.0
      %v1725 = vand.u32 %v1574, 2147483648
      %v1726 = vsel %vm1724, %v1725, %v1723
      %v1727 = vrsqrt.pop %v1575
      %v1728 = vmul.f32 %v1575, %v1727
      %vm1729 = vcmp.eq.f32.partialorder %v1575, inf
      %v1730 = vsel %vm1729, %v1575, %v1728
      %vm1731 = vcmp.eq.f32.partialorder %v1575, 0.0
      %v1732 = vand.u32 %v1575, 2147483648
      %v1733 = vsel %vm1731, %v1732, %v1730
      %v1734 = vrsqrt.pop %v1576
      %v1735 = vmul.f32 %v1576, %v1734
      %vm1736 = vcmp.eq.f32.partialorder %v1576, inf
      %v1737 = vsel %vm1736, %v1576, %v1735
      %vm1738 = vcmp.eq.f32.partialorder %v1576, 0.0
      %v1739 = vand.u32 %v1576, 2147483648
      %v1740 = vsel %vm1738, %v1739, %v1737
      %v1741 = vrsqrt.pop %v1577
      %v1742 = vmul.f32 %v1577, %v1741
      %vm1743 = vcmp.eq.f32.partialorder %v1577, inf
      %v1744 = vsel %vm1743, %v1577, %v1742
      %vm1745 = vcmp.eq.f32.partialorder %v1577, 0.0
      %v1746 = vand.u32 %v1577, 2147483648
      %v1747 = vsel %vm1745, %v1746, %v1744
      %v1748 = vrsqrt.pop %v1578
      %v1749 = vmul.f32 %v1578, %v1748
      %vm1750 = vcmp.eq.f32.partialorder %v1578, inf
      %v1751 = vsel %vm1750, %v1578, %v1749
      %vm1752 = vcmp.eq.f32.partialorder %v1578, 0.0
      %v1753 = vand.u32 %v1578, 2147483648
      %v1754 = vsel %vm1752, %v1753, %v1751
      %v1755 = vrsqrt.pop %v1579
      %v1756 = vmul.f32 %v1579, %v1755
      %vm1757 = vcmp.eq.f32.partialorder %v1579, inf
      %v1758 = vsel %vm1757, %v1579, %v1756
      %vm1759 = vcmp.eq.f32.partialorder %v1579, 0.0
      %v1760 = vand.u32 %v1579, 2147483648
      %v1761 = vsel %vm1759, %v1760, %v1758
      %v1762 = vrsqrt.pop %v1580
      %v1763 = vmul.f32 %v1580, %v1762
      %vm1764 = vcmp.eq.f32.partialorder %v1580, inf
      %v1765 = vsel %vm1764, %v1580, %v1763
      %vm1766 = vcmp.eq.f32.partialorder %v1580, 0.0
      %v1767 = vand.u32 %v1580, 2147483648
      %v1768 = vsel %vm1766, %v1767, %v1765
      %v1769 = vrsqrt.pop %v1581
      %v1770 = vmul.f32 %v1581, %v1769
      %vm1771 = vcmp.eq.f32.partialorder %v1581, inf
      %v1772 = vsel %vm1771, %v1581, %v1770
      %vm1773 = vcmp.eq.f32.partialorder %v1581, 0.0
      %v1774 = vand.u32 %v1581, 2147483648
      %v1775 = vsel %vm1773, %v1774, %v1772
      %v1776 = vrsqrt.pop %v1582
      %v1777 = vmul.f32 %v1582, %v1776
      %vm1778 = vcmp.eq.f32.partialorder %v1582, inf
      %v1779 = vsel %vm1778, %v1582, %v1777
      %vm1780 = vcmp.eq.f32.partialorder %v1582, 0.0
      %v1781 = vand.u32 %v1582, 2147483648
      %v1782 = vsel %vm1780, %v1781, %v1779
      %v1783 = vrsqrt.pop %v1583
      %v1784 = vmul.f32 %v1583, %v1783
      %vm1785 = vcmp.eq.f32.partialorder %v1583, inf
      %v1786 = vsel %vm1785, %v1583, %v1784
      %vm1787 = vcmp.eq.f32.partialorder %v1583, 0.0
      %v1788 = vand.u32 %v1583, 2147483648
      %v1789 = vsel %vm1787, %v1788, %v1786
      %v1790 = vrsqrt.pop %v1584
      %v1791 = vmul.f32 %v1584, %v1790
      %vm1792 = vcmp.eq.f32.partialorder %v1584, inf
      %v1793 = vsel %vm1792, %v1584, %v1791
      %vm1794 = vcmp.eq.f32.partialorder %v1584, 0.0
      %v1795 = vand.u32 %v1584, 2147483648
      %v1796 = vsel %vm1794, %v1795, %v1793
      %v1797 = vrsqrt.pop %v1585
      %v1798 = vmul.f32 %v1585, %v1797
      %vm1799 = vcmp.eq.f32.partialorder %v1585, inf
      %v1800 = vsel %vm1799, %v1585, %v1798
      %vm1801 = vcmp.eq.f32.partialorder %v1585, 0.0
      %v1802 = vand.u32 %v1585, 2147483648
      %v1803 = vsel %vm1801, %v1802, %v1800
      %v1804 = vrsqrt.pop %v1586
      %v1805 = vmul.f32 %v1586, %v1804
      %vm1806 = vcmp.eq.f32.partialorder %v1586, inf
      %v1807 = vsel %vm1806, %v1586, %v1805
      %vm1808 = vcmp.eq.f32.partialorder %v1586, 0.0
      %v1809 = vand.u32 %v1586, 2147483648
      %v1810 = vsel %vm1808, %v1809, %v1807
      %v1811 = vld [vmem:[#allocation6] sm:$0x1]
      %vm1812 = vcmask 7168
      %v1813 = vsel %vm1812, %v1593, 0.0
      %v1814 = vsel %vm1812, %v1600, 0.0
      %v1815 = vadd.f32 %v1813, %v1814
      %v1816 = vsel %vm1812, %v1607, 0.0
      %v1817 = vadd.f32 %v1815, %v1816
      %v1818 = vsel %vm1812, %v1614, 0.0
      %v1819 = vadd.f32 %v1817, %v1818
      %v1820 = vsel %vm1812, %v1621, 0.0
      %v1821 = vadd.f32 %v1819, %v1820
      %v1822 = vsel %vm1812, %v1628, 0.0
      %v1823 = vadd.f32 %v1821, %v1822
      %v1824 = vsel %vm1812, %v1635, 0.0
      %v1825 = vadd.f32 %v1823, %v1824
      %v1826 = vsel %vm1812, %v1642, 0.0
      %v1827 = vadd.f32 %v1825, %v1826
      %v1828 = vsel %vm1812, %v1649, 0.0
      %v1829 = vadd.f32 %v1827, %v1828
      %v1830 = vsel %vm1812, %v1656, 0.0
      %v1831 = vadd.f32 %v1829, %v1830
      %v1832 = vsel %vm1812, %v1663, 0.0
      %v1833 = vadd.f32 %v1831, %v1832
      %v1834 = vsel %vm1812, %v1670, 0.0
      %v1835 = vadd.f32 %v1833, %v1834
      %v1836 = vsel %vm1812, %v1677, 0.0
      %v1837 = vadd.f32 %v1835, %v1836
      %v1838 = vsel %vm1812, %v1684, 0.0
      %v1839 = vadd.f32 %v1837, %v1838
      %v1840 = vsel %vm1812, %v1691, 0.0
      %v1841 = vadd.f32 %v1839, %v1840
      %v1842 = vsel %vm1812, %v1698, 0.0
      %v1843 = vadd.f32 %v1841, %v1842
      %v1844 = vsel %vm1812, %v1705, 0.0
      %v1845 = vadd.f32 %v1843, %v1844
      %v1846 = vsel %vm1812, %v1712, 0.0
      %v1847 = vadd.f32 %v1845, %v1846
      %v1848 = vsel %vm1812, %v1719, 0.0
      %v1849 = vadd.f32 %v1847, %v1848
      %v1850 = vsel %vm1812, %v1726, 0.0
      %v1851 = vadd.f32 %v1849, %v1850
      %v1852 = vsel %vm1812, %v1733, 0.0
      %v1853 = vadd.f32 %v1851, %v1852
      %v1854 = vsel %vm1812, %v1740, 0.0
      %v1855 = vadd.f32 %v1853, %v1854
      %v1856 = vsel %vm1812, %v1747, 0.0
      %v1857 = vadd.f32 %v1855, %v1856
      %v1858 = vsel %vm1812, %v1754, 0.0
      %v1859 = vadd.f32 %v1857, %v1858
      %v1860 = vsel %vm1812, %v1761, 0.0
      %v1861 = vadd.f32 %v1859, %v1860
      %v1862 = vsel %vm1812, %v1768, 0.0
      %v1863 = vadd.f32 %v1861, %v1862
      %v1864 = vsel %vm1812, %v1775, 0.0
      %v1865 = vadd.f32 %v1863, %v1864
      %v1866 = vsel %vm1812, %v1782, 0.0
      %v1867 = vadd.f32 %v1865, %v1866
      %v1868 = vsel %vm1812, %v1789, 0.0
      %v1869 = vadd.f32 %v1867, %v1868
      %v1870 = vsel %vm1812, %v1796, 0.0
      %v1871 = vadd.f32 %v1869, %v1870
      %v1872 = vsel %vm1812, %v1803, 0.0
      %v1873 = vadd.f32 %v1871, %v1872
      %v1874 = vsel %vm1812, %v1810, 0.0
      %v1875 = vadd.f32 %v1873, %v1874
      %1876 = vadd.xlane.f32.xlu0 %v1875
      %v1877 = vpop.xlane.xlu0 %1876
      %v1878 = vrot.slane %v1877, 4
      %v1879 = vadd.f32 %v1877, %v1878
      %v1880 = vrot.slane %v1879, 2
      %v1881 = vadd.f32 %v1879, %v1880
      %v1882 = vrot.slane %v1881, 1
      %v1883 = vadd.f32 %v1881, %v1882
      %s1884 = vtos %v1883
      %v1885 = vstv %s1884
      %v1886 = vadd.f32 %v1811, %v1885
      %vm1887 = vcmask 0
      %1888 = vst.msk [vmem:[#allocation6] sm:$0x1] %vm1887, %v1886
      // Predicated region
      $region41: #{loss_forward.5} parent=35 // pred_check
        %p1889 = pneg %p386
      $region42: #{loss_forward.5} parent=35 // pred_check_branch
        %1891 = sbr.rel (%p1889) target = $region44
      $region43: #{loss_forward.5} parent=35 // pred_region
        %v1892 = vld [vmem:[#allocation4] sm:$0x3]
        %v1893 = vmax.f32 %v1892, 0.0
        %v1894 = vrsqrt.pop %v1893
        %v1895 = vmul.f32 %v1893, %v1894
        %vm1896 = vcmp.eq.f32.partialorder %v1893, inf
        %v1897 = vsel %vm1896, %v1893, %v1895
        %vm1898 = vcmp.eq.f32.partialorder %v1893, 0.0
        %v1899 = vand.u32 %v1893, 2147483648
        %v1900 = vsel %vm1898, %v1899, %v1897
        %v1902 = vlaneseq
        %v1903 = vshrl.u32 %v1902, 7
        %v1904 = vsub.s32 0, %v1903
        %v1905 = vrot.slane %v1900, %v1904
        %v1906 = vlaneseq
        %v1907 = vshrl.u32 %v1906, 7
        %v1908 = vsub.s32 1, %v1907
        %v1909 = vrot.slane %v1900, %v1908
        %vm1912 = vcmask 1040384
        %v1913 = vsel %vm1912, %v1905, 0.0
        %v1914 = vsel %vm1912, %v1909, 0.0
        %v1915 = vadd.f32 %v1913, %v1914
        %1916 = vadd.xlane.f32.xlu0 %v1915
        %v1917 = vpop.xlane.xlu0 %1916
        %v1918 = vrot.slane %v1917, 4
        %v1919 = vadd.f32 %v1917, %v1918
        %v1920 = vrot.slane %v1919, 2
        %v1921 = vadd.f32 %v1919, %v1920
        %v1922 = vrot.slane %v1921, 1
        %v1923 = vadd.f32 %v1921, %v1922
        %s1924 = vtos %v1923
        %v1925 = vstv %s1924
        %1926 = vst.msk [vmem:[%s375] sm:$0x1] %vm1887, %v1925
        %v1927 = vld [vmem:[#allocation6] sm:$0x1]
        %1928 = vst.msk [vmem:[%s378] sm:$0x1] %vm1887, %v1927
        %v1929 = vld [vmem:[#allocation5] sm:$0x3]
        %1930 = vst.msk [vmem:[%s385] sm:$0x3] %vm497, %v1929
        %v1931 = vld [vmem:[%s352] sm:$0x78]
        %v1932 = vld [vmem:[%s352 + $0x8] sm:$0x78]
        %v1933 = vld [vmem:[%s3] sm:$0xf]
        %vm1934 = vcmask 1046531
        %v1935 = vsel %vm1934, %v1931, -inf
        %v1936 = vrot.slane %v1935, 4
        %v1937 = vmax.f32 %v1935, %v1936
        %v1938 = vrot.slane %v1937, 2
        %v1939 = vmax.f32 %v1937, %v1938
        %v1940 = vrot.slane %v1939, 1
        %v1941 = vmax.f32 %v1939, %v1940
        %v1942 = vsel %vm1934, %v1932, -inf
        %v1943 = vrot.slane %v1942, 4
        %v1944 = vmax.f32 %v1942, %v1943
        %v1945 = vrot.slane %v1944, 2
        %v1946 = vmax.f32 %v1944, %v1945
        %v1947 = vrot.slane %v1946, 1
        %v1948 = vmax.f32 %v1946, %v1947
        %v1949 = vsub.f32 %v1931, %v1941
        %v1950 = vsub.f32 %v1932, %v1948
        %v1951 = vmul.f32 %v1949, 1.442695
        %v1952 = vpow.pop %v1951
        %v1953 = vmul.f32 %v1950, 1.442695
        %v1954 = vpow.pop %v1953
        %v1957 = vrot.slane %v1952, 3
        %v1958 = vrot.slane %v1954, 3
        %vm1961 = vcmask 1043456
        %v1962 = vsel %vm1961, %v1957, 0.0
        %v1963 = vrot.slane %v1962, 4
        %v1964 = vadd.f32 %v1962, %v1963
        %v1965 = vrot.slane %v1964, 2
        %v1966 = vadd.f32 %v1964, %v1965
        %v1967 = vrot.slane %v1966, 1
        %v1968 = vadd.f32 %v1966, %v1967
        %v1969 = vsel %vm1961, %v1958, 0.0
        %v1970 = vrot.slane %v1969, 4
        %v1971 = vadd.f32 %v1969, %v1970
        %v1972 = vrot.slane %v1971, 2
        %v1973 = vadd.f32 %v1971, %v1972
        %v1974 = vrot.slane %v1973, 1
        %v1975 = vadd.f32 %v1973, %v1974
        %v1976 = vlog2.pop %v1968
        %v1977 = vmul.f32 %v1976, 0.6931472
        %v1978 = vlog2.pop %v1975
        %v1979 = vmul.f32 %v1978, 0.6931472
        %v1980 = vsub.f32 %v1949, %v1977
        %v1981 = vsub.f32 %v1950, %v1979
        %v1982 = vlaneseq
        %v1983 = vshrl.u32 %v1982, 7
        %v1984 = vcvt.f32.s32.to.zero.pseudo %v1929
        %v1985 = vlaneseq
        %v1986 = vshrl.u32 %v1985, 7
        %v1987 = vsub.s32 0, %v1986
        %v1988 = vrot.slane %v1984, %v1987
        %v1989 = vlaneseq
        %v1990 = vshrl.u32 %v1989, 7
        %v1991 = vsub.s32 1, %v1990
        %v1992 = vrot.slane %v1984, %v1991
        %vm1993 = vcmp.eq.s32.totalorder %v1983, %v1988
        %vm1994 = vcmp.eq.s32.totalorder %v1983, %v1992
        %v1997 = vrot.slane %v1980, 3
        %v1998 = vrot.slane %v1981, 3
        %v2001 = vsel %vm1993, %v1997, 0.0
        %v2002 = vsel %vm1994, %v1998, 0.0
        %v2003 = vsel %vm1961, %v2001, 0.0
        %v2004 = vrot.slane %v2003, 4
        %v2005 = vadd.f32 %v2003, %v2004
        %v2006 = vrot.slane %v2005, 2
        %v2007 = vadd.f32 %v2005, %v2006
        %v2008 = vrot.slane %v2007, 1
        %v2009 = vadd.f32 %v2007, %v2008
        %v2010 = vsel %vm1961, %v2002, 0.0
        %v2011 = vrot.slane %v2010, 4
        %v2012 = vadd.f32 %v2010, %v2011
        %v2013 = vrot.slane %v2012, 2
        %v2014 = vadd.f32 %v2012, %v2013
        %v2015 = vrot.slane %v2014, 1
        %v2016 = vadd.f32 %v2014, %v2015
        %2018 = vset.pattern.permute.xlu0 0
        %2019 = vperm.xlu0 %2018, %v1933
        %v2020 = vpop.permute.xlu0 %2019
        %v2022 = vsel %vm1993, %v2020, 0.0
        %v2023 = vsel %vm1994, %v2020, 0.0
        %v2024 = vsel %vm1961, %v2022, 0.0
        %v2025 = vrot.slane %v2024, 4
        %v2026 = vadd.f32 %v2024, %v2025
        %v2027 = vrot.slane %v2026, 2
        %v2028 = vadd.f32 %v2026, %v2027
        %v2029 = vrot.slane %v2028, 1
        %v2030 = vadd.f32 %v2028, %v2029
        %v2031 = vsel %vm1961, %v2023, 0.0
        %v2032 = vrot.slane %v2031, 4
        %v2033 = vadd.f32 %v2031, %v2032
        %v2034 = vrot.slane %v2033, 2
        %v2035 = vadd.f32 %v2033, %v2034
        %v2036 = vrot.slane %v2035, 1
        %v2037 = vadd.f32 %v2035, %v2036
        %v2038 = vmul.f32 %v2009, 1.442695
        %v2039 = vpow.pop %v2038
        %v2040 = vmul.f32 %v2016, 1.442695
        %v2041 = vpow.pop %v2040
        %v2042 = vsub.f32 1.0, %v2039
        %v2043 = vsub.f32 1.0, %v2041
        %v2044 = vmax.f32 %v2042, 1e-30
        %v2045 = vmax.f32 %v2043, 1e-30
        %v2046 = vlog2.pop %v2044
        %v2047 = vmul.f32 %v2046, 0.6931472
        %v2048 = vlog2.pop %v2045
        %v2049 = vmul.f32 %v2048, 0.6931472
        %v2050 = vmul.f32 %v2047, 0.25
        %v2051 = vmul.f32 %v2049, 0.25
        %v2052 = vmul.f32 %v2050, 1.442695
        %v2053 = vpow.pop %v2052
        %v2054 = vmul.f32 %v2051, 1.442695
        %v2055 = vpow.pop %v2054
        %v2056 = vmul.f32 %v2053, %v2030
        %v2057 = vmul.f32 %v2055, %v2037
        %v2058 = vmul.f32 %v2056, %v2009
        %v2059 = vmul.f32 %v2057, %v2016
        %v2060 = vsub.f32 0.0, %v2058
        %v2061 = vsub.f32 0.0, %v2059
        %v2062 = vsel %vm1912, %v2060, 0.0
        %v2063 = vsel %vm1912, %v2061, 0.0
        %v2064 = vadd.f32 %v2062, %v2063
        %2065 = vadd.xlane.f32.xlu0 %v2064
        %v2066 = vpop.xlane.xlu0 %2065
        %v2067 = vrot.slane %v2066, 4
        %v2068 = vadd.f32 %v2066, %v2067
        %v2069 = vrot.slane %v2068, 2
        %v2070 = vadd.f32 %v2068, %v2069
        %v2071 = vrot.slane %v2070, 1
        %v2072 = vadd.f32 %v2070, %v2071
        %s2073 = vtos %v2072
        %v2074 = vstv %s2073
        %2075 = vst.msk [vmem:[%s381] sm:$0x1] %vm1887, %v2074
      $region44: #{loss_forward.5} parent=35 // pred_fallthru
        _
      %p2076 = scmp.lt.s32.totalorder %s23, 1
      %s2077 = scalar_select %p2076, %s23, 1
      %s2078 = scalar_lea.vmem %s4, %s2077
      %p2079 = scmp.lt.s32.totalorder %s23, 1
      %s2080 = scalar_select %p2079, %s23, 1
      %s2081 = scalar_lea.vmem %s5, %s2080
      %p2082 = scmp.lt.s32.totalorder %s23, 1
      %s2083 = scalar_select %p2082, %s23, 1
      %s2084 = scalar_lea.vmem %s6, %s2083
      %p2085 = scmp.lt.s32.totalorder %s23, 1
      %s2086 = scalar_select %p2085, %s23, 1
      %s2087 = smul.addr %s2086, 2
      %s2088 = scalar_lea.vmem %s7, %s2087
      // Predicated region
      $region45: #{loss_forward.5} parent=35 // pred_check
        %p2089 = pneg %p152
      $region46: #{loss_forward.5} parent=35 // pred_check_branch
        %2091 = sbr.rel (%p2089) target = $region48
      $region47: #{loss_forward.5} parent=35 // pred_region
        _
      $region48: #{loss_forward.5} parent=35 // pred_fallthru
        _
      // Predicated region
      $region49: #{loss_forward.5} parent=35 // pred_check
        %p2092 = pneg %p178
      $region50: #{loss_forward.5} parent=35 // pred_check_branch
        %2094 = sbr.rel (%p2092) target = $region52
      $region51: #{loss_forward.5} parent=35 // pred_region
        _
      $region52: #{loss_forward.5} parent=35 // pred_fallthru
        _
      // Predicated region
      $region53: #{loss_forward.5} parent=35 // pred_check
        %p2095 = pneg %p204
      $region54: #{loss_forward.5} parent=35 // pred_check_branch
        %2097 = sbr.rel (%p2095) target = $region56
      $region55: #{loss_forward.5} parent=35 // pred_region
        _
      $region56: #{loss_forward.5} parent=35 // pred_fallthru
        _
      // Predicated region
      $region57: #{loss_forward.5} parent=35 // pred_check
        %p2098 = pneg %p230
      $region58: #{loss_forward.5} parent=35 // pred_check_branch
        %2100 = sbr.rel (%p2098) target = $region60
      $region59: #{loss_forward.5} parent=35 // pred_region
        _
      $region60: #{loss_forward.5} parent=35 // pred_fallthru
        _
    $region36: #{loss_forward.5} parent=5 // pred_fallthru
      _
    %p2101 = scmp.le.s32.totalorder 2, %s14
    // Predicated region
    $region61: #{loss_forward.5} parent=5 // pred_check
      %p2102 = pneg %p2101
    $region62: #{loss_forward.5} parent=5 // pred_check_branch
      %2104 = sbr.rel (%p2102) target = $region64
    $region63: #{loss_forward.5} parent=5 // pred_region
      %s2105 = ssub.s32 %s14, 2
      // Predicated region
      $region65: #{loss_forward.5} parent=63 // pred_check
        %p2106 = pneg %p158
      $region66: #{loss_forward.5} parent=63 // pred_check_branch
        %2108 = sbr.rel (%p2106) target = $region68
      $region67: #{loss_forward.5} parent=63 // pred_region
        %p2109 = scmp.lt.s32.totalorder %s25, 1
        %s2110 = scalar_select %p2109, %s25, 1
        %s2111 = scalar_lea.vmem %s4, %s2110
      $region68: #{loss_forward.5} parent=63 // pred_fallthru
        _
      // Predicated region
      $region69: #{loss_forward.5} parent=63 // pred_check
        %p2112 = pneg %p184
      $region70: #{loss_forward.5} parent=63 // pred_check_branch
        %2114 = sbr.rel (%p2112) target = $region72
      $region71: #{loss_forward.5} parent=63 // pred_region
        %p2115 = scmp.lt.s32.totalorder %s25, 1
        %s2116 = scalar_select %p2115, %s25, 1
        %s2117 = scalar_lea.vmem %s5, %s2116
      $region72: #{loss_forward.5} parent=63 // pred_fallthru
        _
      // Predicated region
      $region73: #{loss_forward.5} parent=63 // pred_check
        %p2118 = pneg %p210
      $region74: #{loss_forward.5} parent=63 // pred_check_branch
        %2120 = sbr.rel (%p2118) target = $region76
      $region75: #{loss_forward.5} parent=63 // pred_region
        %p2121 = scmp.lt.s32.totalorder %s25, 1
        %s2122 = scalar_select %p2121, %s25, 1
        %s2123 = scalar_lea.vmem %s6, %s2122
      $region76: #{loss_forward.5} parent=63 // pred_fallthru
        _
      // Predicated region
      $region77: #{loss_forward.5} parent=63 // pred_check
        %p2124 = pneg %p236
      $region78: #{loss_forward.5} parent=63 // pred_check_branch
        %2126 = sbr.rel (%p2124) target = $region80
      $region79: #{loss_forward.5} parent=63 // pred_region
        %p2127 = scmp.lt.s32.totalorder %s25, 1
        %s2128 = scalar_select %p2127, %s25, 1
        %s2129 = smul.addr %s2128, 2
        %s2130 = scalar_lea.vmem %s7, %s2129
      $region80: #{loss_forward.5} parent=63 // pred_fallthru
        _
    $region64: #{loss_forward.5} parent=5 // pred_fallthru
      _
  $region6: #{loss_forward.5} parent=0 // loop_footer
    %s18 = sadd.s32 1, %s14
  $region7: #{loss_forward.5} parent=0 // loop_footer_branch
    %13 = sbr.rel target = $region3
  $region8: #{loss_forward.5} parent=0 // loop_exit
    _

</llo_original>
